<compile_context>
chip_gen: v7x
topology: tpu7x:2x2x1
jax: 0.10.0
libtpu: 0.0.40
codegen_flags: <defaults>
</compile_context>

<pallas_src>
import functools

import jax
import jax.numpy as jnp
from jax.experimental import pallas as pl
from jax.experimental.pallas import tpu as pltpu

# Model dimensions (from the PyTorch spec / synthetic subnet).
SUB_OUT = 512      # per-subnet output features
FC1_OUT = 1024
FC2_IN = 1027
FC2_OUT = 2
OUT_PAD = 128      # lane-dense padded head output width
CONV_CH = 8        # synthetic subnet conv output channels
K_CHUNKS = 2       # lin_w channel chunks per subnet (grid axis 1)


# ---------------------------------------------------------------------------
# Fused Pallas kernel: both subnets + fc1 + fc2 across a pipelined (n_sub, K) grid.
# ---------------------------------------------------------------------------
def _neta4_kernel(patchesT_ref, conv_w_ref, conv_b_ref,
                  lin_w_ref, lin_b_ref,
                  fc1_wT_ref, fc1_b_ref,
                  fc2_wa_ref, fc2_wb_ref, fc2_b_ref,
                  angle_ref, out_ref,
                  conv_sc, res_sc, h_sc,
                  *, batch, hw, conv_ch, ch_per):
    s = pl.program_id(0)          # subnet index
    k = pl.program_id(1)          # lin_w channel-chunk index
    ns = pl.num_programs(0)
    nk = pl.num_programs(1)

    # ---- init the fc1 accumulator once -------------------------------------
    @pl.when((s == 0) & (k == 0))
    def _():
        h_sc[...] = jnp.zeros_like(h_sc)

    # ---- once per subnet: conv + bias + ReLU, stashed channel-major --------
    @pl.when(k == 0)
    def _():
        res_sc[...] = jnp.zeros_like(res_sc)
        convT = jnp.dot(conv_w_ref[0], patchesT_ref[0],
                        preferred_element_type=jnp.float32)          # (Cout, B*HW)
        convT = jnp.maximum(convT + conv_b_ref[0], 0.0)
        conv_sc[...] = convT.reshape(conv_ch, batch, hw).astype(conv_sc.dtype)

    # ---- this chunk's channels: per-channel MXU dots, no flatten -----------
    base = pl.multiple_of(k * ch_per, ch_per)
    acc = res_sc[...]
    for c in range(ch_per):                                          # static unroll
        acc = acc + jnp.dot(conv_sc[base + c], lin_w_ref[0, c],
                            preferred_element_type=jnp.float32)      # (B, 512)
    res_sc[...] = acc

    # ---- subnet finished: ReLU, add this subnet's fc1 contribution ---------
    @pl.when(k == nk - 1)
    def _():
        res = jnp.maximum(res_sc[...] + lin_b_ref[0], 0.0)           # (B, 512)
        h_sc[...] = h_sc[...] + jnp.dot(res.astype(jnp.bfloat16), fc1_wT_ref[...],
                                        preferred_element_type=jnp.float32)

    # ---- final step: fc1 bias + fc2 head, lane-dense (B, OUT_PAD) output ---
    @pl.when((s == ns - 1) & (k == nk - 1))
    def _():
        h = h_sc[...] + fc1_b_ref[...]                               # fc1: no activation
        out = jnp.dot(h.astype(jnp.bfloat16), fc2_wa_ref[...],
                      preferred_element_type=jnp.float32) + fc2_b_ref[...]
        ang = angle_ref[...]                                         # (B, A)
        w2b = fc2_wb_ref[...]                                        # (A, OUT_PAD)
        for a in range(ang.shape[1]):                                # K=3 on the VPU
            out = out + ang[:, a:a + 1] * w2b[a:a + 1, :]
        out_ref[...] = out


def neta4_pallas(params, patchesT, angle2d):
    B = angle2d.shape[0]
    n_ang = angle2d.shape[1]
    n_sub, conv_ch, k9 = params["conv_w"].shape
    bhw = patchesT.shape[2]
    hw = bhw // B
    assert conv_ch % K_CHUNKS == 0
    ch_per = conv_ch // K_CHUNKS

    kernel = functools.partial(_neta4_kernel, batch=B, hw=hw,
                               conv_ch=conv_ch, ch_per=ch_per)

    args = (patchesT, params["conv_w"], params["conv_b"],
            params["lin_w"], params["lin_b"],
            params["fc1_wT"], params["fc1_b"],
            params["fc2_wa"], params["fc2_wb"], params["fc2_b"],
            angle2d)

    sub3 = lambda s, k: (s, 0, 0)     # per-subnet 3-D block, re-DMA'd when s changes
    const2 = lambda s, k: (0, 0)      # loaded once, resident for the whole grid

    in_specs = [
        pl.BlockSpec((1, k9, bhw), sub3),                                  # patchesT
        pl.BlockSpec((1, conv_ch, k9), sub3),                              # conv_w
        pl.BlockSpec((1, conv_ch, 1), sub3),                               # conv_b
        pl.BlockSpec((1, ch_per, hw, SUB_OUT), lambda s, k: (s, k, 0, 0)),  # lin_w (pipelined)
        pl.BlockSpec((1, 1, SUB_OUT), sub3),                               # lin_b
        pl.BlockSpec((SUB_OUT, FC1_OUT), lambda s, k: (s, 0)),             # fc1_wT rows for subnet s
        pl.BlockSpec((1, FC1_OUT), const2),                                # fc1_b
        pl.BlockSpec((FC1_OUT, OUT_PAD), const2),                          # fc2_wa
        pl.BlockSpec((n_ang, OUT_PAD), const2),                            # fc2_wb
        pl.BlockSpec((1, OUT_PAD), const2),                                # fc2_b
        pl.BlockSpec((B, n_ang), const2),                                  # angle
    ]

    out_pad = pl.pallas_call(
        kernel,
        out_shape=jax.ShapeDtypeStruct((B, OUT_PAD), jnp.float32),
        grid_spec=pltpu.PrefetchScalarGridSpec(
            num_scalar_prefetch=0,
            grid=(n_sub, K_CHUNKS),
            in_specs=in_specs,
            out_specs=pl.BlockSpec((B, OUT_PAD), const2),
            scratch_shapes=[
                pltpu.VMEM((conv_ch, B, hw), jnp.bfloat16),   # conv, (c, b, hw)-major
                pltpu.VMEM((B, SUB_OUT), jnp.float32),        # per-subnet res accumulator
                pltpu.VMEM((B, FC1_OUT), jnp.float32),        # fc1 accumulator across subnets
            ]),
        compiler_params=pltpu.CompilerParams(
            # Both axes carry accumulator dependencies (res over k, fc1 over s), so both
            # are "arbitrary".  TODO(synk): on v7x the subnet axis could be core-sharded
            # with an explicit cross-core fc1 reduction.
            dimension_semantics=("arbitrary", "arbitrary"),
            vmem_limit_bytes=32 * 1024 * 1024),
    )(*args)
    return out_pad[:, :FC2_OUT]


# ---------------------------------------------------------------------------
# im2col (transposed) — tiny XLA preamble.
# ---------------------------------------------------------------------------
def _im2col_T(x):
    """x: (B, C, H, W) NCHW -> (C*9, B*H*W) patches, (batch, spatial) lane-dense.
    Row index k = c*9 + di*3 + dj (matches conv weight reshaped to (Cout, Cin*3*3))."""
    B, C, H, W = x.shape
    xp = jnp.pad(x, ((0, 0), (0, 0), (1, 1), (1, 1)))
    cols = [xp[:, :, di:di + H, dj:dj + W] for di in range(3) for dj in range(3)]
    p = jnp.stack(cols, axis=2)              # (B, C, 9, H, W)
    p = p.transpose(1, 2, 0, 3, 4)           # (C, 9, B, H, W)
    return p.reshape(C * 9, B * H * W)


# ---------------------------------------------------------------------------
# NetA4 forward
# ---------------------------------------------------------------------------
def net_a4_forward(params, ts1, ts2, angle):
    B = ts1.shape[0]
    angle2d = angle.reshape(B, -1).astype(jnp.float32)     # angle.view(B, -1)
    # fc2 expects exactly FC2_IN - FC1_OUT (= 3) angle features.
    assert angle2d.shape[1] == params["fc2_wb"].shape[0], (
        "angle.view(B,-1) width must equal fc2 in_features - fc1 out_features")
    patchesT = jnp.stack([_im2col_T(ts1), _im2col_T(ts2)], axis=0).astype(jnp.bfloat16)
    return neta4_pallas(params, patchesT, angle2d)


# ---------------------------------------------------------------------------
# Parameters: PyTorch-convention init, then a ONE-TIME repack into kernel layout.
# ---------------------------------------------------------------------------
def _w(k, shape, fan_in):
    return (jax.random.normal(k, shape, dtype=jnp.float32)
            / jnp.sqrt(jnp.float32(fan_in)))


def init_torch_params(key, cin=4, hw_side=16, conv_ch=CONV_CH):
    """Weights in PyTorch (out, in) convention for the synthetic subnets + head."""
    ks = jax.random.split(key, 12)
    flat = conv_ch * hw_side * hw_side                      # 2048

    def sub(k0, k1, k2, k3):
        return {
            "conv_w": _w(k0, (conv_ch, cin * 9), cin * 9),  # (Cout, Cin*3*3)
            "conv_b": _w(k1, (conv_ch,), cin * 9),
            "lin_w": _w(k2, (SUB_OUT, flat), flat),         # (512, 2048), NCHW flatten
            "lin_b": _w(k3, (SUB_OUT,), flat),
        }

    return {
        "sub1": sub(*ks[0:4]),
        "sub2": sub(*ks[4:8]),
        "fc1_w": _w(ks[8], (FC1_OUT, FC1_OUT), FC1_OUT),    # (1024, 1024)
        "fc1_b": _w(ks[9], (FC1_OUT,), FC1_OUT),
        "fc2_w": _w(ks[10], (FC2_OUT, FC2_IN), FC2_IN),     # (2, 1027)
        "fc2_b": _w(ks[11], (FC2_OUT,), FC2_IN),
    }


def pack_params(p):
    """One-time repack: subnets stacked, weights (in,out)-oriented, big weights bf16,
    lin_w split per conv channel as (n_sub, conv_ch, HW, 512), fc2 pre-split (hidden vs
    angle) and lane-padded to OUT_PAD."""
    conv_w = jnp.stack([p["sub1"]["conv_w"], p["sub2"]["conv_w"]], 0)              # (2,8,36)
    conv_b = jnp.stack([p["sub1"]["conv_b"], p["sub2"]["conv_b"]], 0)[:, :, None]  # (2,8,1)
    # lin_w rows are the NCHW flatten (c*HW + sp) -> (conv_ch, HW, 512) per subnet.
    lin_w = jnp.stack([p["sub1"]["lin_w"].T.reshape(CONV_CH, -1, SUB_OUT),
                       p["sub2"]["lin_w"].T.reshape(CONV_CH, -1, SUB_OUT)], 0)     # (2,8,256,512)
    lin_b = jnp.stack([p["sub1"]["lin_b"], p["sub2"]["lin_b"]], 0)[:, None, :]     # (2,1,512)
    w2T = p["fc2_w"].T                                                             # (1027, 2)
    pad = ((0, 0), (0, OUT_PAD - FC2_OUT))
    return {
        "conv_w": conv_w.astype(jnp.bfloat16),
        "conv_b": conv_b.astype(jnp.float32),
        "lin_w": lin_w.astype(jnp.bfloat16),
        "lin_b": lin_b.astype(jnp.float32),
        "fc1_wT": p["fc1_w"].T.astype(jnp.bfloat16),                               # (1024,1024)
        "fc1_b": p["fc1_b"][None, :].astype(jnp.float32),                          # (1,1024)
        "fc2_wa": jnp.pad(w2T[:FC1_OUT], pad).astype(jnp.bfloat16),                # (1024,128)
        "fc2_wb": jnp.pad(w2T[FC1_OUT:], pad).astype(jnp.float32),                 # (3,128)
        "fc2_b": jnp.pad(p["fc2_b"][None, :], pad).astype(jnp.float32),            # (1,128)
    }


# ---------------------------------------------------------------------------
# Pure-JAX f32 reference (same synthetic subnet) for tolerance validation.
# ---------------------------------------------------------------------------
def net_a4_reference(raw, ts1, ts2, angle):
    def subnet(x, sp):
        B, C, H, W = x.shape
        pat = _im2col_T(x)                                                   # (C*9, B*H*W)
        conv = jnp.maximum(sp["conv_w"] @ pat + sp["conv_b"][:, None], 0.0)  # (Cout, B*HW)
        feat = conv.reshape(-1, B, H * W).transpose(1, 0, 2).reshape(B, -1)  # NCHW flatten
        return jnp.maximum(feat @ sp["lin_w"].T + sp["lin_b"], 0.0)
    res1 = subnet(ts1, raw["sub1"])
    res2 = subnet(ts2, raw["sub2"])
    x = jnp.concatenate([res1, res2], axis=1) @ raw["fc1_w"].T + raw["fc1_b"]
    cat2 = jnp.concatenate([x, angle.reshape(angle.shape[0], -1)], axis=1)
    return cat2 @ raw["fc2_w"].T + raw["fc2_b"]


# ---------------------------------------------------------------------------
if __name__ == "__main__":
    key = jax.random.PRNGKey(0)
    kp, k1, k2, k3 = jax.random.split(key, 4)

    B, C, H, W = 2, 4, 16, 16
    raw = init_torch_params(kp, cin=C, hw_side=H)
    params = pack_params(raw)

    ts1 = jax.random.normal(k1, (B, C, H, W), dtype=jnp.float32)
    ts2 = jax.random.normal(k2, (B, C, H, W), dtype=jnp.float32)
    angle = jax.random.normal(k3, (B, 3), dtype=jnp.float32)

    fwd = jax.jit(net_a4_forward)
    out = jax.block_until_ready(fwd(params, ts1, ts2, angle))
    assert out.shape == (B, FC2_OUT), out.shape

    # bf16 weights / f32 accumulation vs. f32 reference -> loose tolerance.
    ref = net_a4_reference(raw, ts1, ts2, angle)
    err = float(jnp.max(jnp.abs(out - ref)))
    assert err < 5e-2, f"max |kernel - reference| = {err}"
    print("KERNEL_OK")
</pallas_src>

<mosaic_0001>
module attributes {stable_mosaic.version = 11 : i64} {
  func.func @_neta4_kernel(%arg0: i32, %arg1: i32, %arg2: memref<1x36x512xbf16, #tpu.memory_space<vmem>>, %arg3: memref<1x8x36xbf16, #tpu.memory_space<vmem>>, %arg4: memref<1x8x1xf32, #tpu.memory_space<vmem>>, %arg5: memref<1x4x256x512xbf16, #tpu.memory_space<vmem>>, %arg6: memref<1x1x512xf32, #tpu.memory_space<vmem>>, %arg7: memref<512x1024xbf16, #tpu.memory_space<vmem>>, %arg8: memref<1x1024xf32, #tpu.memory_space<vmem>>, %arg9: memref<1024x128xbf16, #tpu.memory_space<vmem>>, %arg10: memref<3x128xf32, #tpu.memory_space<vmem>>, %arg11: memref<1x128xf32, #tpu.memory_space<vmem>>, %arg12: memref<2x3xf32, #tpu.memory_space<vmem>>, %arg13: memref<2x128xf32, #tpu.memory_space<vmem>>, %arg14: memref<8x2x256xbf16, #tpu.memory_space<vmem>>, %arg15: memref<2x512xf32, #tpu.memory_space<vmem>>, %arg16: memref<2x1024xf32, #tpu.memory_space<vmem>>) attributes {dimension_semantics = [#tpu.dimension_semantics<arbitrary>, #tpu.dimension_semantics<arbitrary>], iteration_bounds = array<i64: 2, 2>, scalar_prefetch = 0 : i64, scratch_operands = 3 : i64, tpu.core_type = #tpu.core_type<tc>, window_params = [{transform_indices = @transform_0, window_bounds = array<i64: 1, 36, 512>}, {transform_indices = @transform_1, window_bounds = array<i64: 1, 8, 36>}, {transform_indices = @transform_2, window_bounds = array<i64: 1, 8, 1>}, {transform_indices = @transform_3, window_bounds = array<i64: 1, 4, 256, 512>}, {transform_indices = @transform_4, window_bounds = array<i64: 1, 1, 512>}, {transform_indices = @transform_5, window_bounds = array<i64: 512, 1024>}, {pipeline_mode = #tpu.pipeline_mode<synchronous>, transform_indices = @transform_6, window_bounds = array<i64: 1, 1024>}, {pipeline_mode = #tpu.pipeline_mode<synchronous>, transform_indices = @transform_7, window_bounds = array<i64: 1024, 128>}, {pipeline_mode = #tpu.pipeline_mode<synchronous>, transform_indices = @transform_8, window_bounds = array<i64: 3, 128>}, {pipeline_mode = #tpu.pipeline_mode<synchronous>, transform_indices = @transform_9, window_bounds = array<i64: 1, 128>}, {pipeline_mode = #tpu.pipeline_mode<synchronous>, transform_indices = @transform_10, window_bounds = array<i64: 2, 3>}, {pipeline_mode = #tpu.pipeline_mode<synchronous>, transform_indices = @transform_11, window_bounds = array<i64: 2, 128>}]} {
    %c0_i32 = arith.constant 0 : i32
    %0 = arith.cmpi eq, %arg0, %c0_i32 : i32
    %c0_i32_0 = arith.constant 0 : i32
    %1 = arith.cmpi eq, %arg1, %c0_i32_0 : i32
    %2 = arith.andi %0, %1 : i1
    %3 = arith.extui %2 : i1 to i32
    %c0_i32_1 = arith.constant 0 : i32
    %4 = arith.cmpi ne, %3, %c0_i32_1 : i32
    scf.if %4 {
      %cst_37 = arith.constant 0.000000e+00 : f32
      %52 = vector.broadcast %cst_37 : f32 to vector<2x1024xf32>
      %c0_38 = arith.constant 0 : index
      %c0_39 = arith.constant 0 : index
      %53 = vector.load %arg16[%c0_38, %c0_39] : memref<2x1024xf32, #tpu.memory_space<vmem>>, vector<2x1024xf32>
      tpu.vector_store %arg16[%c0_38, %c0_39], %52 {strides = array<i32>} : memref<2x1024xf32, #tpu.memory_space<vmem>>, vector<2x1024xf32>,
    } else {
    }
    %c0_i32_2 = arith.constant 0 : i32
    %5 = arith.cmpi eq, %arg1, %c0_i32_2 : i32
    %6 = arith.extui %5 : i1 to i32
    %c0_i32_3 = arith.constant 0 : i32
    %7 = arith.cmpi ne, %6, %c0_i32_3 : i32
    scf.if %7 {
      %cst_37 = arith.constant 0.000000e+00 : f32
      %52 = vector.broadcast %cst_37 : f32 to vector<2x512xf32>
      %c0_38 = arith.constant 0 : index
      %c0_39 = arith.constant 0 : index
      %53 = vector.load %arg15[%c0_38, %c0_39] : memref<2x512xf32, #tpu.memory_space<vmem>>, vector<2x512xf32>
      tpu.vector_store %arg15[%c0_38, %c0_39], %52 {strides = array<i32>} : memref<2x512xf32, #tpu.memory_space<vmem>>, vector<2x512xf32>,
      %c0_40 = arith.constant 0 : index
      %c0_41 = arith.constant 0 : index
      %c0_42 = arith.constant 0 : index
      %54 = vector.load %arg3[%c0_40, %c0_41, %c0_42] : memref<1x8x36xbf16, #tpu.memory_space<vmem>>, vector<1x8x36xbf16>
      %55 = vector.shape_cast %54 : vector<1x8x36xbf16> to vector<8x36xbf16>
      %c0_43 = arith.constant 0 : index
      %c0_44 = arith.constant 0 : index
      %c0_45 = arith.constant 0 : index
      %56 = vector.load %arg2[%c0_43, %c0_44, %c0_45] : memref<1x36x512xbf16, #tpu.memory_space<vmem>>, vector<1x36x512xbf16>
      %57 = vector.shape_cast %56 : vector<1x36x512xbf16> to vector<36x512xbf16>
      %cst_46 = arith.constant dense<0.000000e+00> : vector<8x512xf32>
      %58 = tpu.matmul %55, %57, %cst_46 {dimension_numbers = #tpu.dot_dimension_numbers<[1], [0], [0], [1], [0, 0, 1, 1], [], []>} : vector<8x36xbf16>, vector<36x512xbf16>, vector<8x512xf32> -> vector<8x512xf32>
      %c0_47 = arith.constant 0 : index
      %c0_48 = arith.constant 0 : index
      %c0_49 = arith.constant 0 : index
      %59 = vector.load %arg4[%c0_47, %c0_48, %c0_49] : memref<1x8x1xf32, #tpu.memory_space<vmem>>, vector<1x8x1xf32>
      %60 = vector.shape_cast %59 : vector<1x8x1xf32> to vector<8x1xf32>
      %61 = vector.broadcast %60 : vector<8x1xf32> to vector<8x512xf32>
      %62 = arith.addf %58, %61 : vector<8x512xf32>
      %cst_50 = arith.constant 0.000000e+00 : f32
      %63 = vector.broadcast %cst_50 : f32 to vector<8x512xf32>
      %64 = arith.maximumf %62, %63 : vector<8x512xf32>
      %65 = vector.shape_cast %64 : vector<8x512xf32> to vector<8x2x256xf32>
      %66 = arith.truncf %65 : vector<8x2x256xf32> to vector<8x2x256xbf16>
      %c0_51 = arith.constant 0 : index
      %c0_52 = arith.constant 0 : index
      %c0_53 = arith.constant 0 : index
      %67 = vector.load %arg14[%c0_51, %c0_52, %c0_53] : memref<8x2x256xbf16, #tpu.memory_space<vmem>>, vector<8x2x256xbf16>
      tpu.vector_store %arg14[%c0_51, %c0_52, %c0_53], %66 {strides = array<i32>} : memref<8x2x256xbf16, #tpu.memory_space<vmem>>, vector<8x2x256xbf16>,
    } else {
    }
    %c4_i32 = arith.constant 4 : i32
    %8 = arith.muli %arg1, %c4_i32 : i32
    %9 = tpu.assume_multiple %8, 4 : i32
    %c0 = arith.constant 0 : index
    %c0_4 = arith.constant 0 : index
    %10 = vector.load %arg15[%c0, %c0_4] : memref<2x512xf32, #tpu.memory_space<vmem>>, vector<2x512xf32>
    %c0_i32_5 = arith.constant 0 : i32
    %11 = arith.addi %9, %c0_i32_5 : i32
    %12 = arith.index_cast %11 : i32 to index
    %c0_6 = arith.constant 0 : index
    %c0_7 = arith.constant 0 : index
    %13 = vector.load %arg14[%12, %c0_6, %c0_7] : memref<8x2x256xbf16, #tpu.memory_space<vmem>>, vector<1x2x256xbf16>
    %14 = vector.shape_cast %13 : vector<1x2x256xbf16> to vector<2x256xbf16>
    %c0_8 = arith.constant 0 : index
    %c0_9 = arith.constant 0 : index
    %c0_10 = arith.constant 0 : index
    %c0_11 = arith.constant 0 : index
    %15 = vector.load %arg5[%c0_8, %c0_9, %c0_10, %c0_11] : memref<1x4x256x512xbf16, #tpu.memory_space<vmem>>, vector<1x1x256x512xbf16>
    %16 = vector.shape_cast %15 : vector<1x1x256x512xbf16> to vector<256x512xbf16>
    %cst = arith.constant dense<0.000000e+00> : vector<2x512xf32>
    %17 = tpu.matmul %14, %16, %cst {dimension_numbers = #tpu.dot_dimension_numbers<[1], [0], [0], [1], [0, 0, 1, 1], [], []>} : vector<2x256xbf16>, vector<256x512xbf16>, vector<2x512xf32> -> vector<2x512xf32>
    %18 = arith.addf %10, %17 : vector<2x512xf32>
    %c1_i32 = arith.constant 1 : i32
    %19 = arith.addi %9, %c1_i32 : i32
    %20 = arith.index_cast %19 : i32 to index
    %c0_12 = arith.constant 0 : index
    %c0_13 = arith.constant 0 : index
    %21 = vector.load %arg14[%20, %c0_12, %c0_13] : memref<8x2x256xbf16, #tpu.memory_space<vmem>>, vector<1x2x256xbf16>
    %22 = vector.shape_cast %21 : vector<1x2x256xbf16> to vector<2x256xbf16>
    %c0_14 = arith.constant 0 : index
    %c1 = arith.constant 1 : index
    %c0_15 = arith.constant 0 : index
    %c0_16 = arith.constant 0 : index
    %23 = vector.load %arg5[%c0_14, %c1, %c0_15, %c0_16] : memref<1x4x256x512xbf16, #tpu.memory_space<vmem>>, vector<1x1x256x512xbf16>
    %24 = vector.shape_cast %23 : vector<1x1x256x512xbf16> to vector<256x512xbf16>
    %cst_17 = arith.constant dense<0.000000e+00> : vector<2x512xf32>
    %25 = tpu.matmul %22, %24, %cst_17 {dimension_numbers = #tpu.dot_dimension_numbers<[1], [0], [0], [1], [0, 0, 1, 1], [], []>} : vector<2x256xbf16>, vector<256x512xbf16>, vector<2x512xf32> -> vector<2x512xf32>
    %26 = arith.addf %18, %25 : vector<2x512xf32>
    %c2_i32 = arith.constant 2 : i32
    %27 = arith.addi %9, %c2_i32 : i32
    %28 = arith.index_cast %27 : i32 to index
    %c0_18 = arith.constant 0 : index
    %c0_19 = arith.constant 0 : index
    %29 = vector.load %arg14[%28, %c0_18, %c0_19] : memref<8x2x256xbf16, #tpu.memory_space<vmem>>, vector<1x2x256xbf16>
    %30 = vector.shape_cast %29 : vector<1x2x256xbf16> to vector<2x256xbf16>
    %c0_20 = arith.constant 0 : index
    %c2 = arith.constant 2 : index
    %c0_21 = arith.constant 0 : index
    %c0_22 = arith.constant 0 : index
    %31 = vector.load %arg5[%c0_20, %c2, %c0_21, %c0_22] : memref<1x4x256x512xbf16, #tpu.memory_space<vmem>>, vector<1x1x256x512xbf16>
    %32 = vector.shape_cast %31 : vector<1x1x256x512xbf16> to vector<256x512xbf16>
    %cst_23 = arith.constant dense<0.000000e+00> : vector<2x512xf32>
    %33 = tpu.matmul %30, %32, %cst_23 {dimension_numbers = #tpu.dot_dimension_numbers<[1], [0], [0], [1], [0, 0, 1, 1], [], []>} : vector<2x256xbf16>, vector<256x512xbf16>, vector<2x512xf32> -> vector<2x512xf32>
    %34 = arith.addf %26, %33 : vector<2x512xf32>
    %c3_i32 = arith.constant 3 : i32
    %35 = arith.addi %9, %c3_i32 : i32
    %36 = arith.index_cast %35 : i32 to index
    %c0_24 = arith.constant 0 : index
    %c0_25 = arith.constant 0 : index
    %37 = vector.load %arg14[%36, %c0_24, %c0_25] : memref<8x2x256xbf16, #tpu.memory_space<vmem>>, vector<1x2x256xbf16>
    %38 = vector.shape_cast %37 : vector<1x2x256xbf16> to vector<2x256xbf16>
    %c0_26 = arith.constant 0 : index
    %c3 = arith.constant 3 : index
    %c0_27 = arith.constant 0 : index
    %c0_28 = arith.constant 0 : index
    %39 = vector.load %arg5[%c0_26, %c3, %c0_27, %c0_28] : memref<1x4x256x512xbf16, #tpu.memory_space<vmem>>, vector<1x1x256x512xbf16>
    %40 = vector.shape_cast %39 : vector<1x1x256x512xbf16> to vector<256x512xbf16>
    %cst_29 = arith.constant dense<0.000000e+00> : vector<2x512xf32>
    %41 = tpu.matmul %38, %40, %cst_29 {dimension_numbers = #tpu.dot_dimension_numbers<[1], [0], [0], [1], [0, 0, 1, 1], [], []>} : vector<2x256xbf16>, vector<256x512xbf16>, vector<2x512xf32> -> vector<2x512xf32>
    %42 = arith.addf %34, %41 : vector<2x512xf32>
    %c0_30 = arith.constant 0 : index
    %c0_31 = arith.constant 0 : index
    %43 = vector.load %arg15[%c0_30, %c0_31] : memref<2x512xf32, #tpu.memory_space<vmem>>, vector<2x512xf32>
    tpu.vector_store %arg15[%c0_30, %c0_31], %42 {strides = array<i32>} : memref<2x512xf32, #tpu.memory_space<vmem>>, vector<2x512xf32>,
    %c1_i32_32 = arith.constant 1 : i32
    %44 = arith.cmpi eq, %arg1, %c1_i32_32 : i32
    %45 = arith.extui %44 : i1 to i32
    %c0_i32_33 = arith.constant 0 : i32
    %46 = arith.cmpi ne, %45, %c0_i32_33 : i32
    scf.if %46 {
      %c0_37 = arith.constant 0 : index
      %c0_38 = arith.constant 0 : index
      %52 = vector.load %arg15[%c0_37, %c0_38] : memref<2x512xf32, #tpu.memory_space<vmem>>, vector<2x512xf32>
      %c0_39 = arith.constant 0 : index
      %c0_40 = arith.constant 0 : index
      %c0_41 = arith.constant 0 : index
      %53 = vector.load %arg6[%c0_39, %c0_40, %c0_41] : memref<1x1x512xf32, #tpu.memory_space<vmem>>, vector<1x1x512xf32>
      %54 = vector.shape_cast %53 : vector<1x1x512xf32> to vector<1x512xf32>
      %55 = vector.broadcast %54 : vector<1x512xf32> to vector<2x512xf32>
      %56 = arith.addf %52, %55 : vector<2x512xf32>
      %cst_42 = arith.constant 0.000000e+00 : f32
      %57 = vector.broadcast %cst_42 : f32 to vector<2x512xf32>
      %58 = arith.maximumf %56, %57 : vector<2x512xf32>
      %c0_43 = arith.constant 0 : index
      %c0_44 = arith.constant 0 : index
      %59 = vector.load %arg16[%c0_43, %c0_44] : memref<2x1024xf32, #tpu.memory_space<vmem>>, vector<2x1024xf32>
      %60 = arith.truncf %58 : vector<2x512xf32> to vector<2x512xbf16>
      %c0_45 = arith.constant 0 : index
      %c0_46 = arith.constant 0 : index
      %61 = vector.load %arg7[%c0_45, %c0_46] : memref<512x1024xbf16, #tpu.memory_space<vmem>>, vector<512x1024xbf16>
      %cst_47 = arith.constant dense<0.000000e+00> : vector<2x1024xf32>
      %62 = tpu.matmul %60, %61, %cst_47 {dimension_numbers = #tpu.dot_dimension_numbers<[1], [0], [0], [1], [0, 0, 1, 1], [], []>} : vector<2x512xbf16>, vector<512x1024xbf16>, vector<2x1024xf32> -> vector<2x1024xf32>
      %63 = arith.addf %59, %62 : vector<2x1024xf32>
      %c0_48 = arith.constant 0 : index
      %c0_49 = arith.constant 0 : index
      %64 = vector.load %arg16[%c0_48, %c0_49] : memref<2x1024xf32, #tpu.memory_space<vmem>>, vector<2x1024xf32>
      tpu.vector_store %arg16[%c0_48, %c0_49], %63 {strides = array<i32>} : memref<2x1024xf32, #tpu.memory_space<vmem>>, vector<2x1024xf32>,
    } else {
    }
    %c1_i32_34 = arith.constant 1 : i32
    %47 = arith.cmpi eq, %arg0, %c1_i32_34 : i32
    %c1_i32_35 = arith.constant 1 : i32
    %48 = arith.cmpi eq, %arg1, %c1_i32_35 : i32
    %49 = arith.andi %47, %48 : i1
    %50 = arith.extui %49 : i1 to i32
    %c0_i32_36 = arith.constant 0 : i32
    %51 = arith.cmpi ne, %50, %c0_i32_36 : i32
    scf.if %51 {
      %c0_37 = arith.constant 0 : index
      %c0_38 = arith.constant 0 : index
      %52 = vector.load %arg16[%c0_37, %c0_38] : memref<2x1024xf32, #tpu.memory_space<vmem>>, vector<2x1024xf32>
      %c0_39 = arith.constant 0 : index
      %c0_40 = arith.constant 0 : index
      %53 = vector.load %arg8[%c0_39, %c0_40] : memref<1x1024xf32, #tpu.memory_space<vmem>>, vector<1x1024xf32>
      %54 = vector.broadcast %53 : vector<1x1024xf32> to vector<2x1024xf32>
      %55 = arith.addf %52, %54 : vector<2x1024xf32>
      %56 = arith.truncf %55 : vector<2x1024xf32> to vector<2x1024xbf16>
      %c0_41 = arith.constant 0 : index
      %c0_42 = arith.constant 0 : index
      %57 = vector.load %arg9[%c0_41, %c0_42] : memref<1024x128xbf16, #tpu.memory_space<vmem>>, vector<1024x128xbf16>
      %cst_43 = arith.constant dense<0.000000e+00> : vector<2x128xf32>
      %58 = tpu.matmul %56, %57, %cst_43 {dimension_numbers = #tpu.dot_dimension_numbers<[1], [0], [0], [1], [0, 0, 1, 1], [], []>} : vector<2x1024xbf16>, vector<1024x128xbf16>, vector<2x128xf32> -> vector<2x128xf32>
      %c0_44 = arith.constant 0 : index
      %c0_45 = arith.constant 0 : index
      %59 = vector.load %arg11[%c0_44, %c0_45] : memref<1x128xf32, #tpu.memory_space<vmem>>, vector<1x128xf32>
      %60 = vector.broadcast %59 : vector<1x128xf32> to vector<2x128xf32>
      %61 = arith.addf %58, %60 : vector<2x128xf32>
      %c0_46 = arith.constant 0 : index
      %c0_47 = arith.constant 0 : index
      %62 = vector.load %arg12[%c0_46, %c0_47] : memref<2x3xf32, #tpu.memory_space<vmem>>, vector<2x3xf32>
      %c0_48 = arith.constant 0 : index
      %c0_49 = arith.constant 0 : index
      %63 = vector.load %arg10[%c0_48, %c0_49] : memref<3x128xf32, #tpu.memory_space<vmem>>, vector<3x128xf32>
      %64 = vector.extract_strided_slice %62 {offsets = [0, 0], sizes = [2, 1], strides = [1, 1]} : vector<2x3xf32> to vector<2x1xf32>
      %65 = vector.extract_strided_slice %63 {offsets = [0, 0], sizes = [1, 128], strides = [1, 1]} : vector<3x128xf32> to vector<1x128xf32>
      %66 = vector.broadcast %64 : vector<2x1xf32> to vector<2x128xf32>
      %67 = vector.broadcast %65 : vector<1x128xf32> to vector<2x128xf32>
      %68 = arith.mulf %66, %67 : vector<2x128xf32>
      %69 = arith.addf %61, %68 : vector<2x128xf32>
      %70 = vector.extract_strided_slice %62 {offsets = [0, 1], sizes = [2, 1], strides = [1, 1]} : vector<2x3xf32> to vector<2x1xf32>
      %71 = vector.extract_strided_slice %63 {offsets = [1, 0], sizes = [1, 128], strides = [1, 1]} : vector<3x128xf32> to vector<1x128xf32>
      %72 = vector.broadcast %70 : vector<2x1xf32> to vector<2x128xf32>
      %73 = vector.broadcast %71 : vector<1x128xf32> to vector<2x128xf32>
      %74 = arith.mulf %72, %73 : vector<2x128xf32>
      %75 = arith.addf %69, %74 : vector<2x128xf32>
      %76 = vector.extract_strided_slice %62 {offsets = [0, 2], sizes = [2, 1], strides = [1, 1]} : vector<2x3xf32> to vector<2x1xf32>
      %77 = vector.extract_strided_slice %63 {offsets = [2, 0], sizes = [1, 128], strides = [1, 1]} : vector<3x128xf32> to vector<1x128xf32>
      %78 = vector.broadcast %76 : vector<2x1xf32> to vector<2x128xf32>
      %79 = vector.broadcast %77 : vector<1x128xf32> to vector<2x128xf32>
      %80 = arith.mulf %78, %79 : vector<2x128xf32>
      %81 = arith.addf %75, %80 : vector<2x128xf32>
      %c0_50 = arith.constant 0 : index
      %c0_51 = arith.constant 0 : index
      %82 = vector.load %arg13[%c0_50, %c0_51] : memref<2x128xf32, #tpu.memory_space<vmem>>, vector<2x128xf32>
      tpu.vector_store %arg13[%c0_50, %c0_51], %81 {strides = array<i32>} : memref<2x128xf32, #tpu.memory_space<vmem>>, vector<2x128xf32>,
    } else {
    }
    return
  }
  func.func @transform_0(%arg0: i32, %arg1: i32) -> (i32, i32, i32) {
    %c0_i32 = arith.constant 0 : i32
    %c0_i32_0 = arith.constant 0 : i32
    %c0_i32_1 = arith.constant 0 : i32
    return %arg0, %c0_i32, %c0_i32_0 : i32, i32, i32
  }
  func.func @transform_1(%arg0: i32, %arg1: i32) -> (i32, i32, i32) {
    %c0_i32 = arith.constant 0 : i32
    %c0_i32_0 = arith.constant 0 : i32
    %c0_i32_1 = arith.constant 0 : i32
    return %arg0, %c0_i32, %c0_i32_0 : i32, i32, i32
  }
  func.func @transform_2(%arg0: i32, %arg1: i32) -> (i32, i32, i32) {
    %c0_i32 = arith.constant 0 : i32
    %c0_i32_0 = arith.constant 0 : i32
    %c0_i32_1 = arith.constant 0 : i32
    return %arg0, %c0_i32, %c0_i32_0 : i32, i32, i32
  }
  func.func @transform_3(%arg0: i32, %arg1: i32) -> (i32, i32, i32, i32) {
    %c0_i32 = arith.constant 0 : i32
    %c0_i32_0 = arith.constant 0 : i32
    %c0_i32_1 = arith.constant 0 : i32
    return %arg0, %arg1, %c0_i32, %c0_i32_0 : i32, i32, i32, i32
  }
  func.func @transform_4(%arg0: i32, %arg1: i32) -> (i32, i32, i32) {
    %c0_i32 = arith.constant 0 : i32
    %c0_i32_0 = arith.constant 0 : i32
    %c0_i32_1 = arith.constant 0 : i32
    return %arg0, %c0_i32, %c0_i32_0 : i32, i32, i32
  }
  func.func @transform_5(%arg0: i32, %arg1: i32) -> (i32, i32) {
    %c0_i32 = arith.constant 0 : i32
    %c0_i32_0 = arith.constant 0 : i32
    return %arg0, %c0_i32 : i32, i32
  }
  func.func @transform_6(%arg0: i32, %arg1: i32) -> (i32, i32) {
    %c0_i32 = arith.constant 0 : i32
    %c0_i32_0 = arith.constant 0 : i32
    %c0_i32_1 = arith.constant 0 : i32
    return %c0_i32, %c0_i32_0 : i32, i32
  }
  func.func @transform_7(%arg0: i32, %arg1: i32) -> (i32, i32) {
    %c0_i32 = arith.constant 0 : i32
    %c0_i32_0 = arith.constant 0 : i32
    %c0_i32_1 = arith.constant 0 : i32
    return %c0_i32, %c0_i32_0 : i32, i32
  }
  func.func @transform_8(%arg0: i32, %arg1: i32) -> (i32, i32) {
    %c0_i32 = arith.constant 0 : i32
    %c0_i32_0 = arith.constant 0 : i32
    %c0_i32_1 = arith.constant 0 : i32
    return %c0_i32, %c0_i32_0 : i32, i32
  }
  func.func @transform_9(%arg0: i32, %arg1: i32) -> (i32, i32) {
    %c0_i32 = arith.constant 0 : i32
    %c0_i32_0 = arith.constant 0 : i32
    %c0_i32_1 = arith.constant 0 : i32
    return %c0_i32, %c0_i32_0 : i32, i32
  }
  func.func @transform_10(%arg0: i32, %arg1: i32) -> (i32, i32) {
    %c0_i32 = arith.constant 0 : i32
    %c0_i32_0 = arith.constant 0 : i32
    %c0_i32_1 = arith.constant 0 : i32
    return %c0_i32, %c0_i32_0 : i32, i32
  }
  func.func @transform_11(%arg0: i32, %arg1: i32) -> (i32, i32) {
    %c0_i32 = arith.constant 0 : i32
    %c0_i32_0 = arith.constant 0 : i32
    %c0_i32_1 = arith.constant 0 : i32
    return %c0_i32, %c0_i32_0 : i32, i32
  }
}

</mosaic_0001>

<llo_original>
// kernel: net_a4_forward.1
$region0: #{net_a4_forward.1}
  #allocation0 [shape = 'u32[]', space=smem, size = 0x4, offset = 0x4, fixed_abs, tag = 'smem constant byte address 0x4 - core index']
  #allocation1 [shape = 'u32[144,128]{1,0:T(1,128)}', space=vmem, size = 0x12000, scoped, tag = 'internal scratch']
  #allocation2 [shape = 'bf16[8,2,256]{2,1,0:T(2,128)(2,1)}', space=vmem, size = 0x2000, scoped, tag = 'scratch operand']
  #allocation3 [shape = 'f32[2,512]{1,0:T(2,128)}', space=vmem, size = 0x1000, scoped, tag = 'scratch operand']
  #allocation4 [shape = 'f32[2,1024]{1,0:T(2,128)}', space=vmem, size = 0x2000, scoped, tag = 'scratch operand']
  %s0 = inlined_call_operand.vmem [shape: bf16[2,36,512], index: 0, kind: input, shape index: {}]
  %s1 = inlined_call_operand.hbm [shape: bf16[2,8,36], index: 1, kind: input, shape index: {}]
  %s2 = inlined_call_operand.vmem [shape: f32[2,8,1], index: 2, kind: input, shape index: {}]
  %s3 = inlined_call_operand.hbm [shape: bf16[2,8,256,512], index: 3, kind: input, shape index: {}]
  %s4 = inlined_call_operand.hbm [shape: f32[2,1,512], index: 4, kind: input, shape index: {}]
  %s5 = inlined_call_operand.vmem [shape: bf16[1024,1024], index: 5, kind: input, shape index: {}]
  %s6 = inlined_call_operand.hbm [shape: f32[1,1024], index: 6, kind: input, shape index: {}]
  %s7 = inlined_call_operand.hbm [shape: bf16[1024,128], index: 7, kind: input, shape index: {}]
  %s8 = inlined_call_operand.hbm [shape: f32[3,128], index: 8, kind: input, shape index: {}]
  %s9 = inlined_call_operand.hbm [shape: f32[1,128], index: 9, kind: input, shape index: {}]
  %s10 = inlined_call_operand.hbm [shape: f32[2,3], index: 10, kind: input, shape index: {}]
  %s11 = inlined_call_operand.hbm [shape: f32[2,128], index: 11, kind: output, shape index: {}]
  %s12 = sld [smem:[#allocation0]]
  $region125: #{net_a4_forward.1} parent=0
    _
  %s14 = ssub.s32 1, %s12
  %s15 = scalar_select 0, %s14, %s12
  $region1: #{net_a4_forward.1} parent=0
    #allocation5 [shape = 'u8[4096]{0}', space=vmem, size = 0x1000, scoped, tag = 'input window, operand 1']
    #allocation6 [shape = 's32[2]{0}', space=sflag, size = 0x8, scoped, tag = 'scoped memory for net_a4_forward.1']
    #allocation7 [shape = 's32[2]{0}', space=sflag, size = 0x8, scoped, tag = 'scoped memory for net_a4_forward.1']
    #allocation8 [shape = 'u8[2097152]{0}', space=vmem, size = 0x200000, scoped, tag = 'input window, operand 3']
    #allocation9 [shape = 's32[2]{0}', space=sflag, size = 0x8, scoped, tag = 'scoped memory for net_a4_forward.1']
    #allocation10 [shape = 'u8[4096]{0}', space=vmem, size = 0x1000, scoped, tag = 'input window, operand 4']
    #allocation11 [shape = 'u8[4096]{0}', space=vmem, size = 0x1000, scoped, tag = 'input window, operand 6, single buffered']
    #allocation12 [shape = 's32[1]{0}', space=sflag, size = 0x4, scoped, tag = 'scoped memory for net_a4_forward.1']
    #allocation13 [shape = 'u8[262144]{0}', space=vmem, size = 0x40000, scoped, tag = 'input window, operand 7, single buffered']
    #allocation14 [shape = 'u8[2048]{0}', space=vmem, size = 0x800, scoped, tag = 'input window, operand 8, single buffered']
    #allocation15 [shape = 's32[1]{0}', space=sflag, size = 0x4, scoped, tag = 'scoped memory for net_a4_forward.1']
    #allocation16 [shape = 'u8[512]{0}', space=vmem, size = 0x400, scoped, tag = 'input window, operand 9, single buffered']
    #allocation17 [shape = 'u8[1024]{0}', space=vmem, size = 0x400, scoped, tag = 'input window, operand 10, single buffered']
    #allocation18 [shape = 's32[1]{0}', space=sflag, size = 0x4, scoped, tag = 'scoped memory for net_a4_forward.1']
    #allocation19 [shape = 'u8[1024]{0}', space=vmem, size = 0x400, scoped, tag = 'output window, operand 0, single buffered']
    %16 = vsyncpa [#allocation6], 0
    %s17 = scalar_lea.sflag [#allocation6], 1
    %18 = vsyncpa %s17, 0
    %19 = vsyncpa [#allocation9], 0
    %s20 = scalar_lea.sflag [#allocation9], 1
    %21 = vsyncpa %s20, 0
    %22 = vsyncpa [#allocation12], 0
    %23 = vsyncpa [#allocation15], 0
    %24 = vsyncpa [#allocation18], 0
    %25 = vsyncpa [#allocation7], 0
    loop: start=0, step=1, limit=6
    $region2: #{net_a4_forward.1} parent=1 // loop_pre_header
      _
    $region3: #{net_a4_forward.1} parent=1 // loop_header
      %s27 = sphi 0, %s31
      %p28 = scmp.ge.s32.totalorder %s27, 6
      %s34 = sphi 0, %s46
      %s35 = sphi 0, %s42
      %s36 = sphi 0, %s34
      %s37 = sphi 0, %s35
      %s38 = sphi 0, %s36
      %s39 = sphi 0, %s37
      %s49 = sphi 0, %s51
      %s52 = sphi 0, %s49
      %s53 = sphi 0, %s52
      %s69 = sphi 0, %s53
      %s75 = sphi 0, %s77
      %s78 = sphi 0, %s75
      %s79 = sphi 0, %s78
      %s95 = sphi 0, %s79
      %s101 = sphi 0, %s103
      %s104 = sphi 0, %s101
      %s105 = sphi 0, %s104
      %s121 = sphi 0, %s105
      %s129 = sphi 0, %s131
      %s132 = sphi 0, %s129
      %s133 = sphi 0, %s132
      %s149 = sphi 0, %s133
      %s155 = sphi 0, %s157
      %s158 = sphi 0, %s155
      %s159 = sphi 0, %s158
      %s175 = sphi 0, %s159
      %s181 = sphi 0, %s183
      %s184 = sphi 0, %s181
      %s185 = sphi 0, %s184
      %s201 = sphi 0, %s185
      %s205 = sphi 0, %s205
      %s207 = sphi 0, %s205
      %s208 = sphi 0, %s207
      %s222 = sphi 0, %s208
      %s226 = sphi 0, %s226
      %s228 = sphi 0, %s226
      %s229 = sphi 0, %s228
      %s243 = sphi 0, %s229
      %s247 = sphi 0, %s247
      %s249 = sphi 0, %s247
      %s250 = sphi 0, %s249
      %s264 = sphi 0, %s250
      %s268 = sphi 0, %s268
      %s270 = sphi 0, %s268
      %s271 = sphi 0, %s270
      %s285 = sphi 0, %s271
      %s289 = sphi 0, %s289
      %s291 = sphi 0, %s289
      %s292 = sphi 0, %s291
      %s306 = sphi 0, %s292
      %s310 = sphi 0, %s310
      %s312 = sphi 0, %s310
      %s313 = sphi 0, %s312
      %s327 = sphi 0, %s313
    $region4: #{net_a4_forward.1} parent=1 // loop_header_branch
      %30 = sbr.rel (%p28) target = $region8
    $region5: #{net_a4_forward.1} parent=1 // loop_body
      %s32 = ssub.s32 %s27, 1
      %s33 = ssub.s32 %s27, 2
      %s40 = sadd.s32 1, %s35
      %p41 = scmp.ge.s32.totalorder %s40, 2
      %s42 = scalar_select %p41, 0, %s40
      %s43 = sadd.s32 1, %s34
      %s44 = scalar_select %p41, %s43, %s34
      %p45 = scmp.ge.s32.totalorder %s44, 2
      %s46 = scalar_select %p45, 0, %s44
      %s47 = ssub.s32 %s34, %s46
      %p48 = scmp.eq.s32.totalorder %s47, 0
      %s50 = sadd.s32 %s49, 1
      %s51 = scalar_select %p48, %s49, %s50
      %p54 = pneg %p48
      %p55 = scmp.eq.s32.totalorder %s27, 3
      %p56 = por %p54, %p55
      %p57 = scmp.ne.s32.totalorder %s49, %s52
      %p58 = scmp.eq.s32.totalorder %s27, 0
      %p59 = por %p57, %p58
      %p60 = scmp.ne.s32.totalorder %s49, %s52
      %p61 = scmp.eq.s32.totalorder %s32, 3
      %p62 = por %p60, %p61
      %p63 = scmp.ne.s32.totalorder %s52, %s53
      %p64 = scmp.eq.s32.totalorder %s32, 0
      %p65 = por %p63, %p64
      %p66 = scmp.ne.s32.totalorder %s52, %s53
      %p67 = scmp.eq.s32.totalorder %s33, 3
      %p68 = por %p66, %p67
      %p70 = scmp.ne.s32.totalorder %s53, %s69
      %p71 = scmp.eq.s32.totalorder %s33, 0
      %p72 = por %p70, %p71
      %s73 = ssub.s32 %s34, %s46
      %p74 = scmp.eq.s32.totalorder %s73, 0
      %s76 = sadd.s32 %s75, 1
      %s77 = scalar_select %p74, %s75, %s76
      %p80 = pneg %p74
      %p81 = scmp.eq.s32.totalorder %s27, 3
      %p82 = por %p80, %p81
      %p83 = scmp.ne.s32.totalorder %s75, %s78
      %p84 = scmp.eq.s32.totalorder %s27, 0
      %p85 = por %p83, %p84
      %p86 = scmp.ne.s32.totalorder %s75, %s78
      %p87 = scmp.eq.s32.totalorder %s32, 3
      %p88 = por %p86, %p87
      %p89 = scmp.ne.s32.totalorder %s78, %s79
      %p90 = scmp.eq.s32.totalorder %s32, 0
      %p91 = por %p89, %p90
      %p92 = scmp.ne.s32.totalorder %s78, %s79
      %p93 = scmp.eq.s32.totalorder %s33, 3
      %p94 = por %p92, %p93
      %p96 = scmp.ne.s32.totalorder %s79, %s95
      %p97 = scmp.eq.s32.totalorder %s33, 0
      %p98 = por %p96, %p97
      %s99 = ssub.s32 %s34, %s46
      %p100 = scmp.eq.s32.totalorder %s99, 0
      %s102 = sadd.s32 %s101, 1
      %s103 = scalar_select %p100, %s101, %s102
      %p106 = pneg %p100
      %p107 = scmp.eq.s32.totalorder %s27, 3
      %p108 = por %p106, %p107
      %p109 = scmp.ne.s32.totalorder %s101, %s104
      %p110 = scmp.eq.s32.totalorder %s27, 0
      %p111 = por %p109, %p110
      %p112 = scmp.ne.s32.totalorder %s101, %s104
      %p113 = scmp.eq.s32.totalorder %s32, 3
      %p114 = por %p112, %p113
      %p115 = scmp.ne.s32.totalorder %s104, %s105
      %p116 = scmp.eq.s32.totalorder %s32, 0
      %p117 = por %p115, %p116
      %p118 = scmp.ne.s32.totalorder %s104, %s105
      %p119 = scmp.eq.s32.totalorder %s33, 3
      %p120 = por %p118, %p119
      %p122 = scmp.ne.s32.totalorder %s105, %s121
      %p123 = scmp.eq.s32.totalorder %s33, 0
      %p124 = por %p122, %p123
      %s125 = ssub.s32 %s34, %s46
      %s126 = ssub.s32 %s35, %s42
      %s127 = sor.u32 %s125, %s126
      %p128 = scmp.eq.s32.totalorder %s127, 0
      %s130 = sadd.s32 %s129, 1
      %s131 = scalar_select %p128, %s129, %s130
      %p134 = pneg %p128
      %p135 = scmp.eq.s32.totalorder %s27, 3
      %p136 = por %p134, %p135
      %p137 = scmp.ne.s32.totalorder %s129, %s132
      %p138 = scmp.eq.s32.totalorder %s27, 0
      %p139 = por %p137, %p138
      %p140 = scmp.ne.s32.totalorder %s129, %s132
      %p141 = scmp.eq.s32.totalorder %s32, 3
      %p142 = por %p140, %p141
      %p143 = scmp.ne.s32.totalorder %s132, %s133
      %p144 = scmp.eq.s32.totalorder %s32, 0
      %p145 = por %p143, %p144
      %p146 = scmp.ne.s32.totalorder %s132, %s133
      %p147 = scmp.eq.s32.totalorder %s33, 3
      %p148 = por %p146, %p147
      %p150 = scmp.ne.s32.totalorder %s133, %s149
      %p151 = scmp.eq.s32.totalorder %s33, 0
      %p152 = por %p150, %p151
      %s153 = ssub.s32 %s34, %s46
      %p154 = scmp.eq.s32.totalorder %s153, 0
      %s156 = sadd.s32 %s155, 1
      %s157 = scalar_select %p154, %s155, %s156
      %p160 = pneg %p154
      %p161 = scmp.eq.s32.totalorder %s27, 3
      %p162 = por %p160, %p161
      %p163 = scmp.ne.s32.totalorder %s155, %s158
      %p164 = scmp.eq.s32.totalorder %s27, 0
      %p165 = por %p163, %p164
      %p166 = scmp.ne.s32.totalorder %s155, %s158
      %p167 = scmp.eq.s32.totalorder %s32, 3
      %p168 = por %p166, %p167
      %p169 = scmp.ne.s32.totalorder %s158, %s159
      %p170 = scmp.eq.s32.totalorder %s32, 0
      %p171 = por %p169, %p170
      %p172 = scmp.ne.s32.totalorder %s158, %s159
      %p173 = scmp.eq.s32.totalorder %s33, 3
      %p174 = por %p172, %p173
      %p176 = scmp.ne.s32.totalorder %s159, %s175
      %p177 = scmp.eq.s32.totalorder %s33, 0
      %p178 = por %p176, %p177
      %s179 = ssub.s32 %s34, %s46
      %p180 = scmp.eq.s32.totalorder %s179, 0
      %s182 = sadd.s32 %s181, 1
      %s183 = scalar_select %p180, %s181, %s182
      %p186 = pneg %p180
      %p187 = scmp.eq.s32.totalorder %s27, 3
      %p188 = por %p186, %p187
      %p189 = scmp.ne.s32.totalorder %s181, %s184
      %p190 = scmp.eq.s32.totalorder %s27, 0
      %p191 = por %p189, %p190
      %p192 = scmp.ne.s32.totalorder %s181, %s184
      %p193 = scmp.eq.s32.totalorder %s32, 3
      %p194 = por %p192, %p193
      %p195 = scmp.ne.s32.totalorder %s184, %s185
      %p196 = scmp.eq.s32.totalorder %s32, 0
      %p197 = por %p195, %p196
      %p198 = scmp.ne.s32.totalorder %s184, %s185
      %p199 = scmp.eq.s32.totalorder %s33, 3
      %p200 = por %p198, %p199
      %p202 = scmp.ne.s32.totalorder %s185, %s201
      %p203 = scmp.eq.s32.totalorder %s33, 0
      %p204 = por %p202, %p203
      %s206 = sadd.s32 %s205, 1
      %p209 = scmp.eq.s32.totalorder %s27, 3
      %p210 = scmp.ne.s32.totalorder %s205, %s207
      %p211 = scmp.eq.s32.totalorder %s27, 0
      %p212 = por %p210, %p211
      %p213 = scmp.ne.s32.totalorder %s205, %s207
      %p214 = scmp.eq.s32.totalorder %s32, 3
      %p215 = por %p213, %p214
      %p216 = scmp.ne.s32.totalorder %s207, %s208
      %p217 = scmp.eq.s32.totalorder %s32, 0
      %p218 = por %p216, %p217
      %p219 = scmp.ne.s32.totalorder %s207, %s208
      %p220 = scmp.eq.s32.totalorder %s33, 3
      %p221 = por %p219, %p220
      %p223 = scmp.ne.s32.totalorder %s208, %s222
      %p224 = scmp.eq.s32.totalorder %s33, 0
      %p225 = por %p223, %p224
      %s227 = sadd.s32 %s226, 1
      %p230 = scmp.eq.s32.totalorder %s27, 3
      %p231 = scmp.ne.s32.totalorder %s226, %s228
      %p232 = scmp.eq.s32.totalorder %s27, 0
      %p233 = por %p231, %p232
      %p234 = scmp.ne.s32.totalorder %s226, %s228
      %p235 = scmp.eq.s32.totalorder %s32, 3
      %p236 = por %p234, %p235
      %p237 = scmp.ne.s32.totalorder %s228, %s229
      %p238 = scmp.eq.s32.totalorder %s32, 0
      %p239 = por %p237, %p238
      %p240 = scmp.ne.s32.totalorder %s228, %s229
      %p241 = scmp.eq.s32.totalorder %s33, 3
      %p242 = por %p240, %p241
      %p244 = scmp.ne.s32.totalorder %s229, %s243
      %p245 = scmp.eq.s32.totalorder %s33, 0
      %p246 = por %p244, %p245
      %s248 = sadd.s32 %s247, 1
      %p251 = scmp.eq.s32.totalorder %s27, 3
      %p252 = scmp.ne.s32.totalorder %s247, %s249
      %p253 = scmp.eq.s32.totalorder %s27, 0
      %p254 = por %p252, %p253
      %p255 = scmp.ne.s32.totalorder %s247, %s249
      %p256 = scmp.eq.s32.totalorder %s32, 3
      %p257 = por %p255, %p256
      %p258 = scmp.ne.s32.totalorder %s249, %s250
      %p259 = scmp.eq.s32.totalorder %s32, 0
      %p260 = por %p258, %p259
      %p261 = scmp.ne.s32.totalorder %s249, %s250
      %p262 = scmp.eq.s32.totalorder %s33, 3
      %p263 = por %p261, %p262
      %p265 = scmp.ne.s32.totalorder %s250, %s264
      %p266 = scmp.eq.s32.totalorder %s33, 0
      %p267 = por %p265, %p266
      %s269 = sadd.s32 %s268, 1
      %p272 = scmp.eq.s32.totalorder %s27, 3
      %p273 = scmp.ne.s32.totalorder %s268, %s270
      %p274 = scmp.eq.s32.totalorder %s27, 0
      %p275 = por %p273, %p274
      %p276 = scmp.ne.s32.totalorder %s268, %s270
      %p277 = scmp.eq.s32.totalorder %s32, 3
      %p278 = por %p276, %p277
      %p279 = scmp.ne.s32.totalorder %s270, %s271
      %p280 = scmp.eq.s32.totalorder %s32, 0
      %p281 = por %p279, %p280
      %p282 = scmp.ne.s32.totalorder %s270, %s271
      %p283 = scmp.eq.s32.totalorder %s33, 3
      %p284 = por %p282, %p283
      %p286 = scmp.ne.s32.totalorder %s271, %s285
      %p287 = scmp.eq.s32.totalorder %s33, 0
      %p288 = por %p286, %p287
      %s290 = sadd.s32 %s289, 1
      %p293 = scmp.eq.s32.totalorder %s27, 3
      %p294 = scmp.ne.s32.totalorder %s289, %s291
      %p295 = scmp.eq.s32.totalorder %s27, 0
      %p296 = por %p294, %p295
      %p297 = scmp.ne.s32.totalorder %s289, %s291
      %p298 = scmp.eq.s32.totalorder %s32, 3
      %p299 = por %p297, %p298
      %p300 = scmp.ne.s32.totalorder %s291, %s292
      %p301 = scmp.eq.s32.totalorder %s32, 0
      %p302 = por %p300, %p301
      %p303 = scmp.ne.s32.totalorder %s291, %s292
      %p304 = scmp.eq.s32.totalorder %s33, 3
      %p305 = por %p303, %p304
      %p307 = scmp.ne.s32.totalorder %s292, %s306
      %p308 = scmp.eq.s32.totalorder %s33, 0
      %p309 = por %p307, %p308
      %s311 = sadd.s32 %s310, 1
      %p314 = scmp.eq.s32.totalorder %s27, 3
      %p315 = scmp.ne.s32.totalorder %s310, %s312
      %p316 = scmp.eq.s32.totalorder %s27, 0
      %p317 = por %p315, %p316
      %p318 = scmp.ne.s32.totalorder %s310, %s312
      %p319 = scmp.eq.s32.totalorder %s32, 3
      %p320 = por %p318, %p319
      %p321 = scmp.ne.s32.totalorder %s312, %s313
      %p322 = scmp.eq.s32.totalorder %s32, 0
      %p323 = por %p321, %p322
      %p324 = scmp.ne.s32.totalorder %s312, %s313
      %p325 = scmp.eq.s32.totalorder %s33, 3
      %p326 = por %p324, %p325
      %p328 = scmp.ne.s32.totalorder %s313, %s327
      %p329 = scmp.eq.s32.totalorder %s33, 0
      %p330 = por %p328, %p329
      %p331 = scmp.le.s32.totalorder 1, %s27
      %p332 = scmp.lt.s32.totalorder %s27, 5
      %p333 = pnand %p331, %p332
      %p334 = pneg %p333
      // Predicated region
      $region9: #{net_a4_forward.1} parent=5 // pred_check
        _
      $region10: #{net_a4_forward.1} parent=5 // pred_check_branch
        %336 = sbr.rel (%p333) target = $region12
      $region11: #{net_a4_forward.1} parent=5 // pred_region
        %s337 = ssub.s32 %s27, 1
        // Predicated region
        $region13: #{net_a4_forward.1} parent=11 // pred_check
          %p338 = pneg %p218
        $region14: #{net_a4_forward.1} parent=11 // pred_check_branch
          %340 = sbr.rel (%p338) target = $region16
        $region15: #{net_a4_forward.1} parent=11 // pred_region
          %s342 = ssub.s32 128, 128
          %343 = vsyncadd [#allocation12], %s342
          %s345 = sshll.u32 [#allocation11], 4
          %s346 = int_to_ptr.vmem [resolvable:$true] %s345
          %348 = dma.hbm_to_vmem [thread:$0]  %s6, 128, %s346, [#allocation12]
        $region16: #{net_a4_forward.1} parent=11 // pred_fallthru
          _
        // Predicated region
        $region17: #{net_a4_forward.1} parent=11 // pred_check
          %p349 = pneg %p239
        $region18: #{net_a4_forward.1} parent=11 // pred_check_branch
          %351 = sbr.rel (%p349) target = $region20
        $region19: #{net_a4_forward.1} parent=11 // pred_region
          %s353 = ssub.s32 8192, 8192
          %354 = vsyncadd [#allocation12], %s353
          %s355 = sshll.u32 [#allocation13], 4
          %s356 = int_to_ptr.vmem [resolvable:$true] %s355
          %361 = dma.hbm_to_vmem [thread:$0]  %s7, 8192, %s356, [#allocation12], 64, 64, 4
        $region20: #{net_a4_forward.1} parent=11 // pred_fallthru
          _
        // Predicated region
        $region21: #{net_a4_forward.1} parent=11 // pred_check
          %p362 = pneg %p260
        $region22: #{net_a4_forward.1} parent=11 // pred_check_branch
          %364 = sbr.rel (%p362) target = $region24
        $region23: #{net_a4_forward.1} parent=11 // pred_region
          %s366 = ssub.s32 64, 64
          %367 = vsyncadd [#allocation15], %s366
          %s369 = sshll.u32 [#allocation14], 4
          %s370 = int_to_ptr.vmem [resolvable:$true] %s369
          %372 = dma.hbm_to_vmem [thread:$0]  %s8, 64, %s370, [#allocation15]
        $region24: #{net_a4_forward.1} parent=11 // pred_fallthru
          _
        // Predicated region
        $region25: #{net_a4_forward.1} parent=11 // pred_check
          %p373 = pneg %p281
        $region26: #{net_a4_forward.1} parent=11 // pred_check_branch
          %375 = sbr.rel (%p373) target = $region28
        $region27: #{net_a4_forward.1} parent=11 // pred_region
          %s377 = ssub.s32 16, 16
          %378 = vsyncadd [#allocation15], %s377
          %s380 = sshll.u32 [#allocation16], 4
          %s381 = int_to_ptr.vmem [resolvable:$true] %s380
          %383 = dma.hbm_to_vmem [thread:$0]  %s9, 16, %s381, [#allocation15]
        $region28: #{net_a4_forward.1} parent=11 // pred_fallthru
          _
        // Predicated region
        $region29: #{net_a4_forward.1} parent=11 // pred_check
          %p384 = pneg %p302
        $region30: #{net_a4_forward.1} parent=11 // pred_check_branch
          %386 = sbr.rel (%p384) target = $region32
        $region31: #{net_a4_forward.1} parent=11 // pred_region
          %s388 = ssub.s32 32, 32
          %389 = vsyncadd [#allocation18], %s388
          %s391 = sshll.u32 [#allocation17], 4
          %s392 = int_to_ptr.vmem [resolvable:$true] %s391
          %394 = dma.hbm_to_vmem [thread:$0]  %s10, 32, %s392, [#allocation18]
        $region32: #{net_a4_forward.1} parent=11 // pred_fallthru
          _
      $region12: #{net_a4_forward.1} parent=5 // pred_fallthru
        _
      %p395 = scmp.lt.s32.totalorder %s27, 4
      // Predicated region
      $region33: #{net_a4_forward.1} parent=5 // pred_check
        %p396 = pneg %p395
      $region34: #{net_a4_forward.1} parent=5 // pred_check_branch
        %398 = sbr.rel (%p396) target = $region36
      $region35: #{net_a4_forward.1} parent=5 // pred_region
        // Predicated region
        $region37: #{net_a4_forward.1} parent=35 // pred_check
          %p399 = pneg %p59
        $region38: #{net_a4_forward.1} parent=35 // pred_check_branch
          %401 = sbr.rel (%p399) target = $region40
        $region39: #{net_a4_forward.1} parent=35 // pred_region
          %p402 = scmp.lt.s32.totalorder %s34, 1
          %s403 = scalar_select %p402, %s34, 1
          %s404 = smul.addr %s403, 20
          %s405 = smul.addr %s404, 4
          %s406 = scalar_lea.vmem %s0, %s405
        $region40: #{net_a4_forward.1} parent=35 // pred_fallthru
          _
        // Predicated region
        $region41: #{net_a4_forward.1} parent=35 // pred_check
          %p407 = pneg %p85
        $region42: #{net_a4_forward.1} parent=35 // pred_check_branch
          %409 = sbr.rel (%p407) target = $region44
        $region43: #{net_a4_forward.1} parent=35 // pred_region
          %s410 = sand.u32 %s75, 1
          %s411 = scalar_lea.sflag [#allocation6], %s410
          %s412 = sand.u32 %s75, 1
          %s413 = smul.addr %s412, 4
          %s414 = scalar_lea.vmem [#allocation5], %s413
          %s416 = ssub.s32 64, 64
          %417 = vsyncadd %s411, %s416
          %s418 = smul.addr %s34, 64
          %s419 = scalar_lea.hbm %s1, %s418
          %s421 = sshll.u32 %s414, 4
          %s422 = int_to_ptr.vmem [resolvable:$true] %s421
          %424 = dma.hbm_to_vmem [thread:$0]  %s419, 64, %s422, %s411
        $region44: #{net_a4_forward.1} parent=35 // pred_fallthru
          _
        // Predicated region
        $region45: #{net_a4_forward.1} parent=35 // pred_check
          %p425 = pneg %p111
        $region46: #{net_a4_forward.1} parent=35 // pred_check_branch
          %427 = sbr.rel (%p425) target = $region48
        $region47: #{net_a4_forward.1} parent=35 // pred_region
          %p428 = scmp.lt.s32.totalorder %s34, 1
          %s429 = scalar_select %p428, %s34, 1
          %s430 = smul.addr %s429, 8
          %s431 = scalar_lea.vmem %s2, %s430
        $region48: #{net_a4_forward.1} parent=35 // pred_fallthru
          _
        // Predicated region
        $region49: #{net_a4_forward.1} parent=35 // pred_check
          %p432 = pneg %p139
        $region50: #{net_a4_forward.1} parent=35 // pred_check_branch
          %434 = sbr.rel (%p432) target = $region52
        $region51: #{net_a4_forward.1} parent=35 // pred_region
          %s435 = sand.u32 %s27, 1
          %s436 = scalar_lea.sflag [#allocation9], %s435
          %s437 = sand.u32 %s129, 1
          %s438 = smul.addr %s437, 2048
          %s439 = scalar_lea.vmem [#allocation8], %s438
          %s440 = smul.u32 4, %s35
          %s442 = ssub.s32 32768, 32768
          %443 = vsyncadd %s436, %s442
          %s444 = smul.addr %s440, 128
          %s445 = smul.addr %s34, 1024
          %s446 = sadd.s32 %s444, %s445
          %s447 = smul.addr %s446, 64
          %s448 = scalar_lea.hbm %s3, %s447
          %s449 = sshll.u32 %s439, 4
          %s450 = int_to_ptr.vmem [resolvable:$true] %s449
          %455 = dma.hbm_to_vmem [thread:$0]  %s448, 32768, %s450, %s436, 256, 256, 16
        $region52: #{net_a4_forward.1} parent=35 // pred_fallthru
          _
        // Predicated region
        $region53: #{net_a4_forward.1} parent=35 // pred_check
          %p456 = pneg %p165
        $region54: #{net_a4_forward.1} parent=35 // pred_check_branch
          %458 = sbr.rel (%p456) target = $region56
        $region55: #{net_a4_forward.1} parent=35 // pred_region
          %s459 = sand.u32 %s27, 1
          %s460 = scalar_lea.sflag [#allocation9], %s459
          %s461 = sand.u32 %s155, 1
          %s462 = smul.addr %s461, 4
          %s463 = scalar_lea.vmem [#allocation10], %s462
          %s465 = ssub.s32 64, 64
          %466 = vsyncadd %s460, %s465
          %s467 = smul.addr %s34, 4
          %s468 = smul.addr %s467, 16
          %s469 = scalar_lea.hbm %s4, %s468
          %s471 = sshll.u32 %s463, 4
          %s472 = int_to_ptr.vmem [resolvable:$true] %s471
          %474 = dma.hbm_to_vmem [thread:$0]  %s469, 64, %s472, %s460
        $region56: #{net_a4_forward.1} parent=35 // pred_fallthru
          _
        // Predicated region
        $region57: #{net_a4_forward.1} parent=35 // pred_check
          %p475 = pneg %p191
        $region58: #{net_a4_forward.1} parent=35 // pred_check_branch
          %477 = sbr.rel (%p475) target = $region60
        $region59: #{net_a4_forward.1} parent=35 // pred_region
          %s478 = smul.u32 64, %s34
          %p479 = scmp.lt.s32.totalorder %s478, 127
          %s480 = scalar_select %p479, %s478, 127
          %s481 = smul.addr %s480, 8
          %s482 = smul.addr %s481, 4
          %s483 = scalar_lea.vmem %s5, %s482
          %s484 = smul.u32 64, %s34
        $region60: #{net_a4_forward.1} parent=35 // pred_fallthru
          _
      $region36: #{net_a4_forward.1} parent=5 // pred_fallthru
        _
      %p485 = scmp.le.s32.totalorder 1, %s27
      %p486 = scmp.lt.s32.totalorder %s27, 5
      %p487 = pnand %p485, %p486
      %p488 = pneg %p487
      // Predicated region
      $region61: #{net_a4_forward.1} parent=5 // pred_check
        _
      $region62: #{net_a4_forward.1} parent=5 // pred_check_branch
        %490 = sbr.rel (%p487) target = $region64
      $region63: #{net_a4_forward.1} parent=5 // pred_region
        %s491 = ssub.s32 %s27, 1
        %s492 = sand.u32 %s78, 1
        %s493 = scalar_lea.sflag [#allocation6], %s492
        %s494 = sand.u32 %s78, 1
        %s495 = smul.addr %s494, 4
        %s496 = scalar_lea.vmem [#allocation5], %s495
        // Predicated region
        $region65: #{net_a4_forward.1} parent=63 // pred_check
          %p497 = pneg %p91
        $region66: #{net_a4_forward.1} parent=63 // pred_check_branch
          %499 = sbr.rel (%p497) target = $region68
        $region67: #{net_a4_forward.1} parent=63 // pred_region
          %500 = dma.done %s493, 64
        $region68: #{net_a4_forward.1} parent=63 // pred_fallthru
          _
        %s501 = sand.u32 %s32, 1
        %s502 = scalar_lea.sflag [#allocation9], %s501
        %s503 = sand.u32 %s132, 1
        %s504 = smul.addr %s503, 2048
        %s505 = scalar_lea.vmem [#allocation8], %s504
        // Predicated region
        $region69: #{net_a4_forward.1} parent=63 // pred_check
          %p506 = pneg %p145
        $region70: #{net_a4_forward.1} parent=63 // pred_check_branch
          %508 = sbr.rel (%p506) target = $region72
        $region71: #{net_a4_forward.1} parent=63 // pred_region
          %509 = dma.done %s502, 32768
        $region72: #{net_a4_forward.1} parent=63 // pred_fallthru
          _
        %s510 = sand.u32 %s32, 1
        %s511 = scalar_lea.sflag [#allocation9], %s510
        %s512 = sand.u32 %s158, 1
        %s513 = smul.addr %s512, 4
        %s514 = scalar_lea.vmem [#allocation10], %s513
        // Predicated region
        $region73: #{net_a4_forward.1} parent=63 // pred_check
          %p515 = pneg %p171
        $region74: #{net_a4_forward.1} parent=63 // pred_check_branch
          %517 = sbr.rel (%p515) target = $region76
        $region75: #{net_a4_forward.1} parent=63 // pred_region
          %518 = dma.done %s511, 64
        $region76: #{net_a4_forward.1} parent=63 // pred_fallthru
          _
        // Predicated region
        $region77: #{net_a4_forward.1} parent=63 // pred_check
          %p519 = pneg %p218
        $region78: #{net_a4_forward.1} parent=63 // pred_check_branch
          %521 = sbr.rel (%p519) target = $region80
        $region79: #{net_a4_forward.1} parent=63 // pred_region
          %522 = dma.done [#allocation12], 128
        $region80: #{net_a4_forward.1} parent=63 // pred_fallthru
          _
        // Predicated region
        $region81: #{net_a4_forward.1} parent=63 // pred_check
          %p523 = pneg %p239
        $region82: #{net_a4_forward.1} parent=63 // pred_check_branch
          %525 = sbr.rel (%p523) target = $region84
        $region83: #{net_a4_forward.1} parent=63 // pred_region
          %526 = dma.done [#allocation12], 8192
        $region84: #{net_a4_forward.1} parent=63 // pred_fallthru
          _
        // Predicated region
        $region85: #{net_a4_forward.1} parent=63 // pred_check
          %p527 = pneg %p260
        $region86: #{net_a4_forward.1} parent=63 // pred_check_branch
          %529 = sbr.rel (%p527) target = $region88
        $region87: #{net_a4_forward.1} parent=63 // pred_region
          %530 = dma.done [#allocation15], 64
        $region88: #{net_a4_forward.1} parent=63 // pred_fallthru
          _
        // Predicated region
        $region89: #{net_a4_forward.1} parent=63 // pred_check
          %p531 = pneg %p281
        $region90: #{net_a4_forward.1} parent=63 // pred_check_branch
          %533 = sbr.rel (%p531) target = $region92
        $region91: #{net_a4_forward.1} parent=63 // pred_region
          %534 = dma.done [#allocation15], 16
        $region92: #{net_a4_forward.1} parent=63 // pred_fallthru
          _
        // Predicated region
        $region93: #{net_a4_forward.1} parent=63 // pred_check
          %p535 = pneg %p302
        $region94: #{net_a4_forward.1} parent=63 // pred_check_branch
          %537 = sbr.rel (%p535) target = $region96
        $region95: #{net_a4_forward.1} parent=63 // pred_region
          %538 = dma.done [#allocation18], 32
        $region96: #{net_a4_forward.1} parent=63 // pred_fallthru
          _
        %p539 = scmp.lt.s32.totalorder %s36, 1
        %s540 = scalar_select %p539, %s36, 1
        %s541 = smul.addr %s540, 20
        %s542 = smul.addr %s541, 4
        %s543 = scalar_lea.vmem %s0, %s542
        %p544 = pneg %p65
        %p545 = pneg %p62
        %s546 = sand.u32 %s78, 1
        %s547 = scalar_lea.sflag [#allocation6], %s546
        %s548 = sand.u32 %s78, 1
        %s549 = smul.addr %s548, 4
        %s550 = scalar_lea.vmem [#allocation5], %s549
        %p551 = pneg %p91
        %p552 = pneg %p88
        %p553 = scmp.lt.s32.totalorder %s36, 1
        %s554 = scalar_select %p553, %s36, 1
        %s555 = smul.addr %s554, 8
        %s556 = scalar_lea.vmem %s2, %s555
        %p557 = pneg %p117
        %p558 = pneg %p114
        %s559 = sand.u32 %s32, 1
        %s560 = scalar_lea.sflag [#allocation9], %s559
        %s561 = sand.u32 %s132, 1
        %s562 = smul.addr %s561, 2048
        %s563 = scalar_lea.vmem [#allocation8], %s562
        %p564 = pneg %p145
        %p565 = pneg %p142
        %s566 = sand.u32 %s32, 1
        %s567 = scalar_lea.sflag [#allocation9], %s566
        %s568 = sand.u32 %s158, 1
        %s569 = smul.addr %s568, 4
        %s570 = scalar_lea.vmem [#allocation10], %s569
        %p571 = pneg %p171
        %p572 = pneg %p168
        %s573 = smul.u32 64, %s36
        %p574 = scmp.lt.s32.totalorder %s573, 127
        %s575 = scalar_select %p574, %s573, 127
        %s576 = smul.addr %s575, 8
        %s577 = smul.addr %s576, 4
        %s578 = scalar_lea.vmem %s5, %s577
        %p579 = pneg %p197
        %p580 = pneg %p194
        %p581 = pneg %p218
        %p582 = pneg %p215
        %p583 = pneg %p239
        %p584 = pneg %p236
        %p585 = pneg %p260
        %p586 = pneg %p257
        %p587 = pneg %p281
        %p588 = pneg %p278
        %p589 = pneg %p302
        %p590 = pneg %p299
        %p591 = pneg %p323
        %p592 = pneg %p320
        %p593 = scmp.lt.s32.totalorder %s36, 1
        %s594 = scalar_select %p593, %s36, 1
        %s595 = smul.addr %s594, 20
        %s596 = smul.addr %s595, 4
        %s597 = scalar_lea.vmem %s0, %s596
        %p598 = scmp.lt.s32.totalorder %s36, 1
        %s599 = scalar_select %p598, %s36, 1
        %s600 = smul.addr %s599, 8
        %s601 = scalar_lea.vmem %s2, %s600
        %s602 = smul.u32 4, %s37
        %s603 = smul.u32 64, %s36
        %p604 = scmp.lt.s32.totalorder %s603, 127
        %s605 = scalar_select %p604, %s603, 127
        %s606 = smul.addr %s605, 8
        %s607 = smul.addr %s606, 4
        %s608 = scalar_lea.vmem %s5, %s607
        %s609 = smul.u32 64, %s36
        %p611 = scmp.eq.s32.totalorder %s36, 0
        %p612 = scmp.eq.s32.totalorder %s37, 0
        %p613 = pnand %p611, %p612
        %p614 = pneg %p613
        // Predicated region
        $region97: #{net_a4_forward.1} parent=63 // pred_check
          _
        $region98: #{net_a4_forward.1} parent=63 // pred_check_branch
          %616 = sbr.rel (%p613) target = $region100
        $region99: #{net_a4_forward.1} parent=63 // pred_region
          %617 = vst [vmem:[#allocation4] sm:$0xff] 0.0
          %618 = vst [vmem:[#allocation4 + $0x8] sm:$0xff] 0.0
        $region100: #{net_a4_forward.1} parent=63 // pred_fallthru
          _
        // Predicated region
        $region101: #{net_a4_forward.1} parent=63 // pred_check
          %p619 = pneg %p612
        $region102: #{net_a4_forward.1} parent=63 // pred_check_branch
          %621 = sbr.rel (%p619) target = $region104
        $region103: #{net_a4_forward.1} parent=63 // pred_region
          %622 = vst [vmem:[#allocation3] sm:$0xff] 0.0
          %v623 = vld [vmem:[%s496] sm:$0xf]
          %v624 = vld [vmem:[%s597] sm:$0xff]
          %v625 = vld [vmem:[%s597 + $0x8] sm:$0xff]
          %v626 = vld [vmem:[%s597 + $0x10] sm:$0xff]
          %v627 = vld [vmem:[%s597 + $0x18] sm:$0xff]
          %v628 = vld [vmem:[%s597 + $0x20] sm:$0xff]
          %v629 = vld [vmem:[%s597 + $0x28] sm:$0xff]
          %v630 = vld [vmem:[%s597 + $0x30] sm:$0xff]
          %v631 = vld [vmem:[%s597 + $0x38] sm:$0xff]
          %v632 = vld [vmem:[%s597 + $0x40] sm:$0x33]
          %v633 = vld [vmem:[%s597 + $0x48] sm:$0x33]
          %v634 = vld [vmem:[%s601] sm:$0xff]
          %636 = vset.pattern.permute.xlu0 0
          %637 = vperm.xlu0 %636, %v634
          %v638 = vpop.permute.xlu0 %637
          %v650 = vunpack.c.l.b16 %v624
          %v651 = vunpack.c.h.b16 %v624
          %v652 = vunpack.c.l.b16 %v625
          %v653 = vunpack.c.h.b16 %v625
          %v654 = vunpack.c.l.b16 %v626
          %v655 = vunpack.c.h.b16 %v626
          %v656 = vunpack.c.l.b16 %v627
          %v657 = vunpack.c.h.b16 %v627
          %v658 = vunpack.c.l.b16 %v628
          %v659 = vunpack.c.h.b16 %v628
          %v660 = vunpack.c.l.b16 %v629
          %v661 = vunpack.c.h.b16 %v629
          %v662 = vunpack.c.l.b16 %v630
          %v663 = vunpack.c.h.b16 %v630
          %v664 = vunpack.c.l.b16 %v631
          %v665 = vunpack.c.h.b16 %v631
          %v666 = vunpack.c.l.b16 %v632
          %v667 = vunpack.c.h.b16 %v632
          %v668 = vunpack.c.l.b16 %v633
          %v669 = vunpack.c.h.b16 %v633
          %v670 = vpack.c.b16 %v654, %v650
          %v671 = vpack.c.b16 %v655, %v651
          %v672 = vpack.c.b16 %v656, %v652
          %v673 = vpack.c.b16 %v657, %v653
          %v674 = vpack.c.b16 %v662, %v658
          %v675 = vpack.c.b16 %v663, %v659
          %v676 = vpack.c.b16 %v664, %v660
          %v677 = vpack.c.b16 %v665, %v661
          %v678 = vpack.c.b16 %v666, %v666
          %v679 = vpack.c.b16 %v667, %v667
          %v680 = vpack.c.b16 %v668, %v668
          %v681 = vpack.c.b16 %v669, %v669
          %vm690 = vcmask 293888
          %v692 = vsel %vm690, %v623, 0
          %vm694 = vcmask 1041408
          %v696 = vsel %vm694, %v678, 0
          %v699 = vsel %vm694, %v679, 0
          %v702 = vsel %vm694, %v680, 0
          %v705 = vsel %vm694, %v681, 0
          %707 = vmatprep.subr.bf16.mxu0 %v671
          %708 = vmatpush1.bf16.msra.mxu0 %v670
          %709 = vmatprep.subr.bf16.mxu0 %v675
          %710 = vmatpush1.bf16.msra.mxu0 %v674
          %711 = vmatprep.subr.bf16.mxu0 %v699
          %712 = vmatpush1.bf16.msra.mxu0 %v696
          %713 = vmatprep.subr.bf16.mxu0 0
          %714 = vmatpush1.bf16.msra.mxu0 0
          %715 = vmatprep.subr.bf16.mxu0 0
          %716 = vmatpush1.bf16.msra.mxu0 0
          %717 = vmatprep.subr.bf16.mxu0 0
          %718 = vmatpush1.bf16.msra.mxu0 0
          %719 = vmatprep.subr.bf16.mxu0 0
          %720 = vmatpush1.bf16.msra.mxu0 0
          %721 = vmatprep.subr.bf16.mxu0 0
          %722 = vmatpush1.bf16.msra.mxu0 0
          %723 = vmatprep.subr.bf16.mxu0 0
          %724 = vmatpush1.bf16.msra.mxu0 0
          %725 = vmatprep.subr.bf16.mxu0 0
          %726 = vmatpush1.bf16.msra.mxu0 0
          %727 = vmatprep.subr.bf16.mxu0 0
          %728 = vmatpush1.bf16.msra.mxu0 0
          %729 = vmatprep.subr.bf16.mxu0 0
          %730 = vmatpush1.bf16.msra.mxu0 0
          %731 = vmatprep.subr.bf16.mxu0 0
          %732 = vmatpush1.bf16.msra.mxu0 0
          %733 = vmatprep.subr.bf16.mxu0 0
          %734 = vmatpush1.bf16.msra.mxu0 0
          %735 = vmatprep.subr.bf16.mxu0 0
          %736 = vmatpush1.bf16.msra.mxu0 0
          %737 = vmatprep.subr.bf16.mxu0 0
          %738 = vmatpush1.bf16.msra.mxu0 0
          %739 = vmatprep.mubr.bf16.mxu0 0
          %740 = vmatmul.mubr.bf16.gmra.mrb[0].mxu0 %v692
          %v741 = vpop.f32.mrb[0].mxu0
          %v742 = vadd.f32 %v638, %v741
          %v743 = vpop.f32.mrb[0].mxu0
          %v744 = vadd.f32 %v638, %v743
          %v745 = vpop.f32.mrb[0].mxu0
          %v746 = vpop.f32.mrb[0].mxu0
          %747 = vdwg.mxu0
          %748 = vmatprep.subr.bf16.mxu0 %v673
          %749 = vmatpush1.bf16.msra.mxu0 %v672
          %750 = vmatprep.subr.bf16.mxu0 %v677
          %751 = vmatpush1.bf16.msra.mxu0 %v676
          %752 = vmatprep.subr.bf16.mxu0 %v705
          %753 = vmatpush1.bf16.msra.mxu0 %v702
          %754 = vmatprep.subr.bf16.mxu0 0
          %755 = vmatpush1.bf16.msra.mxu0 0
          %756 = vmatprep.subr.bf16.mxu0 0
          %757 = vmatpush1.bf16.msra.mxu0 0
          %758 = vmatprep.subr.bf16.mxu0 0
          %759 = vmatpush1.bf16.msra.mxu0 0
          %760 = vmatprep.subr.bf16.mxu0 0
          %761 = vmatpush1.bf16.msra.mxu0 0
          %762 = vmatprep.subr.bf16.mxu0 0
          %763 = vmatpush1.bf16.msra.mxu0 0
          %764 = vmatprep.subr.bf16.mxu0 0
          %765 = vmatpush1.bf16.msra.mxu0 0
          %766 = vmatprep.subr.bf16.mxu0 0
          %767 = vmatpush1.bf16.msra.mxu0 0
          %768 = vmatprep.subr.bf16.mxu0 0
          %769 = vmatpush1.bf16.msra.mxu0 0
          %770 = vmatprep.subr.bf16.mxu0 0
          %771 = vmatpush1.bf16.msra.mxu0 0
          %772 = vmatprep.subr.bf16.mxu0 0
          %773 = vmatpush1.bf16.msra.mxu0 0
          %774 = vmatprep.subr.bf16.mxu0 0
          %775 = vmatpush1.bf16.msra.mxu0 0
          %776 = vmatprep.subr.bf16.mxu0 0
          %777 = vmatpush1.bf16.msra.mxu0 0
          %778 = vmatprep.subr.bf16.mxu0 0
          %779 = vmatpush1.bf16.msra.mxu0 0
          %780 = vmatprep.mubr.bf16.mxu0 0
          %781 = vmatmul.mubr.bf16.gmra.mrb[0].mxu0 %v692
          %v782 = vpop.f32.mrb[0].mxu0
          %v783 = vadd.f32 %v638, %v782
          %v784 = vpop.f32.mrb[0].mxu0
          %v785 = vadd.f32 %v638, %v784
          %v786 = vpop.f32.mrb[0].mxu0
          %v787 = vpop.f32.mrb[0].mxu0
          %788 = vdwg.mxu0
          %v789 = vmax.f32 %v742, 0.0
          %v790 = vmax.f32 %v744, 0.0
          %v791 = vmax.f32 %v783, 0.0
          %v792 = vmax.f32 %v785, 0.0
          %v793 = vcombine.high %v789, 0.0
          %v795 = vunpack.c.l.s4 1983009808
          %v796 = vunpack.c.0.s8 %v795
          %v797 = vlaneseq
          %v798 = vshrl.u32 %v797, 7
          %v799 = vsub.s32 %v796, %v798
          %v800 = vrot.slane %v789, %v799
          %v802 = vunpack.c.l.s4 1983009808
          %v803 = vunpack.c.0.s8 %v802
          %v804 = vlaneseq
          %v805 = vshrl.u32 %v804, 7
          %v806 = vsub.s32 %v803, %v805
          %v807 = vrot.slane %v793, %v806
          %v808 = vcombine.high %v791, 0.0
          %v810 = vunpack.c.l.s4 1983009808
          %v811 = vunpack.c.0.s8 %v810
          %v812 = vlaneseq
          %v813 = vshrl.u32 %v812, 7
          %v814 = vsub.s32 %v811, %v813
          %v815 = vrot.slane %v791, %v814
          %v817 = vunpack.c.l.s4 1983009808
          %v818 = vunpack.c.0.s8 %v817
          %v819 = vlaneseq
          %v820 = vshrl.u32 %v819, 7
          %v821 = vsub.s32 %v818, %v820
          %v822 = vrot.slane %v808, %v821
          %v823 = vcombine.low %v800, %v815
          %v824 = vcombine.high %v800, %v815
          %v826 = vunpack.c.l.s4 1934713408
          %v827 = vunpack.c.0.s8 %v826
          %v828 = vlaneseq
          %v829 = vshrl.u32 %v828, 7
          %v830 = vsub.s32 %v827, %v829
          %v831 = vrot.slane %v823, %v830
          %v833 = vunpack.c.l.s4 1934713408
          %v834 = vunpack.c.0.s8 %v833
          %v835 = vlaneseq
          %v836 = vshrl.u32 %v835, 7
          %v837 = vsub.s32 %v834, %v836
          %v838 = vrot.slane %v824, %v837
          %v839 = vcombine.low %v807, %v822
          %v840 = vcombine.high %v807, %v822
          %v842 = vunpack.c.l.s4 1934713408
          %v843 = vunpack.c.0.s8 %v842
          %v844 = vlaneseq
          %v845 = vshrl.u32 %v844, 7
          %v846 = vsub.s32 %v843, %v845
          %v847 = vrot.slane %v839, %v846
          %v849 = vunpack.c.l.s4 1934713408
          %v850 = vunpack.c.0.s8 %v849
          %v851 = vlaneseq
          %v852 = vshrl.u32 %v851, 7
          %v853 = vsub.s32 %v850, %v852
          %v854 = vrot.slane %v840, %v853
          %v855 = vcombine.high %v831, 0.0
          %v856 = vcombine.high %v838, 0.0
          %v857 = vcombine.high %v847, 0.0
          %v858 = vcombine.high %v854, 0.0
          %v859 = vcombine.high %v790, 0.0
          %v861 = vunpack.c.l.s4 1983009808
          %v862 = vunpack.c.0.s8 %v861
          %v863 = vlaneseq
          %v864 = vshrl.u32 %v863, 7
          %v865 = vsub.s32 %v862, %v864
          %v866 = vrot.slane %v790, %v865
          %v868 = vunpack.c.l.s4 1983009808
          %v869 = vunpack.c.0.s8 %v868
          %v870 = vlaneseq
          %v871 = vshrl.u32 %v870, 7
          %v872 = vsub.s32 %v869, %v871
          %v873 = vrot.slane %v859, %v872
          %v874 = vcombine.high %v792, 0.0
          %v876 = vunpack.c.l.s4 1983009808
          %v877 = vunpack.c.0.s8 %v876
          %v878 = vlaneseq
          %v879 = vshrl.u32 %v878, 7
          %v880 = vsub.s32 %v877, %v879
          %v881 = vrot.slane %v792, %v880
          %v883 = vunpack.c.l.s4 1983009808
          %v884 = vunpack.c.0.s8 %v883
          %v885 = vlaneseq
          %v886 = vshrl.u32 %v885, 7
          %v887 = vsub.s32 %v884, %v886
          %v888 = vrot.slane %v874, %v887
          %v889 = vcombine.low %v866, %v881
          %v890 = vcombine.high %v866, %v881
          %v892 = vunpack.c.l.s4 1934713408
          %v893 = vunpack.c.0.s8 %v892
          %v894 = vlaneseq
          %v895 = vshrl.u32 %v894, 7
          %v896 = vsub.s32 %v893, %v895
          %v897 = vrot.slane %v889, %v896
          %v899 = vunpack.c.l.s4 1934713408
          %v900 = vunpack.c.0.s8 %v899
          %v901 = vlaneseq
          %v902 = vshrl.u32 %v901, 7
          %v903 = vsub.s32 %v900, %v902
          %v904 = vrot.slane %v890, %v903
          %v905 = vcombine.low %v873, %v888
          %v906 = vcombine.high %v873, %v888
          %v908 = vunpack.c.l.s4 1934713408
          %v909 = vunpack.c.0.s8 %v908
          %v910 = vlaneseq
          %v911 = vshrl.u32 %v910, 7
          %v912 = vsub.s32 %v909, %v911
          %v913 = vrot.slane %v905, %v912
          %v915 = vunpack.c.l.s4 1934713408
          %v916 = vunpack.c.0.s8 %v915
          %v917 = vlaneseq
          %v918 = vshrl.u32 %v917, 7
          %v919 = vsub.s32 %v916, %v918
          %v920 = vrot.slane %v906, %v919
          %v921 = vcombine.high %v897, 0.0
          %v922 = vcombine.high %v904, 0.0
          %v923 = vcombine.high %v913, 0.0
          %v924 = vcombine.high %v920, 0.0
          %v925 = vpack.c.bf16 %v831, %v831
          %v926 = vpack.c.bf16 %v897, %v897
          %v927 = vpack.c.bf16 %v855, %v855
          %v928 = vpack.c.bf16 %v921, %v921
          %v929 = vpack.c.bf16 %v838, %v838
          %v930 = vpack.c.bf16 %v904, %v904
          %v931 = vpack.c.bf16 %v856, %v856
          %v932 = vpack.c.bf16 %v922, %v922
          %v933 = vpack.c.bf16 %v847, %v847
          %v934 = vpack.c.bf16 %v913, %v913
          %v935 = vpack.c.bf16 %v857, %v857
          %v936 = vpack.c.bf16 %v923, %v923
          %v937 = vpack.c.bf16 %v854, %v854
          %v938 = vpack.c.bf16 %v920, %v920
          %v939 = vpack.c.bf16 %v858, %v858
          %v940 = vpack.c.bf16 %v924, %v924
          %v957 = vcombine.low %v925, %v926
          %v959 = vunpack.c.l.s4 1966171168
          %v960 = vunpack.c.0.s8 %v959
          %v961 = vlaneseq
          %v962 = vshrl.u32 %v961, 7
          %v963 = vsub.s32 %v960, %v962
          %v964 = vrot.slane %v957, %v963
          %v966 = vunpack.c.l.s4 1966171168
          %v967 = vunpack.c.0.s8 %v966
          %v968 = vlaneseq
          %v969 = vshrl.u32 %v968, 7
          %v970 = vsub.s32 %v967, %v969
          %v971 = vrot.slane %v964, %v970
          %v972 = vcombine.low %v927, %v928
          %v974 = vunpack.c.l.s4 1966171168
          %v975 = vunpack.c.0.s8 %v974
          %v976 = vlaneseq
          %v977 = vshrl.u32 %v976, 7
          %v978 = vsub.s32 %v975, %v977
          %v979 = vrot.slane %v972, %v978
          %v981 = vunpack.c.l.s4 1966171168
          %v982 = vunpack.c.0.s8 %v981
          %v983 = vlaneseq
          %v984 = vshrl.u32 %v983, 7
          %v985 = vsub.s32 %v982, %v984
          %v986 = vrot.slane %v979, %v985
          %v987 = vcombine.low %v929, %v930
          %v989 = vunpack.c.l.s4 1966171168
          %v990 = vunpack.c.0.s8 %v989
          %v991 = vlaneseq
          %v992 = vshrl.u32 %v991, 7
          %v993 = vsub.s32 %v990, %v992
          %v994 = vrot.slane %v987, %v993
          %v996 = vunpack.c.l.s4 1966171168
          %v997 = vunpack.c.0.s8 %v996
          %v998 = vlaneseq
          %v999 = vshrl.u32 %v998, 7
          %v1000 = vsub.s32 %v997, %v999
          %v1001 = vrot.slane %v994, %v1000
          %v1002 = vcombine.low %v931, %v932
          %v1004 = vunpack.c.l.s4 1966171168
          %v1005 = vunpack.c.0.s8 %v1004
          %v1006 = vlaneseq
          %v1007 = vshrl.u32 %v1006, 7
          %v1008 = vsub.s32 %v1005, %v1007
          %v1009 = vrot.slane %v1002, %v1008
          %v1011 = vunpack.c.l.s4 1966171168
          %v1012 = vunpack.c.0.s8 %v1011
          %v1013 = vlaneseq
          %v1014 = vshrl.u32 %v1013, 7
          %v1015 = vsub.s32 %v1012, %v1014
          %v1016 = vrot.slane %v1009, %v1015
          %v1017 = vcombine.low %v933, %v934
          %v1019 = vunpack.c.l.s4 1966171168
          %v1020 = vunpack.c.0.s8 %v1019
          %v1021 = vlaneseq
          %v1022 = vshrl.u32 %v1021, 7
          %v1023 = vsub.s32 %v1020, %v1022
          %v1024 = vrot.slane %v1017, %v1023
          %v1026 = vunpack.c.l.s4 1966171168
          %v1027 = vunpack.c.0.s8 %v1026
          %v1028 = vlaneseq
          %v1029 = vshrl.u32 %v1028, 7
          %v1030 = vsub.s32 %v1027, %v1029
          %v1031 = vrot.slane %v1024, %v1030
          %v1032 = vcombine.low %v935, %v936
          %v1034 = vunpack.c.l.s4 1966171168
          %v1035 = vunpack.c.0.s8 %v1034
          %v1036 = vlaneseq
          %v1037 = vshrl.u32 %v1036, 7
          %v1038 = vsub.s32 %v1035, %v1037
          %v1039 = vrot.slane %v1032, %v1038
          %v1041 = vunpack.c.l.s4 1966171168
          %v1042 = vunpack.c.0.s8 %v1041
          %v1043 = vlaneseq
          %v1044 = vshrl.u32 %v1043, 7
          %v1045 = vsub.s32 %v1042, %v1044
          %v1046 = vrot.slane %v1039, %v1045
          %v1047 = vcombine.low %v937, %v938
          %v1049 = vunpack.c.l.s4 1966171168
          %v1050 = vunpack.c.0.s8 %v1049
          %v1051 = vlaneseq
          %v1052 = vshrl.u32 %v1051, 7
          %v1053 = vsub.s32 %v1050, %v1052
          %v1054 = vrot.slane %v1047, %v1053
          %v1056 = vunpack.c.l.s4 1966171168
          %v1057 = vunpack.c.0.s8 %v1056
          %v1058 = vlaneseq
          %v1059 = vshrl.u32 %v1058, 7
          %v1060 = vsub.s32 %v1057, %v1059
          %v1061 = vrot.slane %v1054, %v1060
          %v1062 = vcombine.low %v939, %v940
          %v1064 = vunpack.c.l.s4 1966171168
          %v1065 = vunpack.c.0.s8 %v1064
          %v1066 = vlaneseq
          %v1067 = vshrl.u32 %v1066, 7
          %v1068 = vsub.s32 %v1065, %v1067
          %v1069 = vrot.slane %v1062, %v1068
          %v1071 = vunpack.c.l.s4 1966171168
          %v1072 = vunpack.c.0.s8 %v1071
          %v1073 = vlaneseq
          %v1074 = vshrl.u32 %v1073, 7
          %v1075 = vsub.s32 %v1072, %v1074
          %v1076 = vrot.slane %v1069, %v1075
          %1085 = vst [vmem:[#allocation2] sm:$0x3] %v971
          %1086 = vst [vmem:[#allocation2 + $0x2] sm:$0x3] %v986
          %1087 = vst [vmem:[#allocation2 + $0x4] sm:$0x3] %v1001
          %1088 = vst [vmem:[#allocation2 + $0x6] sm:$0x3] %v1016
          %1089 = vst [vmem:[#allocation2 + $0x8] sm:$0x3] %v1031
          %1090 = vst [vmem:[#allocation2 + $0xa] sm:$0x3] %v1046
          %1091 = vst [vmem:[#allocation2 + $0xc] sm:$0x3] %v1061
          %1092 = vst [vmem:[#allocation2 + $0xe] sm:$0x3] %v1076
        $region104: #{net_a4_forward.1} parent=63 // pred_fallthru
          _
        %s1093 = smul.u32 %s37, 4
        %v1094 = vld [vmem:[#allocation3] sm:$0xff]
        %s1095 = smul.u32 %s1093, 2
        %s1096 = scalar_lea.vmem [#allocation2], %s1095
        %v1097 = vld [vmem:[%s1096] sm:$0x3]
        %v1098 = vld [vmem:[%s505] sm:$0xff]
        %v1099 = vld [vmem:[%s505 + $0x8] sm:$0xff]
        %v1100 = vld [vmem:[%s505 + $0x10] sm:$0xff]
        %v1101 = vld [vmem:[%s505 + $0x18] sm:$0xff]
        %v1102 = vld [vmem:[%s505 + $0x20] sm:$0xff]
        %v1103 = vld [vmem:[%s505 + $0x28] sm:$0xff]
        %v1104 = vld [vmem:[%s505 + $0x30] sm:$0xff]
        %v1105 = vld [vmem:[%s505 + $0x38] sm:$0xff]
        %v1106 = vld [vmem:[%s505 + $0x40] sm:$0xff]
        %v1107 = vld [vmem:[%s505 + $0x48] sm:$0xff]
        %v1108 = vld [vmem:[%s505 + $0x50] sm:$0xff]
        %v1109 = vld [vmem:[%s505 + $0x58] sm:$0xff]
        %v1110 = vld [vmem:[%s505 + $0x60] sm:$0xff]
        %v1111 = vld [vmem:[%s505 + $0x68] sm:$0xff]
        %v1112 = vld [vmem:[%s505 + $0x70] sm:$0xff]
        %v1113 = vld [vmem:[%s505 + $0x78] sm:$0xff]
        %v1114 = vld [vmem:[%s505 + $0x80] sm:$0xff]
        %v1115 = vld [vmem:[%s505 + $0x88] sm:$0xff]
        %v1116 = vld [vmem:[%s505 + $0x90] sm:$0xff]
        %v1117 = vld [vmem:[%s505 + $0x98] sm:$0xff]
        %v1118 = vld [vmem:[%s505 + $0xa0] sm:$0xff]
        %v1119 = vld [vmem:[%s505 + $0xa8] sm:$0xff]
        %v1120 = vld [vmem:[%s505 + $0xb0] sm:$0xff]
        %v1121 = vld [vmem:[%s505 + $0xb8] sm:$0xff]
        %v1122 = vld [vmem:[%s505 + $0xc0] sm:$0xff]
        %v1123 = vld [vmem:[%s505 + $0xc8] sm:$0xff]
        %v1124 = vld [vmem:[%s505 + $0xd0] sm:$0xff]
        %v1125 = vld [vmem:[%s505 + $0xd8] sm:$0xff]
        %v1126 = vld [vmem:[%s505 + $0xe0] sm:$0xff]
        %v1127 = vld [vmem:[%s505 + $0xe8] sm:$0xff]
        %v1128 = vld [vmem:[%s505 + $0xf0] sm:$0xff]
        %v1129 = vld [vmem:[%s505 + $0xf8] sm:$0xff]
        %v1130 = vld [vmem:[%s505 + $0x100] sm:$0xff]
        %v1131 = vld [vmem:[%s505 + $0x108] sm:$0xff]
        %v1132 = vld [vmem:[%s505 + $0x110] sm:$0xff]
        %v1133 = vld [vmem:[%s505 + $0x118] sm:$0xff]
        %v1134 = vld [vmem:[%s505 + $0x120] sm:$0xff]
        %v1135 = vld [vmem:[%s505 + $0x128] sm:$0xff]
        %v1136 = vld [vmem:[%s505 + $0x130] sm:$0xff]
        %v1137 = vld [vmem:[%s505 + $0x138] sm:$0xff]
        %v1138 = vld [vmem:[%s505 + $0x140] sm:$0xff]
        %v1139 = vld [vmem:[%s505 + $0x148] sm:$0xff]
        %v1140 = vld [vmem:[%s505 + $0x150] sm:$0xff]
        %v1141 = vld [vmem:[%s505 + $0x158] sm:$0xff]
        %v1142 = vld [vmem:[%s505 + $0x160] sm:$0xff]
        %v1143 = vld [vmem:[%s505 + $0x168] sm:$0xff]
        %v1144 = vld [vmem:[%s505 + $0x170] sm:$0xff]
        %v1145 = vld [vmem:[%s505 + $0x178] sm:$0xff]
        %v1146 = vld [vmem:[%s505 + $0x180] sm:$0xff]
        %v1147 = vld [vmem:[%s505 + $0x188] sm:$0xff]
        %v1148 = vld [vmem:[%s505 + $0x190] sm:$0xff]
        %v1149 = vld [vmem:[%s505 + $0x198] sm:$0xff]
        %v1150 = vld [vmem:[%s505 + $0x1a0] sm:$0xff]
        %v1151 = vld [vmem:[%s505 + $0x1a8] sm:$0xff]
        %v1152 = vld [vmem:[%s505 + $0x1b0] sm:$0xff]
        %v1153 = vld [vmem:[%s505 + $0x1b8] sm:$0xff]
        %v1154 = vld [vmem:[%s505 + $0x1c0] sm:$0xff]
        %v1155 = vld [vmem:[%s505 + $0x1c8] sm:$0xff]
        %v1156 = vld [vmem:[%s505 + $0x1d0] sm:$0xff]
        %v1157 = vld [vmem:[%s505 + $0x1d8] sm:$0xff]
        %v1158 = vld [vmem:[%s505 + $0x1e0] sm:$0xff]
        %v1159 = vld [vmem:[%s505 + $0x1e8] sm:$0xff]
        %v1160 = vld [vmem:[%s505 + $0x1f0] sm:$0xff]
        %v1161 = vld [vmem:[%s505 + $0x1f8] sm:$0xff]
        %v1164 = vunpack.c.l.s4 1966171168
        %v1165 = vunpack.c.0.s8 %v1164
        %v1166 = vlaneseq
        %v1167 = vshrl.u32 %v1166, 7
        %v1168 = vsub.s32 %v1165, %v1167
        %v1169 = vrot.slane %v1097, %v1168
        %v1170 = vcombine.high %v1169, %v1169
        %v1172 = vunpack.c.l.s4 1966171168
        %v1173 = vunpack.c.0.s8 %v1172
        %v1174 = vlaneseq
        %v1175 = vshrl.u32 %v1174, 7
        %v1176 = vsub.s32 %v1173, %v1175
        %v1177 = vrot.slane %v1169, %v1176
        %v1179 = vunpack.c.l.s4 1966171168
        %v1180 = vunpack.c.0.s8 %v1179
        %v1181 = vlaneseq
        %v1182 = vshrl.u32 %v1181, 7
        %v1183 = vsub.s32 %v1180, %v1182
        %v1184 = vrot.slane %v1170, %v1183
        %v1251 = vunpack.c.l.b16 %v1098
        %v1252 = vunpack.c.h.b16 %v1098
        %v1253 = vunpack.c.l.b16 %v1099
        %v1254 = vunpack.c.h.b16 %v1099
        %v1255 = vunpack.c.l.b16 %v1100
        %v1256 = vunpack.c.h.b16 %v1100
        %v1257 = vunpack.c.l.b16 %v1101
        %v1258 = vunpack.c.h.b16 %v1101
        %v1259 = vunpack.c.l.b16 %v1102
        %v1260 = vunpack.c.h.b16 %v1102
        %v1261 = vunpack.c.l.b16 %v1103
        %v1262 = vunpack.c.h.b16 %v1103
        %v1263 = vunpack.c.l.b16 %v1104
        %v1264 = vunpack.c.h.b16 %v1104
        %v1265 = vunpack.c.l.b16 %v1105
        %v1266 = vunpack.c.h.b16 %v1105
        %v1267 = vunpack.c.l.b16 %v1106
        %v1268 = vunpack.c.h.b16 %v1106
        %v1269 = vunpack.c.l.b16 %v1107
        %v1270 = vunpack.c.h.b16 %v1107
        %v1271 = vunpack.c.l.b16 %v1108
        %v1272 = vunpack.c.h.b16 %v1108
        %v1273 = vunpack.c.l.b16 %v1109
        %v1274 = vunpack.c.h.b16 %v1109
        %v1275 = vunpack.c.l.b16 %v1110
        %v1276 = vunpack.c.h.b16 %v1110
        %v1277 = vunpack.c.l.b16 %v1111
        %v1278 = vunpack.c.h.b16 %v1111
        %v1279 = vunpack.c.l.b16 %v1112
        %v1280 = vunpack.c.h.b16 %v1112
        %v1281 = vunpack.c.l.b16 %v1113
        %v1282 = vunpack.c.h.b16 %v1113
        %v1283 = vunpack.c.l.b16 %v1114
        %v1284 = vunpack.c.h.b16 %v1114
        %v1285 = vunpack.c.l.b16 %v1115
        %v1286 = vunpack.c.h.b16 %v1115
        %v1287 = vunpack.c.l.b16 %v1116
        %v1288 = vunpack.c.h.b16 %v1116
        %v1289 = vunpack.c.l.b16 %v1117
        %v1290 = vunpack.c.h.b16 %v1117
        %v1291 = vunpack.c.l.b16 %v1118
        %v1292 = vunpack.c.h.b16 %v1118
        %v1293 = vunpack.c.l.b16 %v1119
        %v1294 = vunpack.c.h.b16 %v1119
        %v1295 = vunpack.c.l.b16 %v1120
        %v1296 = vunpack.c.h.b16 %v1120
        %v1297 = vunpack.c.l.b16 %v1121
        %v1298 = vunpack.c.h.b16 %v1121
        %v1299 = vunpack.c.l.b16 %v1122
        %v1300 = vunpack.c.h.b16 %v1122
        %v1301 = vunpack.c.l.b16 %v1123
        %v1302 = vunpack.c.h.b16 %v1123
        %v1303 = vunpack.c.l.b16 %v1124
        %v1304 = vunpack.c.h.b16 %v1124
        %v1305 = vunpack.c.l.b16 %v1125
        %v1306 = vunpack.c.h.b16 %v1125
        %v1307 = vunpack.c.l.b16 %v1126
        %v1308 = vunpack.c.h.b16 %v1126
        %v1309 = vunpack.c.l.b16 %v1127
        %v1310 = vunpack.c.h.b16 %v1127
        %v1311 = vunpack.c.l.b16 %v1128
        %v1312 = vunpack.c.h.b16 %v1128
        %v1313 = vunpack.c.l.b16 %v1129
        %v1314 = vunpack.c.h.b16 %v1129
        %v1315 = vunpack.c.l.b16 %v1130
        %v1316 = vunpack.c.h.b16 %v1130
        %v1317 = vunpack.c.l.b16 %v1131
        %v1318 = vunpack.c.h.b16 %v1131
        %v1319 = vunpack.c.l.b16 %v1132
        %v1320 = vunpack.c.h.b16 %v1132
        %v1321 = vunpack.c.l.b16 %v1133
        %v1322 = vunpack.c.h.b16 %v1133
        %v1323 = vunpack.c.l.b16 %v1134
        %v1324 = vunpack.c.h.b16 %v1134
        %v1325 = vunpack.c.l.b16 %v1135
        %v1326 = vunpack.c.h.b16 %v1135
        %v1327 = vunpack.c.l.b16 %v1136
        %v1328 = vunpack.c.h.b16 %v1136
        %v1329 = vunpack.c.l.b16 %v1137
        %v1330 = vunpack.c.h.b16 %v1137
        %v1331 = vunpack.c.l.b16 %v1138
        %v1332 = vunpack.c.h.b16 %v1138
        %v1333 = vunpack.c.l.b16 %v1139
        %v1334 = vunpack.c.h.b16 %v1139
        %v1335 = vunpack.c.l.b16 %v1140
        %v1336 = vunpack.c.h.b16 %v1140
        %v1337 = vunpack.c.l.b16 %v1141
        %v1338 = vunpack.c.h.b16 %v1141
        %v1339 = vunpack.c.l.b16 %v1142
        %v1340 = vunpack.c.h.b16 %v1142
        %v1341 = vunpack.c.l.b16 %v1143
        %v1342 = vunpack.c.h.b16 %v1143
        %v1343 = vunpack.c.l.b16 %v1144
        %v1344 = vunpack.c.h.b16 %v1144
        %v1345 = vunpack.c.l.b16 %v1145
        %v1346 = vunpack.c.h.b16 %v1145
        %v1347 = vunpack.c.l.b16 %v1146
        %v1348 = vunpack.c.h.b16 %v1146
        %v1349 = vunpack.c.l.b16 %v1147
        %v1350 = vunpack.c.h.b16 %v1147
        %v1351 = vunpack.c.l.b16 %v1148
        %v1352 = vunpack.c.h.b16 %v1148
        %v1353 = vunpack.c.l.b16 %v1149
        %v1354 = vunpack.c.h.b16 %v1149
        %v1355 = vunpack.c.l.b16 %v1150
        %v1356 = vunpack.c.h.b16 %v1150
        %v1357 = vunpack.c.l.b16 %v1151
        %v1358 = vunpack.c.h.b16 %v1151
        %v1359 = vunpack.c.l.b16 %v1152
        %v1360 = vunpack.c.h.b16 %v1152
        %v1361 = vunpack.c.l.b16 %v1153
        %v1362 = vunpack.c.h.b16 %v1153
        %v1363 = vunpack.c.l.b16 %v1154
        %v1364 = vunpack.c.h.b16 %v1154
        %v1365 = vunpack.c.l.b16 %v1155
        %v1366 = vunpack.c.h.b16 %v1155
        %v1367 = vunpack.c.l.b16 %v1156
        %v1368 = vunpack.c.h.b16 %v1156
        %v1369 = vunpack.c.l.b16 %v1157
        %v1370 = vunpack.c.h.b16 %v1157
        %v1371 = vunpack.c.l.b16 %v1158
        %v1372 = vunpack.c.h.b16 %v1158
        %v1373 = vunpack.c.l.b16 %v1159
        %v1374 = vunpack.c.h.b16 %v1159
        %v1375 = vunpack.c.l.b16 %v1160
        %v1376 = vunpack.c.h.b16 %v1160
        %v1377 = vunpack.c.l.b16 %v1161
        %v1378 = vunpack.c.h.b16 %v1161
        %v1379 = vpack.c.b16 %v1255, %v1251
        %v1380 = vpack.c.b16 %v1256, %v1252
        %v1381 = vpack.c.b16 %v1257, %v1253
        %v1382 = vpack.c.b16 %v1258, %v1254
        %v1383 = vpack.c.b16 %v1263, %v1259
        %v1384 = vpack.c.b16 %v1264, %v1260
        %v1385 = vpack.c.b16 %v1265, %v1261
        %v1386 = vpack.c.b16 %v1266, %v1262
        %v1387 = vpack.c.b16 %v1271, %v1267
        %v1388 = vpack.c.b16 %v1272, %v1268
        %v1389 = vpack.c.b16 %v1273, %v1269
        %v1390 = vpack.c.b16 %v1274, %v1270
        %v1391 = vpack.c.b16 %v1279, %v1275
        %v1392 = vpack.c.b16 %v1280, %v1276
        %v1393 = vpack.c.b16 %v1281, %v1277
        %v1394 = vpack.c.b16 %v1282, %v1278
        %v1395 = vpack.c.b16 %v1287, %v1283
        %v1396 = vpack.c.b16 %v1288, %v1284
        %v1397 = vpack.c.b16 %v1289, %v1285
        %v1398 = vpack.c.b16 %v1290, %v1286
        %v1399 = vpack.c.b16 %v1295, %v1291
        %v1400 = vpack.c.b16 %v1296, %v1292
        %v1401 = vpack.c.b16 %v1297, %v1293
        %v1402 = vpack.c.b16 %v1298, %v1294
        %v1403 = vpack.c.b16 %v1303, %v1299
        %v1404 = vpack.c.b16 %v1304, %v1300
        %v1405 = vpack.c.b16 %v1305, %v1301
        %v1406 = vpack.c.b16 %v1306, %v1302
        %v1407 = vpack.c.b16 %v1311, %v1307
        %v1408 = vpack.c.b16 %v1312, %v1308
        %v1409 = vpack.c.b16 %v1313, %v1309
        %v1410 = vpack.c.b16 %v1314, %v1310
        %v1411 = vpack.c.b16 %v1319, %v1315
        %v1412 = vpack.c.b16 %v1320, %v1316
        %v1413 = vpack.c.b16 %v1321, %v1317
        %v1414 = vpack.c.b16 %v1322, %v1318
        %v1415 = vpack.c.b16 %v1327, %v1323
        %v1416 = vpack.c.b16 %v1328, %v1324
        %v1417 = vpack.c.b16 %v1329, %v1325
        %v1418 = vpack.c.b16 %v1330, %v1326
        %v1419 = vpack.c.b16 %v1335, %v1331
        %v1420 = vpack.c.b16 %v1336, %v1332
        %v1421 = vpack.c.b16 %v1337, %v1333
        %v1422 = vpack.c.b16 %v1338, %v1334
        %v1423 = vpack.c.b16 %v1343, %v1339
        %v1424 = vpack.c.b16 %v1344, %v1340
        %v1425 = vpack.c.b16 %v1345, %v1341
        %v1426 = vpack.c.b16 %v1346, %v1342
        %v1427 = vpack.c.b16 %v1351, %v1347
        %v1428 = vpack.c.b16 %v1352, %v1348
        %v1429 = vpack.c.b16 %v1353, %v1349
        %v1430 = vpack.c.b16 %v1354, %v1350
        %v1431 = vpack.c.b16 %v1359, %v1355
        %v1432 = vpack.c.b16 %v1360, %v1356
        %v1433 = vpack.c.b16 %v1361, %v1357
        %v1434 = vpack.c.b16 %v1362, %v1358
        %v1435 = vpack.c.b16 %v1367, %v1363
        %v1436 = vpack.c.b16 %v1368, %v1364
        %v1437 = vpack.c.b16 %v1369, %v1365
        %v1438 = vpack.c.b16 %v1370, %v1366
        %v1439 = vpack.c.b16 %v1375, %v1371
        %v1440 = vpack.c.b16 %v1376, %v1372
        %v1441 = vpack.c.b16 %v1377, %v1373
        %v1442 = vpack.c.b16 %v1378, %v1374
        %1507 = vmatprep.subr.bf16.mxu0 %v1380
        %1508 = vmatpush1.bf16.msra.mxu0 %v1379
        %1509 = vmatprep.subr.bf16.mxu0 %v1384
        %1510 = vmatpush1.bf16.msra.mxu0 %v1383
        %1511 = vmatprep.subr.bf16.mxu0 %v1388
        %1512 = vmatpush1.bf16.msra.mxu0 %v1387
        %1513 = vmatprep.subr.bf16.mxu0 %v1392
        %1514 = vmatpush1.bf16.msra.mxu0 %v1391
        %1515 = vmatprep.subr.bf16.mxu0 %v1396
        %1516 = vmatpush1.bf16.msra.mxu0 %v1395
        %1517 = vmatprep.subr.bf16.mxu0 %v1400
        %1518 = vmatpush1.bf16.msra.mxu0 %v1399
        %1519 = vmatprep.subr.bf16.mxu0 %v1404
        %1520 = vmatpush1.bf16.msra.mxu0 %v1403
        %1521 = vmatprep.subr.bf16.mxu0 %v1408
        %1522 = vmatpush1.bf16.msra.mxu0 %v1407
        %1523 = vmatprep.subr.bf16.mxu0 %v1412
        %1524 = vmatpush1.bf16.msra.mxu0 %v1411
        %1525 = vmatprep.subr.bf16.mxu0 %v1416
        %1526 = vmatpush1.bf16.msra.mxu0 %v1415
        %1527 = vmatprep.subr.bf16.mxu0 %v1420
        %1528 = vmatpush1.bf16.msra.mxu0 %v1419
        %1529 = vmatprep.subr.bf16.mxu0 %v1424
        %1530 = vmatpush1.bf16.msra.mxu0 %v1423
        %1531 = vmatprep.subr.bf16.mxu0 %v1428
        %1532 = vmatpush1.bf16.msra.mxu0 %v1427
        %1533 = vmatprep.subr.bf16.mxu0 %v1432
        %1534 = vmatpush1.bf16.msra.mxu0 %v1431
        %1535 = vmatprep.subr.bf16.mxu0 %v1436
        %1536 = vmatpush1.bf16.msra.mxu0 %v1435
        %1537 = vmatprep.subr.bf16.mxu0 %v1440
        %1538 = vmatpush1.bf16.msra.mxu0 %v1439
        %1539 = vmatprep.mubr.bf16.mxu0 %v1184
        %1540 = vmatmul.mubr.bf16.gmra.mrb[0].mxu0 %v1177
        %v1541 = vpop.f32.mrb[0].mxu0
        %v1542 = vadd.f32 0.0, %v1541
        %v1543 = vpop.f32.mrb[0].mxu0
        %v1544 = vadd.f32 0.0, %v1543
        %v1545 = vpop.f32.mrb[0].mxu0
        %v1546 = vpop.f32.mrb[0].mxu0
        %1547 = vdwg.mxu0
        %1548 = vmatprep.subr.bf16.mxu0 %v1382
        %1549 = vmatpush1.bf16.msra.mxu0 %v1381
        %1550 = vmatprep.subr.bf16.mxu0 %v1386
        %1551 = vmatpush1.bf16.msra.mxu0 %v1385
        %1552 = vmatprep.subr.bf16.mxu0 %v1390
        %1553 = vmatpush1.bf16.msra.mxu0 %v1389
        %1554 = vmatprep.subr.bf16.mxu0 %v1394
        %1555 = vmatpush1.bf16.msra.mxu0 %v1393
        %1556 = vmatprep.subr.bf16.mxu0 %v1398
        %1557 = vmatpush1.bf16.msra.mxu0 %v1397
        %1558 = vmatprep.subr.bf16.mxu0 %v1402
        %1559 = vmatpush1.bf16.msra.mxu0 %v1401
        %1560 = vmatprep.subr.bf16.mxu0 %v1406
        %1561 = vmatpush1.bf16.msra.mxu0 %v1405
        %1562 = vmatprep.subr.bf16.mxu0 %v1410
        %1563 = vmatpush1.bf16.msra.mxu0 %v1409
        %1564 = vmatprep.subr.bf16.mxu0 %v1414
        %1565 = vmatpush1.bf16.msra.mxu0 %v1413
        %1566 = vmatprep.subr.bf16.mxu0 %v1418
        %1567 = vmatpush1.bf16.msra.mxu0 %v1417
        %1568 = vmatprep.subr.bf16.mxu0 %v1422
        %1569 = vmatpush1.bf16.msra.mxu0 %v1421
        %1570 = vmatprep.subr.bf16.mxu0 %v1426
        %1571 = vmatpush1.bf16.msra.mxu0 %v1425
        %1572 = vmatprep.subr.bf16.mxu0 %v1430
        %1573 = vmatpush1.bf16.msra.mxu0 %v1429
        %1574 = vmatprep.subr.bf16.mxu0 %v1434
        %1575 = vmatpush1.bf16.msra.mxu0 %v1433
        %1576 = vmatprep.subr.bf16.mxu0 %v1438
        %1577 = vmatpush1.bf16.msra.mxu0 %v1437
        %1578 = vmatprep.subr.bf16.mxu0 %v1442
        %1579 = vmatpush1.bf16.msra.mxu0 %v1441
        %1580 = vmatprep.mubr.bf16.mxu0 %v1184
        %1581 = vmatmul.mubr.bf16.gmra.mrb[0].mxu0 %v1177
        %v1582 = vpop.f32.mrb[0].mxu0
        %v1583 = vadd.f32 0.0, %v1582
        %v1584 = vpop.f32.mrb[0].mxu0
        %v1585 = vadd.f32 0.0, %v1584
        %v1586 = vpop.f32.mrb[0].mxu0
        %v1587 = vpop.f32.mrb[0].mxu0
        %1588 = vdwg.mxu0
        %v1593 = vcombine.low %v1542, %v1544
        %v1594 = vcombine.low %v1583, %v1585
        %v1596 = vunpack.c.l.s4 1983009808
        %v1597 = vunpack.c.0.s8 %v1596
        %v1598 = vlaneseq
        %v1599 = vshrl.u32 %v1598, 7
        %v1600 = vsub.s32 %v1597, %v1599
        %v1601 = vrot.slane %v1593, %v1600
        %v1603 = vunpack.c.l.s4 1983009808
        %v1604 = vunpack.c.0.s8 %v1603
        %v1605 = vlaneseq
        %v1606 = vshrl.u32 %v1605, 7
        %v1607 = vsub.s32 %v1604, %v1606
        %v1608 = vrot.slane %v1594, %v1607
        %v1609 = vcombine.low %v1601, %v1608
        %v1611 = vadd.f32 %v1094, %v1609
        %s1612 = sadd.s32 %s1093, 1
        %s1613 = smul.u32 %s1612, 2
        %s1614 = scalar_lea.vmem [#allocation2], %s1613
        %v1615 = vld [vmem:[%s1614] sm:$0x3]
        %s1616 = scalar_lea.vmem %s505, 512 [#allocation8]
        %v1617 = vld [vmem:[%s1616] sm:$0xff]
        %v1618 = vld [vmem:[%s1616 + $0x8] sm:$0xff]
        %v1619 = vld [vmem:[%s1616 + $0x10] sm:$0xff]
        %v1620 = vld [vmem:[%s1616 + $0x18] sm:$0xff]
        %v1621 = vld [vmem:[%s1616 + $0x20] sm:$0xff]
        %v1622 = vld [vmem:[%s1616 + $0x28] sm:$0xff]
        %v1623 = vld [vmem:[%s1616 + $0x30] sm:$0xff]
        %v1624 = vld [vmem:[%s1616 + $0x38] sm:$0xff]
        %v1625 = vld [vmem:[%s1616 + $0x40] sm:$0xff]
        %v1626 = vld [vmem:[%s1616 + $0x48] sm:$0xff]
        %v1627 = vld [vmem:[%s1616 + $0x50] sm:$0xff]
        %v1628 = vld [vmem:[%s1616 + $0x58] sm:$0xff]
        %v1629 = vld [vmem:[%s1616 + $0x60] sm:$0xff]
        %v1630 = vld [vmem:[%s1616 + $0x68] sm:$0xff]
        %v1631 = vld [vmem:[%s1616 + $0x70] sm:$0xff]
        %v1632 = vld [vmem:[%s1616 + $0x78] sm:$0xff]
        %v1633 = vld [vmem:[%s1616 + $0x80] sm:$0xff]
        %v1634 = vld [vmem:[%s1616 + $0x88] sm:$0xff]
        %v1635 = vld [vmem:[%s1616 + $0x90] sm:$0xff]
        %v1636 = vld [vmem:[%s1616 + $0x98] sm:$0xff]
        %v1637 = vld [vmem:[%s1616 + $0xa0] sm:$0xff]
        %v1638 = vld [vmem:[%s1616 + $0xa8] sm:$0xff]
        %v1639 = vld [vmem:[%s1616 + $0xb0] sm:$0xff]
        %v1640 = vld [vmem:[%s1616 + $0xb8] sm:$0xff]
        %v1641 = vld [vmem:[%s1616 + $0xc0] sm:$0xff]
        %v1642 = vld [vmem:[%s1616 + $0xc8] sm:$0xff]
        %v1643 = vld [vmem:[%s1616 + $0xd0] sm:$0xff]
        %v1644 = vld [vmem:[%s1616 + $0xd8] sm:$0xff]
        %v1645 = vld [vmem:[%s1616 + $0xe0] sm:$0xff]
        %v1646 = vld [vmem:[%s1616 + $0xe8] sm:$0xff]
        %v1647 = vld [vmem:[%s1616 + $0xf0] sm:$0xff]
        %v1648 = vld [vmem:[%s1616 + $0xf8] sm:$0xff]
        %v1649 = vld [vmem:[%s1616 + $0x100] sm:$0xff]
        %v1650 = vld [vmem:[%s1616 + $0x108] sm:$0xff]
        %v1651 = vld [vmem:[%s1616 + $0x110] sm:$0xff]
        %v1652 = vld [vmem:[%s1616 + $0x118] sm:$0xff]
        %v1653 = vld [vmem:[%s1616 + $0x120] sm:$0xff]
        %v1654 = vld [vmem:[%s1616 + $0x128] sm:$0xff]
        %v1655 = vld [vmem:[%s1616 + $0x130] sm:$0xff]
        %v1656 = vld [vmem:[%s1616 + $0x138] sm:$0xff]
        %v1657 = vld [vmem:[%s1616 + $0x140] sm:$0xff]
        %v1658 = vld [vmem:[%s1616 + $0x148] sm:$0xff]
        %v1659 = vld [vmem:[%s1616 + $0x150] sm:$0xff]
        %v1660 = vld [vmem:[%s1616 + $0x158] sm:$0xff]
        %v1661 = vld [vmem:[%s1616 + $0x160] sm:$0xff]
        %v1662 = vld [vmem:[%s1616 + $0x168] sm:$0xff]
        %v1663 = vld [vmem:[%s1616 + $0x170] sm:$0xff]
        %v1664 = vld [vmem:[%s1616 + $0x178] sm:$0xff]
        %v1665 = vld [vmem:[%s1616 + $0x180] sm:$0xff]
        %v1666 = vld [vmem:[%s1616 + $0x188] sm:$0xff]
        %v1667 = vld [vmem:[%s1616 + $0x190] sm:$0xff]
        %v1668 = vld [vmem:[%s1616 + $0x198] sm:$0xff]
        %v1669 = vld [vmem:[%s1616 + $0x1a0] sm:$0xff]
        %v1670 = vld [vmem:[%s1616 + $0x1a8] sm:$0xff]
        %v1671 = vld [vmem:[%s1616 + $0x1b0] sm:$0xff]
        %v1672 = vld [vmem:[%s1616 + $0x1b8] sm:$0xff]
        %v1673 = vld [vmem:[%s1616 + $0x1c0] sm:$0xff]
        %v1674 = vld [vmem:[%s1616 + $0x1c8] sm:$0xff]
        %v1675 = vld [vmem:[%s1616 + $0x1d0] sm:$0xff]
        %v1676 = vld [vmem:[%s1616 + $0x1d8] sm:$0xff]
        %v1677 = vld [vmem:[%s1616 + $0x1e0] sm:$0xff]
        %v1678 = vld [vmem:[%s1616 + $0x1e8] sm:$0xff]
        %v1679 = vld [vmem:[%s1616 + $0x1f0] sm:$0xff]
        %v1680 = vld [vmem:[%s1616 + $0x1f8] sm:$0xff]
        %v1683 = vunpack.c.l.s4 1966171168
        %v1684 = vunpack.c.0.s8 %v1683
        %v1685 = vlaneseq
        %v1686 = vshrl.u32 %v1685, 7
        %v1687 = vsub.s32 %v1684, %v1686
        %v1688 = vrot.slane %v1615, %v1687
        %v1689 = vcombine.high %v1688, %v1688
        %v1691 = vunpack.c.l.s4 1966171168
        %v1692 = vunpack.c.0.s8 %v1691
        %v1693 = vlaneseq
        %v1694 = vshrl.u32 %v1693, 7
        %v1695 = vsub.s32 %v1692, %v1694
        %v1696 = vrot.slane %v1688, %v1695
        %v1698 = vunpack.c.l.s4 1966171168
        %v1699 = vunpack.c.0.s8 %v1698
        %v1700 = vlaneseq
        %v1701 = vshrl.u32 %v1700, 7
        %v1702 = vsub.s32 %v1699, %v1701
        %v1703 = vrot.slane %v1689, %v1702
        %v1770 = vunpack.c.l.b16 %v1617
        %v1771 = vunpack.c.h.b16 %v1617
        %v1772 = vunpack.c.l.b16 %v1618
        %v1773 = vunpack.c.h.b16 %v1618
        %v1774 = vunpack.c.l.b16 %v1619
        %v1775 = vunpack.c.h.b16 %v1619
        %v1776 = vunpack.c.l.b16 %v1620
        %v1777 = vunpack.c.h.b16 %v1620
        %v1778 = vunpack.c.l.b16 %v1621
        %v1779 = vunpack.c.h.b16 %v1621
        %v1780 = vunpack.c.l.b16 %v1622
        %v1781 = vunpack.c.h.b16 %v1622
        %v1782 = vunpack.c.l.b16 %v1623
        %v1783 = vunpack.c.h.b16 %v1623
        %v1784 = vunpack.c.l.b16 %v1624
        %v1785 = vunpack.c.h.b16 %v1624
        %v1786 = vunpack.c.l.b16 %v1625
        %v1787 = vunpack.c.h.b16 %v1625
        %v1788 = vunpack.c.l.b16 %v1626
        %v1789 = vunpack.c.h.b16 %v1626
        %v1790 = vunpack.c.l.b16 %v1627
        %v1791 = vunpack.c.h.b16 %v1627
        %v1792 = vunpack.c.l.b16 %v1628
        %v1793 = vunpack.c.h.b16 %v1628
        %v1794 = vunpack.c.l.b16 %v1629
        %v1795 = vunpack.c.h.b16 %v1629
        %v1796 = vunpack.c.l.b16 %v1630
        %v1797 = vunpack.c.h.b16 %v1630
        %v1798 = vunpack.c.l.b16 %v1631
        %v1799 = vunpack.c.h.b16 %v1631
        %v1800 = vunpack.c.l.b16 %v1632
        %v1801 = vunpack.c.h.b16 %v1632
        %v1802 = vunpack.c.l.b16 %v1633
        %v1803 = vunpack.c.h.b16 %v1633
        %v1804 = vunpack.c.l.b16 %v1634
        %v1805 = vunpack.c.h.b16 %v1634
        %v1806 = vunpack.c.l.b16 %v1635
        %v1807 = vunpack.c.h.b16 %v1635
        %v1808 = vunpack.c.l.b16 %v1636
        %v1809 = vunpack.c.h.b16 %v1636
        %v1810 = vunpack.c.l.b16 %v1637
        %v1811 = vunpack.c.h.b16 %v1637
        %v1812 = vunpack.c.l.b16 %v1638
        %v1813 = vunpack.c.h.b16 %v1638
        %v1814 = vunpack.c.l.b16 %v1639
        %v1815 = vunpack.c.h.b16 %v1639
        %v1816 = vunpack.c.l.b16 %v1640
        %v1817 = vunpack.c.h.b16 %v1640
        %v1818 = vunpack.c.l.b16 %v1641
        %v1819 = vunpack.c.h.b16 %v1641
        %v1820 = vunpack.c.l.b16 %v1642
        %v1821 = vunpack.c.h.b16 %v1642
        %v1822 = vunpack.c.l.b16 %v1643
        %v1823 = vunpack.c.h.b16 %v1643
        %v1824 = vunpack.c.l.b16 %v1644
        %v1825 = vunpack.c.h.b16 %v1644
        %v1826 = vunpack.c.l.b16 %v1645
        %v1827 = vunpack.c.h.b16 %v1645
        %v1828 = vunpack.c.l.b16 %v1646
        %v1829 = vunpack.c.h.b16 %v1646
        %v1830 = vunpack.c.l.b16 %v1647
        %v1831 = vunpack.c.h.b16 %v1647
        %v1832 = vunpack.c.l.b16 %v1648
        %v1833 = vunpack.c.h.b16 %v1648
        %v1834 = vunpack.c.l.b16 %v1649
        %v1835 = vunpack.c.h.b16 %v1649
        %v1836 = vunpack.c.l.b16 %v1650
        %v1837 = vunpack.c.h.b16 %v1650
        %v1838 = vunpack.c.l.b16 %v1651
        %v1839 = vunpack.c.h.b16 %v1651
        %v1840 = vunpack.c.l.b16 %v1652
        %v1841 = vunpack.c.h.b16 %v1652
        %v1842 = vunpack.c.l.b16 %v1653
        %v1843 = vunpack.c.h.b16 %v1653
        %v1844 = vunpack.c.l.b16 %v1654
        %v1845 = vunpack.c.h.b16 %v1654
        %v1846 = vunpack.c.l.b16 %v1655
        %v1847 = vunpack.c.h.b16 %v1655
        %v1848 = vunpack.c.l.b16 %v1656
        %v1849 = vunpack.c.h.b16 %v1656
        %v1850 = vunpack.c.l.b16 %v1657
        %v1851 = vunpack.c.h.b16 %v1657
        %v1852 = vunpack.c.l.b16 %v1658
        %v1853 = vunpack.c.h.b16 %v1658
        %v1854 = vunpack.c.l.b16 %v1659
        %v1855 = vunpack.c.h.b16 %v1659
        %v1856 = vunpack.c.l.b16 %v1660
        %v1857 = vunpack.c.h.b16 %v1660
        %v1858 = vunpack.c.l.b16 %v1661
        %v1859 = vunpack.c.h.b16 %v1661
        %v1860 = vunpack.c.l.b16 %v1662
        %v1861 = vunpack.c.h.b16 %v1662
        %v1862 = vunpack.c.l.b16 %v1663
        %v1863 = vunpack.c.h.b16 %v1663
        %v1864 = vunpack.c.l.b16 %v1664
        %v1865 = vunpack.c.h.b16 %v1664
        %v1866 = vunpack.c.l.b16 %v1665
        %v1867 = vunpack.c.h.b16 %v1665
        %v1868 = vunpack.c.l.b16 %v1666
        %v1869 = vunpack.c.h.b16 %v1666
        %v1870 = vunpack.c.l.b16 %v1667
        %v1871 = vunpack.c.h.b16 %v1667
        %v1872 = vunpack.c.l.b16 %v1668
        %v1873 = vunpack.c.h.b16 %v1668
        %v1874 = vunpack.c.l.b16 %v1669
        %v1875 = vunpack.c.h.b16 %v1669
        %v1876 = vunpack.c.l.b16 %v1670
        %v1877 = vunpack.c.h.b16 %v1670
        %v1878 = vunpack.c.l.b16 %v1671
        %v1879 = vunpack.c.h.b16 %v1671
        %v1880 = vunpack.c.l.b16 %v1672
        %v1881 = vunpack.c.h.b16 %v1672
        %v1882 = vunpack.c.l.b16 %v1673
        %v1883 = vunpack.c.h.b16 %v1673
        %v1884 = vunpack.c.l.b16 %v1674
        %v1885 = vunpack.c.h.b16 %v1674
        %v1886 = vunpack.c.l.b16 %v1675
        %v1887 = vunpack.c.h.b16 %v1675
        %v1888 = vunpack.c.l.b16 %v1676
        %v1889 = vunpack.c.h.b16 %v1676
        %v1890 = vunpack.c.l.b16 %v1677
        %v1891 = vunpack.c.h.b16 %v1677
        %v1892 = vunpack.c.l.b16 %v1678
        %v1893 = vunpack.c.h.b16 %v1678
        %v1894 = vunpack.c.l.b16 %v1679
        %v1895 = vunpack.c.h.b16 %v1679
        %v1896 = vunpack.c.l.b16 %v1680
        %v1897 = vunpack.c.h.b16 %v1680
        %v1898 = vpack.c.b16 %v1774, %v1770
        %v1899 = vpack.c.b16 %v1775, %v1771
        %v1900 = vpack.c.b16 %v1776, %v1772
        %v1901 = vpack.c.b16 %v1777, %v1773
        %v1902 = vpack.c.b16 %v1782, %v1778
        %v1903 = vpack.c.b16 %v1783, %v1779
        %v1904 = vpack.c.b16 %v1784, %v1780
        %v1905 = vpack.c.b16 %v1785, %v1781
        %v1906 = vpack.c.b16 %v1790, %v1786
        %v1907 = vpack.c.b16 %v1791, %v1787
        %v1908 = vpack.c.b16 %v1792, %v1788
        %v1909 = vpack.c.b16 %v1793, %v1789
        %v1910 = vpack.c.b16 %v1798, %v1794
        %v1911 = vpack.c.b16 %v1799, %v1795
        %v1912 = vpack.c.b16 %v1800, %v1796
        %v1913 = vpack.c.b16 %v1801, %v1797
        %v1914 = vpack.c.b16 %v1806, %v1802
        %v1915 = vpack.c.b16 %v1807, %v1803
        %v1916 = vpack.c.b16 %v1808, %v1804
        %v1917 = vpack.c.b16 %v1809, %v1805
        %v1918 = vpack.c.b16 %v1814, %v1810
        %v1919 = vpack.c.b16 %v1815, %v1811
        %v1920 = vpack.c.b16 %v1816, %v1812
        %v1921 = vpack.c.b16 %v1817, %v1813
        %v1922 = vpack.c.b16 %v1822, %v1818
        %v1923 = vpack.c.b16 %v1823, %v1819
        %v1924 = vpack.c.b16 %v1824, %v1820
        %v1925 = vpack.c.b16 %v1825, %v1821
        %v1926 = vpack.c.b16 %v1830, %v1826
        %v1927 = vpack.c.b16 %v1831, %v1827
        %v1928 = vpack.c.b16 %v1832, %v1828
        %v1929 = vpack.c.b16 %v1833, %v1829
        %v1930 = vpack.c.b16 %v1838, %v1834
        %v1931 = vpack.c.b16 %v1839, %v1835
        %v1932 = vpack.c.b16 %v1840, %v1836
        %v1933 = vpack.c.b16 %v1841, %v1837
        %v1934 = vpack.c.b16 %v1846, %v1842
        %v1935 = vpack.c.b16 %v1847, %v1843
        %v1936 = vpack.c.b16 %v1848, %v1844
        %v1937 = vpack.c.b16 %v1849, %v1845
        %v1938 = vpack.c.b16 %v1854, %v1850
        %v1939 = vpack.c.b16 %v1855, %v1851
        %v1940 = vpack.c.b16 %v1856, %v1852
        %v1941 = vpack.c.b16 %v1857, %v1853
        %v1942 = vpack.c.b16 %v1862, %v1858
        %v1943 = vpack.c.b16 %v1863, %v1859
        %v1944 = vpack.c.b16 %v1864, %v1860
        %v1945 = vpack.c.b16 %v1865, %v1861
        %v1946 = vpack.c.b16 %v1870, %v1866
        %v1947 = vpack.c.b16 %v1871, %v1867
        %v1948 = vpack.c.b16 %v1872, %v1868
        %v1949 = vpack.c.b16 %v1873, %v1869
        %v1950 = vpack.c.b16 %v1878, %v1874
        %v1951 = vpack.c.b16 %v1879, %v1875
        %v1952 = vpack.c.b16 %v1880, %v1876
        %v1953 = vpack.c.b16 %v1881, %v1877
        %v1954 = vpack.c.b16 %v1886, %v1882
        %v1955 = vpack.c.b16 %v1887, %v1883
        %v1956 = vpack.c.b16 %v1888, %v1884
        %v1957 = vpack.c.b16 %v1889, %v1885
        %v1958 = vpack.c.b16 %v1894, %v1890
        %v1959 = vpack.c.b16 %v1895, %v1891
        %v1960 = vpack.c.b16 %v1896, %v1892
        %v1961 = vpack.c.b16 %v1897, %v1893
        %2026 = vmatprep.subr.bf16.mxu0 %v1899
        %2027 = vmatpush1.bf16.msra.mxu0 %v1898
        %2028 = vmatprep.subr.bf16.mxu0 %v1903
        %2029 = vmatpush1.bf16.msra.mxu0 %v1902
        %2030 = vmatprep.subr.bf16.mxu0 %v1907
        %2031 = vmatpush1.bf16.msra.mxu0 %v1906
        %2032 = vmatprep.subr.bf16.mxu0 %v1911
        %2033 = vmatpush1.bf16.msra.mxu0 %v1910
        %2034 = vmatprep.subr.bf16.mxu0 %v1915
        %2035 = vmatpush1.bf16.msra.mxu0 %v1914
        %2036 = vmatprep.subr.bf16.mxu0 %v1919
        %2037 = vmatpush1.bf16.msra.mxu0 %v1918
        %2038 = vmatprep.subr.bf16.mxu0 %v1923
        %2039 = vmatpush1.bf16.msra.mxu0 %v1922
        %2040 = vmatprep.subr.bf16.mxu0 %v1927
        %2041 = vmatpush1.bf16.msra.mxu0 %v1926
        %2042 = vmatprep.subr.bf16.mxu0 %v1931
        %2043 = vmatpush1.bf16.msra.mxu0 %v1930
        %2044 = vmatprep.subr.bf16.mxu0 %v1935
        %2045 = vmatpush1.bf16.msra.mxu0 %v1934
        %2046 = vmatprep.subr.bf16.mxu0 %v1939
        %2047 = vmatpush1.bf16.msra.mxu0 %v1938
        %2048 = vmatprep.subr.bf16.mxu0 %v1943
        %2049 = vmatpush1.bf16.msra.mxu0 %v1942
        %2050 = vmatprep.subr.bf16.mxu0 %v1947
        %2051 = vmatpush1.bf16.msra.mxu0 %v1946
        %2052 = vmatprep.subr.bf16.mxu0 %v1951
        %2053 = vmatpush1.bf16.msra.mxu0 %v1950
        %2054 = vmatprep.subr.bf16.mxu0 %v1955
        %2055 = vmatpush1.bf16.msra.mxu0 %v1954
        %2056 = vmatprep.subr.bf16.mxu0 %v1959
        %2057 = vmatpush1.bf16.msra.mxu0 %v1958
        %2058 = vmatprep.mubr.bf16.mxu0 %v1703
        %2059 = vmatmul.mubr.bf16.gmra.mrb[0].mxu0 %v1696
        %v2060 = vpop.f32.mrb[0].mxu0
        %v2061 = vadd.f32 0.0, %v2060
        %v2062 = vpop.f32.mrb[0].mxu0
        %v2063 = vadd.f32 0.0, %v2062
        %v2064 = vpop.f32.mrb[0].mxu0
        %v2065 = vpop.f32.mrb[0].mxu0
        %2066 = vdwg.mxu0
        %2067 = vmatprep.subr.bf16.mxu0 %v1901
        %2068 = vmatpush1.bf16.msra.mxu0 %v1900
        %2069 = vmatprep.subr.bf16.mxu0 %v1905
        %2070 = vmatpush1.bf16.msra.mxu0 %v1904
        %2071 = vmatprep.subr.bf16.mxu0 %v1909
        %2072 = vmatpush1.bf16.msra.mxu0 %v1908
        %2073 = vmatprep.subr.bf16.mxu0 %v1913
        %2074 = vmatpush1.bf16.msra.mxu0 %v1912
        %2075 = vmatprep.subr.bf16.mxu0 %v1917
        %2076 = vmatpush1.bf16.msra.mxu0 %v1916
        %2077 = vmatprep.subr.bf16.mxu0 %v1921
        %2078 = vmatpush1.bf16.msra.mxu0 %v1920
        %2079 = vmatprep.subr.bf16.mxu0 %v1925
        %2080 = vmatpush1.bf16.msra.mxu0 %v1924
        %2081 = vmatprep.subr.bf16.mxu0 %v1929
        %2082 = vmatpush1.bf16.msra.mxu0 %v1928
        %2083 = vmatprep.subr.bf16.mxu0 %v1933
        %2084 = vmatpush1.bf16.msra.mxu0 %v1932
        %2085 = vmatprep.subr.bf16.mxu0 %v1937
        %2086 = vmatpush1.bf16.msra.mxu0 %v1936
        %2087 = vmatprep.subr.bf16.mxu0 %v1941
        %2088 = vmatpush1.bf16.msra.mxu0 %v1940
        %2089 = vmatprep.subr.bf16.mxu0 %v1945
        %2090 = vmatpush1.bf16.msra.mxu0 %v1944
        %2091 = vmatprep.subr.bf16.mxu0 %v1949
        %2092 = vmatpush1.bf16.msra.mxu0 %v1948
        %2093 = vmatprep.subr.bf16.mxu0 %v1953
        %2094 = vmatpush1.bf16.msra.mxu0 %v1952
        %2095 = vmatprep.subr.bf16.mxu0 %v1957
        %2096 = vmatpush1.bf16.msra.mxu0 %v1956
        %2097 = vmatprep.subr.bf16.mxu0 %v1961
        %2098 = vmatpush1.bf16.msra.mxu0 %v1960
        %2099 = vmatprep.mubr.bf16.mxu0 %v1703
        %2100 = vmatmul.mubr.bf16.gmra.mrb[0].mxu0 %v1696
        %v2101 = vpop.f32.mrb[0].mxu0
        %v2102 = vadd.f32 0.0, %v2101
        %v2103 = vpop.f32.mrb[0].mxu0
        %v2104 = vadd.f32 0.0, %v2103
        %v2105 = vpop.f32.mrb[0].mxu0
        %v2106 = vpop.f32.mrb[0].mxu0
        %2107 = vdwg.mxu0
        %v2112 = vcombine.low %v2061, %v2063
        %v2113 = vcombine.low %v2102, %v2104
        %v2115 = vunpack.c.l.s4 1983009808
        %v2116 = vunpack.c.0.s8 %v2115
        %v2117 = vlaneseq
        %v2118 = vshrl.u32 %v2117, 7
        %v2119 = vsub.s32 %v2116, %v2118
        %v2120 = vrot.slane %v2112, %v2119
        %v2122 = vunpack.c.l.s4 1983009808
        %v2123 = vunpack.c.0.s8 %v2122
        %v2124 = vlaneseq
        %v2125 = vshrl.u32 %v2124, 7
        %v2126 = vsub.s32 %v2123, %v2125
        %v2127 = vrot.slane %v2113, %v2126
        %v2128 = vcombine.low %v2120, %v2127
        %v2130 = vadd.f32 %v1611, %v2128
        %s2131 = sadd.s32 %s1093, 2
        %s2132 = smul.u32 %s2131, 2
        %s2133 = scalar_lea.vmem [#allocation2], %s2132
        %v2134 = vld [vmem:[%s2133] sm:$0x3]
        %s2135 = scalar_lea.vmem %s505, 1024 [#allocation8]
        %v2136 = vld [vmem:[%s2135] sm:$0xff]
        %v2137 = vld [vmem:[%s2135 + $0x8] sm:$0xff]
        %v2138 = vld [vmem:[%s2135 + $0x10] sm:$0xff]
        %v2139 = vld [vmem:[%s2135 + $0x18] sm:$0xff]
        %v2140 = vld [vmem:[%s2135 + $0x20] sm:$0xff]
        %v2141 = vld [vmem:[%s2135 + $0x28] sm:$0xff]
        %v2142 = vld [vmem:[%s2135 + $0x30] sm:$0xff]
        %v2143 = vld [vmem:[%s2135 + $0x38] sm:$0xff]
        %v2144 = vld [vmem:[%s2135 + $0x40] sm:$0xff]
        %v2145 = vld [vmem:[%s2135 + $0x48] sm:$0xff]
        %v2146 = vld [vmem:[%s2135 + $0x50] sm:$0xff]
        %v2147 = vld [vmem:[%s2135 + $0x58] sm:$0xff]
        %v2148 = vld [vmem:[%s2135 + $0x60] sm:$0xff]
        %v2149 = vld [vmem:[%s2135 + $0x68] sm:$0xff]
        %v2150 = vld [vmem:[%s2135 + $0x70] sm:$0xff]
        %v2151 = vld [vmem:[%s2135 + $0x78] sm:$0xff]
        %v2152 = vld [vmem:[%s2135 + $0x80] sm:$0xff]
        %v2153 = vld [vmem:[%s2135 + $0x88] sm:$0xff]
        %v2154 = vld [vmem:[%s2135 + $0x90] sm:$0xff]
        %v2155 = vld [vmem:[%s2135 + $0x98] sm:$0xff]
        %v2156 = vld [vmem:[%s2135 + $0xa0] sm:$0xff]
        %v2157 = vld [vmem:[%s2135 + $0xa8] sm:$0xff]
        %v2158 = vld [vmem:[%s2135 + $0xb0] sm:$0xff]
        %v2159 = vld [vmem:[%s2135 + $0xb8] sm:$0xff]
        %v2160 = vld [vmem:[%s2135 + $0xc0] sm:$0xff]
        %v2161 = vld [vmem:[%s2135 + $0xc8] sm:$0xff]
        %v2162 = vld [vmem:[%s2135 + $0xd0] sm:$0xff]
        %v2163 = vld [vmem:[%s2135 + $0xd8] sm:$0xff]
        %v2164 = vld [vmem:[%s2135 + $0xe0] sm:$0xff]
        %v2165 = vld [vmem:[%s2135 + $0xe8] sm:$0xff]
        %v2166 = vld [vmem:[%s2135 + $0xf0] sm:$0xff]
        %v2167 = vld [vmem:[%s2135 + $0xf8] sm:$0xff]
        %v2168 = vld [vmem:[%s2135 + $0x100] sm:$0xff]
        %v2169 = vld [vmem:[%s2135 + $0x108] sm:$0xff]
        %v2170 = vld [vmem:[%s2135 + $0x110] sm:$0xff]
        %v2171 = vld [vmem:[%s2135 + $0x118] sm:$0xff]
        %v2172 = vld [vmem:[%s2135 + $0x120] sm:$0xff]
        %v2173 = vld [vmem:[%s2135 + $0x128] sm:$0xff]
        %v2174 = vld [vmem:[%s2135 + $0x130] sm:$0xff]
        %v2175 = vld [vmem:[%s2135 + $0x138] sm:$0xff]
        %v2176 = vld [vmem:[%s2135 + $0x140] sm:$0xff]
        %v2177 = vld [vmem:[%s2135 + $0x148] sm:$0xff]
        %v2178 = vld [vmem:[%s2135 + $0x150] sm:$0xff]
        %v2179 = vld [vmem:[%s2135 + $0x158] sm:$0xff]
        %v2180 = vld [vmem:[%s2135 + $0x160] sm:$0xff]
        %v2181 = vld [vmem:[%s2135 + $0x168] sm:$0xff]
        %v2182 = vld [vmem:[%s2135 + $0x170] sm:$0xff]
        %v2183 = vld [vmem:[%s2135 + $0x178] sm:$0xff]
        %v2184 = vld [vmem:[%s2135 + $0x180] sm:$0xff]
        %v2185 = vld [vmem:[%s2135 + $0x188] sm:$0xff]
        %v2186 = vld [vmem:[%s2135 + $0x190] sm:$0xff]
        %v2187 = vld [vmem:[%s2135 + $0x198] sm:$0xff]
        %v2188 = vld [vmem:[%s2135 + $0x1a0] sm:$0xff]
        %v2189 = vld [vmem:[%s2135 + $0x1a8] sm:$0xff]
        %v2190 = vld [vmem:[%s2135 + $0x1b0] sm:$0xff]
        %v2191 = vld [vmem:[%s2135 + $0x1b8] sm:$0xff]
        %v2192 = vld [vmem:[%s2135 + $0x1c0] sm:$0xff]
        %v2193 = vld [vmem:[%s2135 + $0x1c8] sm:$0xff]
        %v2194 = vld [vmem:[%s2135 + $0x1d0] sm:$0xff]
        %v2195 = vld [vmem:[%s2135 + $0x1d8] sm:$0xff]
        %v2196 = vld [vmem:[%s2135 + $0x1e0] sm:$0xff]
        %v2197 = vld [vmem:[%s2135 + $0x1e8] sm:$0xff]
        %v2198 = vld [vmem:[%s2135 + $0x1f0] sm:$0xff]
        %v2199 = vld [vmem:[%s2135 + $0x1f8] sm:$0xff]
        %v2202 = vunpack.c.l.s4 1966171168
        %v2203 = vunpack.c.0.s8 %v2202
        %v2204 = vlaneseq
        %v2205 = vshrl.u32 %v2204, 7
        %v2206 = vsub.s32 %v2203, %v2205
        %v2207 = vrot.slane %v2134, %v2206
        %v2208 = vcombine.high %v2207, %v2207
        %v2210 = vunpack.c.l.s4 1966171168
        %v2211 = vunpack.c.0.s8 %v2210
        %v2212 = vlaneseq
        %v2213 = vshrl.u32 %v2212, 7
        %v2214 = vsub.s32 %v2211, %v2213
        %v2215 = vrot.slane %v2207, %v2214
        %v2217 = vunpack.c.l.s4 1966171168
        %v2218 = vunpack.c.0.s8 %v2217
        %v2219 = vlaneseq
        %v2220 = vshrl.u32 %v2219, 7
        %v2221 = vsub.s32 %v2218, %v2220
        %v2222 = vrot.slane %v2208, %v2221
        %v2289 = vunpack.c.l.b16 %v2136
        %v2290 = vunpack.c.h.b16 %v2136
        %v2291 = vunpack.c.l.b16 %v2137
        %v2292 = vunpack.c.h.b16 %v2137
        %v2293 = vunpack.c.l.b16 %v2138
        %v2294 = vunpack.c.h.b16 %v2138
        %v2295 = vunpack.c.l.b16 %v2139
        %v2296 = vunpack.c.h.b16 %v2139
        %v2297 = vunpack.c.l.b16 %v2140
        %v2298 = vunpack.c.h.b16 %v2140
        %v2299 = vunpack.c.l.b16 %v2141
        %v2300 = vunpack.c.h.b16 %v2141
        %v2301 = vunpack.c.l.b16 %v2142
        %v2302 = vunpack.c.h.b16 %v2142
        %v2303 = vunpack.c.l.b16 %v2143
        %v2304 = vunpack.c.h.b16 %v2143
        %v2305 = vunpack.c.l.b16 %v2144
        %v2306 = vunpack.c.h.b16 %v2144
        %v2307 = vunpack.c.l.b16 %v2145
        %v2308 = vunpack.c.h.b16 %v2145
        %v2309 = vunpack.c.l.b16 %v2146
        %v2310 = vunpack.c.h.b16 %v2146
        %v2311 = vunpack.c.l.b16 %v2147
        %v2312 = vunpack.c.h.b16 %v2147
        %v2313 = vunpack.c.l.b16 %v2148
        %v2314 = vunpack.c.h.b16 %v2148
        %v2315 = vunpack.c.l.b16 %v2149
        %v2316 = vunpack.c.h.b16 %v2149
        %v2317 = vunpack.c.l.b16 %v2150
        %v2318 = vunpack.c.h.b16 %v2150
        %v2319 = vunpack.c.l.b16 %v2151
        %v2320 = vunpack.c.h.b16 %v2151
        %v2321 = vunpack.c.l.b16 %v2152
        %v2322 = vunpack.c.h.b16 %v2152
        %v2323 = vunpack.c.l.b16 %v2153
        %v2324 = vunpack.c.h.b16 %v2153
        %v2325 = vunpack.c.l.b16 %v2154
        %v2326 = vunpack.c.h.b16 %v2154
        %v2327 = vunpack.c.l.b16 %v2155
        %v2328 = vunpack.c.h.b16 %v2155
        %v2329 = vunpack.c.l.b16 %v2156
        %v2330 = vunpack.c.h.b16 %v2156
        %v2331 = vunpack.c.l.b16 %v2157
        %v2332 = vunpack.c.h.b16 %v2157
        %v2333 = vunpack.c.l.b16 %v2158
        %v2334 = vunpack.c.h.b16 %v2158
        %v2335 = vunpack.c.l.b16 %v2159
        %v2336 = vunpack.c.h.b16 %v2159
        %v2337 = vunpack.c.l.b16 %v2160
        %v2338 = vunpack.c.h.b16 %v2160
        %v2339 = vunpack.c.l.b16 %v2161
        %v2340 = vunpack.c.h.b16 %v2161
        %v2341 = vunpack.c.l.b16 %v2162
        %v2342 = vunpack.c.h.b16 %v2162
        %v2343 = vunpack.c.l.b16 %v2163
        %v2344 = vunpack.c.h.b16 %v2163
        %v2345 = vunpack.c.l.b16 %v2164
        %v2346 = vunpack.c.h.b16 %v2164
        %v2347 = vunpack.c.l.b16 %v2165
        %v2348 = vunpack.c.h.b16 %v2165
        %v2349 = vunpack.c.l.b16 %v2166
        %v2350 = vunpack.c.h.b16 %v2166
        %v2351 = vunpack.c.l.b16 %v2167
        %v2352 = vunpack.c.h.b16 %v2167
        %v2353 = vunpack.c.l.b16 %v2168
        %v2354 = vunpack.c.h.b16 %v2168
        %v2355 = vunpack.c.l.b16 %v2169
        %v2356 = vunpack.c.h.b16 %v2169
        %v2357 = vunpack.c.l.b16 %v2170
        %v2358 = vunpack.c.h.b16 %v2170
        %v2359 = vunpack.c.l.b16 %v2171
        %v2360 = vunpack.c.h.b16 %v2171
        %v2361 = vunpack.c.l.b16 %v2172
        %v2362 = vunpack.c.h.b16 %v2172
        %v2363 = vunpack.c.l.b16 %v2173
        %v2364 = vunpack.c.h.b16 %v2173
        %v2365 = vunpack.c.l.b16 %v2174
        %v2366 = vunpack.c.h.b16 %v2174
        %v2367 = vunpack.c.l.b16 %v2175
        %v2368 = vunpack.c.h.b16 %v2175
        %v2369 = vunpack.c.l.b16 %v2176
        %v2370 = vunpack.c.h.b16 %v2176
        %v2371 = vunpack.c.l.b16 %v2177
        %v2372 = vunpack.c.h.b16 %v2177
        %v2373 = vunpack.c.l.b16 %v2178
        %v2374 = vunpack.c.h.b16 %v2178
        %v2375 = vunpack.c.l.b16 %v2179
        %v2376 = vunpack.c.h.b16 %v2179
        %v2377 = vunpack.c.l.b16 %v2180
        %v2378 = vunpack.c.h.b16 %v2180
        %v2379 = vunpack.c.l.b16 %v2181
        %v2380 = vunpack.c.h.b16 %v2181
        %v2381 = vunpack.c.l.b16 %v2182
        %v2382 = vunpack.c.h.b16 %v2182
        %v2383 = vunpack.c.l.b16 %v2183
        %v2384 = vunpack.c.h.b16 %v2183
        %v2385 = vunpack.c.l.b16 %v2184
        %v2386 = vunpack.c.h.b16 %v2184
        %v2387 = vunpack.c.l.b16 %v2185
        %v2388 = vunpack.c.h.b16 %v2185
        %v2389 = vunpack.c.l.b16 %v2186
        %v2390 = vunpack.c.h.b16 %v2186
        %v2391 = vunpack.c.l.b16 %v2187
        %v2392 = vunpack.c.h.b16 %v2187
        %v2393 = vunpack.c.l.b16 %v2188
        %v2394 = vunpack.c.h.b16 %v2188
        %v2395 = vunpack.c.l.b16 %v2189
        %v2396 = vunpack.c.h.b16 %v2189
        %v2397 = vunpack.c.l.b16 %v2190
        %v2398 = vunpack.c.h.b16 %v2190
        %v2399 = vunpack.c.l.b16 %v2191
        %v2400 = vunpack.c.h.b16 %v2191
        %v2401 = vunpack.c.l.b16 %v2192
        %v2402 = vunpack.c.h.b16 %v2192
        %v2403 = vunpack.c.l.b16 %v2193
        %v2404 = vunpack.c.h.b16 %v2193
        %v2405 = vunpack.c.l.b16 %v2194
        %v2406 = vunpack.c.h.b16 %v2194
        %v2407 = vunpack.c.l.b16 %v2195
        %v2408 = vunpack.c.h.b16 %v2195
        %v2409 = vunpack.c.l.b16 %v2196
        %v2410 = vunpack.c.h.b16 %v2196
        %v2411 = vunpack.c.l.b16 %v2197
        %v2412 = vunpack.c.h.b16 %v2197
        %v2413 = vunpack.c.l.b16 %v2198
        %v2414 = vunpack.c.h.b16 %v2198
        %v2415 = vunpack.c.l.b16 %v2199
        %v2416 = vunpack.c.h.b16 %v2199
        %v2417 = vpack.c.b16 %v2293, %v2289
        %v2418 = vpack.c.b16 %v2294, %v2290
        %v2419 = vpack.c.b16 %v2295, %v2291
        %v2420 = vpack.c.b16 %v2296, %v2292
        %v2421 = vpack.c.b16 %v2301, %v2297
        %v2422 = vpack.c.b16 %v2302, %v2298
        %v2423 = vpack.c.b16 %v2303, %v2299
        %v2424 = vpack.c.b16 %v2304, %v2300
        %v2425 = vpack.c.b16 %v2309, %v2305
        %v2426 = vpack.c.b16 %v2310, %v2306
        %v2427 = vpack.c.b16 %v2311, %v2307
        %v2428 = vpack.c.b16 %v2312, %v2308
        %v2429 = vpack.c.b16 %v2317, %v2313
        %v2430 = vpack.c.b16 %v2318, %v2314
        %v2431 = vpack.c.b16 %v2319, %v2315
        %v2432 = vpack.c.b16 %v2320, %v2316
        %v2433 = vpack.c.b16 %v2325, %v2321
        %v2434 = vpack.c.b16 %v2326, %v2322
        %v2435 = vpack.c.b16 %v2327, %v2323
        %v2436 = vpack.c.b16 %v2328, %v2324
        %v2437 = vpack.c.b16 %v2333, %v2329
        %v2438 = vpack.c.b16 %v2334, %v2330
        %v2439 = vpack.c.b16 %v2335, %v2331
        %v2440 = vpack.c.b16 %v2336, %v2332
        %v2441 = vpack.c.b16 %v2341, %v2337
        %v2442 = vpack.c.b16 %v2342, %v2338
        %v2443 = vpack.c.b16 %v2343, %v2339
        %v2444 = vpack.c.b16 %v2344, %v2340
        %v2445 = vpack.c.b16 %v2349, %v2345
        %v2446 = vpack.c.b16 %v2350, %v2346
        %v2447 = vpack.c.b16 %v2351, %v2347
        %v2448 = vpack.c.b16 %v2352, %v2348
        %v2449 = vpack.c.b16 %v2357, %v2353
        %v2450 = vpack.c.b16 %v2358, %v2354
        %v2451 = vpack.c.b16 %v2359, %v2355
        %v2452 = vpack.c.b16 %v2360, %v2356
        %v2453 = vpack.c.b16 %v2365, %v2361
        %v2454 = vpack.c.b16 %v2366, %v2362
        %v2455 = vpack.c.b16 %v2367, %v2363
        %v2456 = vpack.c.b16 %v2368, %v2364
        %v2457 = vpack.c.b16 %v2373, %v2369
        %v2458 = vpack.c.b16 %v2374, %v2370
        %v2459 = vpack.c.b16 %v2375, %v2371
        %v2460 = vpack.c.b16 %v2376, %v2372
        %v2461 = vpack.c.b16 %v2381, %v2377
        %v2462 = vpack.c.b16 %v2382, %v2378
        %v2463 = vpack.c.b16 %v2383, %v2379
        %v2464 = vpack.c.b16 %v2384, %v2380
        %v2465 = vpack.c.b16 %v2389, %v2385
        %v2466 = vpack.c.b16 %v2390, %v2386
        %v2467 = vpack.c.b16 %v2391, %v2387
        %v2468 = vpack.c.b16 %v2392, %v2388
        %v2469 = vpack.c.b16 %v2397, %v2393
        %v2470 = vpack.c.b16 %v2398, %v2394
        %v2471 = vpack.c.b16 %v2399, %v2395
        %v2472 = vpack.c.b16 %v2400, %v2396
        %v2473 = vpack.c.b16 %v2405, %v2401
        %v2474 = vpack.c.b16 %v2406, %v2402
        %v2475 = vpack.c.b16 %v2407, %v2403
        %v2476 = vpack.c.b16 %v2408, %v2404
        %v2477 = vpack.c.b16 %v2413, %v2409
        %v2478 = vpack.c.b16 %v2414, %v2410
        %v2479 = vpack.c.b16 %v2415, %v2411
        %v2480 = vpack.c.b16 %v2416, %v2412
        %2545 = vmatprep.subr.bf16.mxu0 %v2418
        %2546 = vmatpush1.bf16.msra.mxu0 %v2417
        %2547 = vmatprep.subr.bf16.mxu0 %v2422
        %2548 = vmatpush1.bf16.msra.mxu0 %v2421
        %2549 = vmatprep.subr.bf16.mxu0 %v2426
        %2550 = vmatpush1.bf16.msra.mxu0 %v2425
        %2551 = vmatprep.subr.bf16.mxu0 %v2430
        %2552 = vmatpush1.bf16.msra.mxu0 %v2429
        %2553 = vmatprep.subr.bf16.mxu0 %v2434
        %2554 = vmatpush1.bf16.msra.mxu0 %v2433
        %2555 = vmatprep.subr.bf16.mxu0 %v2438
        %2556 = vmatpush1.bf16.msra.mxu0 %v2437
        %2557 = vmatprep.subr.bf16.mxu0 %v2442
        %2558 = vmatpush1.bf16.msra.mxu0 %v2441
        %2559 = vmatprep.subr.bf16.mxu0 %v2446
        %2560 = vmatpush1.bf16.msra.mxu0 %v2445
        %2561 = vmatprep.subr.bf16.mxu0 %v2450
        %2562 = vmatpush1.bf16.msra.mxu0 %v2449
        %2563 = vmatprep.subr.bf16.mxu0 %v2454
        %2564 = vmatpush1.bf16.msra.mxu0 %v2453
        %2565 = vmatprep.subr.bf16.mxu0 %v2458
        %2566 = vmatpush1.bf16.msra.mxu0 %v2457
        %2567 = vmatprep.subr.bf16.mxu0 %v2462
        %2568 = vmatpush1.bf16.msra.mxu0 %v2461
        %2569 = vmatprep.subr.bf16.mxu0 %v2466
        %2570 = vmatpush1.bf16.msra.mxu0 %v2465
        %2571 = vmatprep.subr.bf16.mxu0 %v2470
        %2572 = vmatpush1.bf16.msra.mxu0 %v2469
        %2573 = vmatprep.subr.bf16.mxu0 %v2474
        %2574 = vmatpush1.bf16.msra.mxu0 %v2473
        %2575 = vmatprep.subr.bf16.mxu0 %v2478
        %2576 = vmatpush1.bf16.msra.mxu0 %v2477
        %2577 = vmatprep.mubr.bf16.mxu0 %v2222
        %2578 = vmatmul.mubr.bf16.gmra.mrb[0].mxu0 %v2215
        %v2579 = vpop.f32.mrb[0].mxu0
        %v2580 = vadd.f32 0.0, %v2579
        %v2581 = vpop.f32.mrb[0].mxu0
        %v2582 = vadd.f32 0.0, %v2581
        %v2583 = vpop.f32.mrb[0].mxu0
        %v2584 = vpop.f32.mrb[0].mxu0
        %2585 = vdwg.mxu0
        %2586 = vmatprep.subr.bf16.mxu0 %v2420
        %2587 = vmatpush1.bf16.msra.mxu0 %v2419
        %2588 = vmatprep.subr.bf16.mxu0 %v2424
        %2589 = vmatpush1.bf16.msra.mxu0 %v2423
        %2590 = vmatprep.subr.bf16.mxu0 %v2428
        %2591 = vmatpush1.bf16.msra.mxu0 %v2427
        %2592 = vmatprep.subr.bf16.mxu0 %v2432
        %2593 = vmatpush1.bf16.msra.mxu0 %v2431
        %2594 = vmatprep.subr.bf16.mxu0 %v2436
        %2595 = vmatpush1.bf16.msra.mxu0 %v2435
        %2596 = vmatprep.subr.bf16.mxu0 %v2440
        %2597 = vmatpush1.bf16.msra.mxu0 %v2439
        %2598 = vmatprep.subr.bf16.mxu0 %v2444
        %2599 = vmatpush1.bf16.msra.mxu0 %v2443
        %2600 = vmatprep.subr.bf16.mxu0 %v2448
        %2601 = vmatpush1.bf16.msra.mxu0 %v2447
        %2602 = vmatprep.subr.bf16.mxu0 %v2452
        %2603 = vmatpush1.bf16.msra.mxu0 %v2451
        %2604 = vmatprep.subr.bf16.mxu0 %v2456
        %2605 = vmatpush1.bf16.msra.mxu0 %v2455
        %2606 = vmatprep.subr.bf16.mxu0 %v2460
        %2607 = vmatpush1.bf16.msra.mxu0 %v2459
        %2608 = vmatprep.subr.bf16.mxu0 %v2464
        %2609 = vmatpush1.bf16.msra.mxu0 %v2463
        %2610 = vmatprep.subr.bf16.mxu0 %v2468
        %2611 = vmatpush1.bf16.msra.mxu0 %v2467
        %2612 = vmatprep.subr.bf16.mxu0 %v2472
        %2613 = vmatpush1.bf16.msra.mxu0 %v2471
        %2614 = vmatprep.subr.bf16.mxu0 %v2476
        %2615 = vmatpush1.bf16.msra.mxu0 %v2475
        %2616 = vmatprep.subr.bf16.mxu0 %v2480
        %2617 = vmatpush1.bf16.msra.mxu0 %v2479
        %2618 = vmatprep.mubr.bf16.mxu0 %v2222
        %2619 = vmatmul.mubr.bf16.gmra.mrb[0].mxu0 %v2215
        %v2620 = vpop.f32.mrb[0].mxu0
        %v2621 = vadd.f32 0.0, %v2620
        %v2622 = vpop.f32.mrb[0].mxu0
        %v2623 = vadd.f32 0.0, %v2622
        %v2624 = vpop.f32.mrb[0].mxu0
        %v2625 = vpop.f32.mrb[0].mxu0
        %2626 = vdwg.mxu0
        %v2631 = vcombine.low %v2580, %v2582
        %v2632 = vcombine.low %v2621, %v2623
        %v2634 = vunpack.c.l.s4 1983009808
        %v2635 = vunpack.c.0.s8 %v2634
        %v2636 = vlaneseq
        %v2637 = vshrl.u32 %v2636, 7
        %v2638 = vsub.s32 %v2635, %v2637
        %v2639 = vrot.slane %v2631, %v2638
        %v2641 = vunpack.c.l.s4 1983009808
        %v2642 = vunpack.c.0.s8 %v2641
        %v2643 = vlaneseq
        %v2644 = vshrl.u32 %v2643, 7
        %v2645 = vsub.s32 %v2642, %v2644
        %v2646 = vrot.slane %v2632, %v2645
        %v2647 = vcombine.low %v2639, %v2646
        %v2649 = vadd.f32 %v2130, %v2647
        %s2650 = sadd.s32 %s1093, 3
        %s2651 = smul.u32 %s2650, 2
        %s2652 = scalar_lea.vmem [#allocation2], %s2651
        %v2653 = vld [vmem:[%s2652] sm:$0x3]
        %s2654 = scalar_lea.vmem %s505, 1536 [#allocation8]
        %v2655 = vld [vmem:[%s2654] sm:$0xff]
        %v2656 = vld [vmem:[%s2654 + $0x8] sm:$0xff]
        %v2657 = vld [vmem:[%s2654 + $0x10] sm:$0xff]
        %v2658 = vld [vmem:[%s2654 + $0x18] sm:$0xff]
        %v2659 = vld [vmem:[%s2654 + $0x20] sm:$0xff]
        %v2660 = vld [vmem:[%s2654 + $0x28] sm:$0xff]
        %v2661 = vld [vmem:[%s2654 + $0x30] sm:$0xff]
        %v2662 = vld [vmem:[%s2654 + $0x38] sm:$0xff]
        %v2663 = vld [vmem:[%s2654 + $0x40] sm:$0xff]
        %v2664 = vld [vmem:[%s2654 + $0x48] sm:$0xff]
        %v2665 = vld [vmem:[%s2654 + $0x50] sm:$0xff]
        %v2666 = vld [vmem:[%s2654 + $0x58] sm:$0xff]
        %v2667 = vld [vmem:[%s2654 + $0x60] sm:$0xff]
        %v2668 = vld [vmem:[%s2654 + $0x68] sm:$0xff]
        %v2669 = vld [vmem:[%s2654 + $0x70] sm:$0xff]
        %v2670 = vld [vmem:[%s2654 + $0x78] sm:$0xff]
        %v2671 = vld [vmem:[%s2654 + $0x80] sm:$0xff]
        %v2672 = vld [vmem:[%s2654 + $0x88] sm:$0xff]
        %v2673 = vld [vmem:[%s2654 + $0x90] sm:$0xff]
        %v2674 = vld [vmem:[%s2654 + $0x98] sm:$0xff]
        %v2675 = vld [vmem:[%s2654 + $0xa0] sm:$0xff]
        %v2676 = vld [vmem:[%s2654 + $0xa8] sm:$0xff]
        %v2677 = vld [vmem:[%s2654 + $0xb0] sm:$0xff]
        %v2678 = vld [vmem:[%s2654 + $0xb8] sm:$0xff]
        %v2679 = vld [vmem:[%s2654 + $0xc0] sm:$0xff]
        %v2680 = vld [vmem:[%s2654 + $0xc8] sm:$0xff]
        %v2681 = vld [vmem:[%s2654 + $0xd0] sm:$0xff]
        %v2682 = vld [vmem:[%s2654 + $0xd8] sm:$0xff]
        %v2683 = vld [vmem:[%s2654 + $0xe0] sm:$0xff]
        %v2684 = vld [vmem:[%s2654 + $0xe8] sm:$0xff]
        %v2685 = vld [vmem:[%s2654 + $0xf0] sm:$0xff]
        %v2686 = vld [vmem:[%s2654 + $0xf8] sm:$0xff]
        %v2687 = vld [vmem:[%s2654 + $0x100] sm:$0xff]
        %v2688 = vld [vmem:[%s2654 + $0x108] sm:$0xff]
        %v2689 = vld [vmem:[%s2654 + $0x110] sm:$0xff]
        %v2690 = vld [vmem:[%s2654 + $0x118] sm:$0xff]
        %v2691 = vld [vmem:[%s2654 + $0x120] sm:$0xff]
        %v2692 = vld [vmem:[%s2654 + $0x128] sm:$0xff]
        %v2693 = vld [vmem:[%s2654 + $0x130] sm:$0xff]
        %v2694 = vld [vmem:[%s2654 + $0x138] sm:$0xff]
        %v2695 = vld [vmem:[%s2654 + $0x140] sm:$0xff]
        %v2696 = vld [vmem:[%s2654 + $0x148] sm:$0xff]
        %v2697 = vld [vmem:[%s2654 + $0x150] sm:$0xff]
        %v2698 = vld [vmem:[%s2654 + $0x158] sm:$0xff]
        %v2699 = vld [vmem:[%s2654 + $0x160] sm:$0xff]
        %v2700 = vld [vmem:[%s2654 + $0x168] sm:$0xff]
        %v2701 = vld [vmem:[%s2654 + $0x170] sm:$0xff]
        %v2702 = vld [vmem:[%s2654 + $0x178] sm:$0xff]
        %v2703 = vld [vmem:[%s2654 + $0x180] sm:$0xff]
        %v2704 = vld [vmem:[%s2654 + $0x188] sm:$0xff]
        %v2705 = vld [vmem:[%s2654 + $0x190] sm:$0xff]
        %v2706 = vld [vmem:[%s2654 + $0x198] sm:$0xff]
        %v2707 = vld [vmem:[%s2654 + $0x1a0] sm:$0xff]
        %v2708 = vld [vmem:[%s2654 + $0x1a8] sm:$0xff]
        %v2709 = vld [vmem:[%s2654 + $0x1b0] sm:$0xff]
        %v2710 = vld [vmem:[%s2654 + $0x1b8] sm:$0xff]
        %v2711 = vld [vmem:[%s2654 + $0x1c0] sm:$0xff]
        %v2712 = vld [vmem:[%s2654 + $0x1c8] sm:$0xff]
        %v2713 = vld [vmem:[%s2654 + $0x1d0] sm:$0xff]
        %v2714 = vld [vmem:[%s2654 + $0x1d8] sm:$0xff]
        %v2715 = vld [vmem:[%s2654 + $0x1e0] sm:$0xff]
        %v2716 = vld [vmem:[%s2654 + $0x1e8] sm:$0xff]
        %v2717 = vld [vmem:[%s2654 + $0x1f0] sm:$0xff]
        %v2718 = vld [vmem:[%s2654 + $0x1f8] sm:$0xff]
        %v2721 = vunpack.c.l.s4 1966171168
        %v2722 = vunpack.c.0.s8 %v2721
        %v2723 = vlaneseq
        %v2724 = vshrl.u32 %v2723, 7
        %v2725 = vsub.s32 %v2722, %v2724
        %v2726 = vrot.slane %v2653, %v2725
        %v2727 = vcombine.high %v2726, %v2726
        %v2729 = vunpack.c.l.s4 1966171168
        %v2730 = vunpack.c.0.s8 %v2729
        %v2731 = vlaneseq
        %v2732 = vshrl.u32 %v2731, 7
        %v2733 = vsub.s32 %v2730, %v2732
        %v2734 = vrot.slane %v2726, %v2733
        %v2736 = vunpack.c.l.s4 1966171168
        %v2737 = vunpack.c.0.s8 %v2736
        %v2738 = vlaneseq
        %v2739 = vshrl.u32 %v2738, 7
        %v2740 = vsub.s32 %v2737, %v2739
        %v2741 = vrot.slane %v2727, %v2740
        %v2808 = vunpack.c.l.b16 %v2655
        %v2809 = vunpack.c.h.b16 %v2655
        %v2810 = vunpack.c.l.b16 %v2656
        %v2811 = vunpack.c.h.b16 %v2656
        %v2812 = vunpack.c.l.b16 %v2657
        %v2813 = vunpack.c.h.b16 %v2657
        %v2814 = vunpack.c.l.b16 %v2658
        %v2815 = vunpack.c.h.b16 %v2658
        %v2816 = vunpack.c.l.b16 %v2659
        %v2817 = vunpack.c.h.b16 %v2659
        %v2818 = vunpack.c.l.b16 %v2660
        %v2819 = vunpack.c.h.b16 %v2660
        %v2820 = vunpack.c.l.b16 %v2661
        %v2821 = vunpack.c.h.b16 %v2661
        %v2822 = vunpack.c.l.b16 %v2662
        %v2823 = vunpack.c.h.b16 %v2662
        %v2824 = vunpack.c.l.b16 %v2663
        %v2825 = vunpack.c.h.b16 %v2663
        %v2826 = vunpack.c.l.b16 %v2664
        %v2827 = vunpack.c.h.b16 %v2664
        %v2828 = vunpack.c.l.b16 %v2665
        %v2829 = vunpack.c.h.b16 %v2665
        %v2830 = vunpack.c.l.b16 %v2666
        %v2831 = vunpack.c.h.b16 %v2666
        %v2832 = vunpack.c.l.b16 %v2667
        %v2833 = vunpack.c.h.b16 %v2667
        %v2834 = vunpack.c.l.b16 %v2668
        %v2835 = vunpack.c.h.b16 %v2668
        %v2836 = vunpack.c.l.b16 %v2669
        %v2837 = vunpack.c.h.b16 %v2669
        %v2838 = vunpack.c.l.b16 %v2670
        %v2839 = vunpack.c.h.b16 %v2670
        %v2840 = vunpack.c.l.b16 %v2671
        %v2841 = vunpack.c.h.b16 %v2671
        %v2842 = vunpack.c.l.b16 %v2672
        %v2843 = vunpack.c.h.b16 %v2672
        %v2844 = vunpack.c.l.b16 %v2673
        %v2845 = vunpack.c.h.b16 %v2673
        %v2846 = vunpack.c.l.b16 %v2674
        %v2847 = vunpack.c.h.b16 %v2674
        %v2848 = vunpack.c.l.b16 %v2675
        %v2849 = vunpack.c.h.b16 %v2675
        %v2850 = vunpack.c.l.b16 %v2676
        %v2851 = vunpack.c.h.b16 %v2676
        %v2852 = vunpack.c.l.b16 %v2677
        %v2853 = vunpack.c.h.b16 %v2677
        %v2854 = vunpack.c.l.b16 %v2678
        %v2855 = vunpack.c.h.b16 %v2678
        %v2856 = vunpack.c.l.b16 %v2679
        %v2857 = vunpack.c.h.b16 %v2679
        %v2858 = vunpack.c.l.b16 %v2680
        %v2859 = vunpack.c.h.b16 %v2680
        %v2860 = vunpack.c.l.b16 %v2681
        %v2861 = vunpack.c.h.b16 %v2681
        %v2862 = vunpack.c.l.b16 %v2682
        %v2863 = vunpack.c.h.b16 %v2682
        %v2864 = vunpack.c.l.b16 %v2683
        %v2865 = vunpack.c.h.b16 %v2683
        %v2866 = vunpack.c.l.b16 %v2684
        %v2867 = vunpack.c.h.b16 %v2684
        %v2868 = vunpack.c.l.b16 %v2685
        %v2869 = vunpack.c.h.b16 %v2685
        %v2870 = vunpack.c.l.b16 %v2686
        %v2871 = vunpack.c.h.b16 %v2686
        %v2872 = vunpack.c.l.b16 %v2687
        %v2873 = vunpack.c.h.b16 %v2687
        %v2874 = vunpack.c.l.b16 %v2688
        %v2875 = vunpack.c.h.b16 %v2688
        %v2876 = vunpack.c.l.b16 %v2689
        %v2877 = vunpack.c.h.b16 %v2689
        %v2878 = vunpack.c.l.b16 %v2690
        %v2879 = vunpack.c.h.b16 %v2690
        %v2880 = vunpack.c.l.b16 %v2691
        %v2881 = vunpack.c.h.b16 %v2691
        %v2882 = vunpack.c.l.b16 %v2692
        %v2883 = vunpack.c.h.b16 %v2692
        %v2884 = vunpack.c.l.b16 %v2693
        %v2885 = vunpack.c.h.b16 %v2693
        %v2886 = vunpack.c.l.b16 %v2694
        %v2887 = vunpack.c.h.b16 %v2694
        %v2888 = vunpack.c.l.b16 %v2695
        %v2889 = vunpack.c.h.b16 %v2695
        %v2890 = vunpack.c.l.b16 %v2696
        %v2891 = vunpack.c.h.b16 %v2696
        %v2892 = vunpack.c.l.b16 %v2697
        %v2893 = vunpack.c.h.b16 %v2697
        %v2894 = vunpack.c.l.b16 %v2698
        %v2895 = vunpack.c.h.b16 %v2698
        %v2896 = vunpack.c.l.b16 %v2699
        %v2897 = vunpack.c.h.b16 %v2699
        %v2898 = vunpack.c.l.b16 %v2700
        %v2899 = vunpack.c.h.b16 %v2700
        %v2900 = vunpack.c.l.b16 %v2701
        %v2901 = vunpack.c.h.b16 %v2701
        %v2902 = vunpack.c.l.b16 %v2702
        %v2903 = vunpack.c.h.b16 %v2702
        %v2904 = vunpack.c.l.b16 %v2703
        %v2905 = vunpack.c.h.b16 %v2703
        %v2906 = vunpack.c.l.b16 %v2704
        %v2907 = vunpack.c.h.b16 %v2704
        %v2908 = vunpack.c.l.b16 %v2705
        %v2909 = vunpack.c.h.b16 %v2705
        %v2910 = vunpack.c.l.b16 %v2706
        %v2911 = vunpack.c.h.b16 %v2706
        %v2912 = vunpack.c.l.b16 %v2707
        %v2913 = vunpack.c.h.b16 %v2707
        %v2914 = vunpack.c.l.b16 %v2708
        %v2915 = vunpack.c.h.b16 %v2708
        %v2916 = vunpack.c.l.b16 %v2709
        %v2917 = vunpack.c.h.b16 %v2709
        %v2918 = vunpack.c.l.b16 %v2710
        %v2919 = vunpack.c.h.b16 %v2710
        %v2920 = vunpack.c.l.b16 %v2711
        %v2921 = vunpack.c.h.b16 %v2711
        %v2922 = vunpack.c.l.b16 %v2712
        %v2923 = vunpack.c.h.b16 %v2712
        %v2924 = vunpack.c.l.b16 %v2713
        %v2925 = vunpack.c.h.b16 %v2713
        %v2926 = vunpack.c.l.b16 %v2714
        %v2927 = vunpack.c.h.b16 %v2714
        %v2928 = vunpack.c.l.b16 %v2715
        %v2929 = vunpack.c.h.b16 %v2715
        %v2930 = vunpack.c.l.b16 %v2716
        %v2931 = vunpack.c.h.b16 %v2716
        %v2932 = vunpack.c.l.b16 %v2717
        %v2933 = vunpack.c.h.b16 %v2717
        %v2934 = vunpack.c.l.b16 %v2718
        %v2935 = vunpack.c.h.b16 %v2718
        %v2936 = vpack.c.b16 %v2812, %v2808
        %v2937 = vpack.c.b16 %v2813, %v2809
        %v2938 = vpack.c.b16 %v2814, %v2810
        %v2939 = vpack.c.b16 %v2815, %v2811
        %v2940 = vpack.c.b16 %v2820, %v2816
        %v2941 = vpack.c.b16 %v2821, %v2817
        %v2942 = vpack.c.b16 %v2822, %v2818
        %v2943 = vpack.c.b16 %v2823, %v2819
        %v2944 = vpack.c.b16 %v2828, %v2824
        %v2945 = vpack.c.b16 %v2829, %v2825
        %v2946 = vpack.c.b16 %v2830, %v2826
        %v2947 = vpack.c.b16 %v2831, %v2827
        %v2948 = vpack.c.b16 %v2836, %v2832
        %v2949 = vpack.c.b16 %v2837, %v2833
        %v2950 = vpack.c.b16 %v2838, %v2834
        %v2951 = vpack.c.b16 %v2839, %v2835
        %v2952 = vpack.c.b16 %v2844, %v2840
        %v2953 = vpack.c.b16 %v2845, %v2841
        %v2954 = vpack.c.b16 %v2846, %v2842
        %v2955 = vpack.c.b16 %v2847, %v2843
        %v2956 = vpack.c.b16 %v2852, %v2848
        %v2957 = vpack.c.b16 %v2853, %v2849
        %v2958 = vpack.c.b16 %v2854, %v2850
        %v2959 = vpack.c.b16 %v2855, %v2851
        %v2960 = vpack.c.b16 %v2860, %v2856
        %v2961 = vpack.c.b16 %v2861, %v2857
        %v2962 = vpack.c.b16 %v2862, %v2858
        %v2963 = vpack.c.b16 %v2863, %v2859
        %v2964 = vpack.c.b16 %v2868, %v2864
        %v2965 = vpack.c.b16 %v2869, %v2865
        %v2966 = vpack.c.b16 %v2870, %v2866
        %v2967 = vpack.c.b16 %v2871, %v2867
        %v2968 = vpack.c.b16 %v2876, %v2872
        %v2969 = vpack.c.b16 %v2877, %v2873
        %v2970 = vpack.c.b16 %v2878, %v2874
        %v2971 = vpack.c.b16 %v2879, %v2875
        %v2972 = vpack.c.b16 %v2884, %v2880
        %v2973 = vpack.c.b16 %v2885, %v2881
        %v2974 = vpack.c.b16 %v2886, %v2882
        %v2975 = vpack.c.b16 %v2887, %v2883
        %v2976 = vpack.c.b16 %v2892, %v2888
        %v2977 = vpack.c.b16 %v2893, %v2889
        %v2978 = vpack.c.b16 %v2894, %v2890
        %v2979 = vpack.c.b16 %v2895, %v2891
        %v2980 = vpack.c.b16 %v2900, %v2896
        %v2981 = vpack.c.b16 %v2901, %v2897
        %v2982 = vpack.c.b16 %v2902, %v2898
        %v2983 = vpack.c.b16 %v2903, %v2899
        %v2984 = vpack.c.b16 %v2908, %v2904
        %v2985 = vpack.c.b16 %v2909, %v2905
        %v2986 = vpack.c.b16 %v2910, %v2906
        %v2987 = vpack.c.b16 %v2911, %v2907
        %v2988 = vpack.c.b16 %v2916, %v2912
        %v2989 = vpack.c.b16 %v2917, %v2913
        %v2990 = vpack.c.b16 %v2918, %v2914
        %v2991 = vpack.c.b16 %v2919, %v2915
        %v2992 = vpack.c.b16 %v2924, %v2920
        %v2993 = vpack.c.b16 %v2925, %v2921
        %v2994 = vpack.c.b16 %v2926, %v2922
        %v2995 = vpack.c.b16 %v2927, %v2923
        %v2996 = vpack.c.b16 %v2932, %v2928
        %v2997 = vpack.c.b16 %v2933, %v2929
        %v2998 = vpack.c.b16 %v2934, %v2930
        %v2999 = vpack.c.b16 %v2935, %v2931
        %3064 = vmatprep.subr.bf16.mxu0 %v2937
        %3065 = vmatpush1.bf16.msra.mxu0 %v2936
        %3066 = vmatprep.subr.bf16.mxu0 %v2941
        %3067 = vmatpush1.bf16.msra.mxu0 %v2940
        %3068 = vmatprep.subr.bf16.mxu0 %v2945
        %3069 = vmatpush1.bf16.msra.mxu0 %v2944
        %3070 = vmatprep.subr.bf16.mxu0 %v2949
        %3071 = vmatpush1.bf16.msra.mxu0 %v2948
        %3072 = vmatprep.subr.bf16.mxu0 %v2953
        %3073 = vmatpush1.bf16.msra.mxu0 %v2952
        %3074 = vmatprep.subr.bf16.mxu0 %v2957
        %3075 = vmatpush1.bf16.msra.mxu0 %v2956
        %3076 = vmatprep.subr.bf16.mxu0 %v2961
        %3077 = vmatpush1.bf16.msra.mxu0 %v2960
        %3078 = vmatprep.subr.bf16.mxu0 %v2965
        %3079 = vmatpush1.bf16.msra.mxu0 %v2964
        %3080 = vmatprep.subr.bf16.mxu0 %v2969
        %3081 = vmatpush1.bf16.msra.mxu0 %v2968
        %3082 = vmatprep.subr.bf16.mxu0 %v2973
        %3083 = vmatpush1.bf16.msra.mxu0 %v2972
        %3084 = vmatprep.subr.bf16.mxu0 %v2977
        %3085 = vmatpush1.bf16.msra.mxu0 %v2976
        %3086 = vmatprep.subr.bf16.mxu0 %v2981
        %3087 = vmatpush1.bf16.msra.mxu0 %v2980
        %3088 = vmatprep.subr.bf16.mxu0 %v2985
        %3089 = vmatpush1.bf16.msra.mxu0 %v2984
        %3090 = vmatprep.subr.bf16.mxu0 %v2989
        %3091 = vmatpush1.bf16.msra.mxu0 %v2988
        %3092 = vmatprep.subr.bf16.mxu0 %v2993
        %3093 = vmatpush1.bf16.msra.mxu0 %v2992
        %3094 = vmatprep.subr.bf16.mxu0 %v2997
        %3095 = vmatpush1.bf16.msra.mxu0 %v2996
        %3096 = vmatprep.mubr.bf16.mxu0 %v2741
        %3097 = vmatmul.mubr.bf16.gmra.mrb[0].mxu0 %v2734
        %v3098 = vpop.f32.mrb[0].mxu0
        %v3099 = vadd.f32 0.0, %v3098
        %v3100 = vpop.f32.mrb[0].mxu0
        %v3101 = vadd.f32 0.0, %v3100
        %v3102 = vpop.f32.mrb[0].mxu0
        %v3103 = vpop.f32.mrb[0].mxu0
        %3104 = vdwg.mxu0
        %3105 = vmatprep.subr.bf16.mxu0 %v2939
        %3106 = vmatpush1.bf16.msra.mxu0 %v2938
        %3107 = vmatprep.subr.bf16.mxu0 %v2943
        %3108 = vmatpush1.bf16.msra.mxu0 %v2942
        %3109 = vmatprep.subr.bf16.mxu0 %v2947
        %3110 = vmatpush1.bf16.msra.mxu0 %v2946
        %3111 = vmatprep.subr.bf16.mxu0 %v2951
        %3112 = vmatpush1.bf16.msra.mxu0 %v2950
        %3113 = vmatprep.subr.bf16.mxu0 %v2955
        %3114 = vmatpush1.bf16.msra.mxu0 %v2954
        %3115 = vmatprep.subr.bf16.mxu0 %v2959
        %3116 = vmatpush1.bf16.msra.mxu0 %v2958
        %3117 = vmatprep.subr.bf16.mxu0 %v2963
        %3118 = vmatpush1.bf16.msra.mxu0 %v2962
        %3119 = vmatprep.subr.bf16.mxu0 %v2967
        %3120 = vmatpush1.bf16.msra.mxu0 %v2966
        %3121 = vmatprep.subr.bf16.mxu0 %v2971
        %3122 = vmatpush1.bf16.msra.mxu0 %v2970
        %3123 = vmatprep.subr.bf16.mxu0 %v2975
        %3124 = vmatpush1.bf16.msra.mxu0 %v2974
        %3125 = vmatprep.subr.bf16.mxu0 %v2979
        %3126 = vmatpush1.bf16.msra.mxu0 %v2978
        %3127 = vmatprep.subr.bf16.mxu0 %v2983
        %3128 = vmatpush1.bf16.msra.mxu0 %v2982
        %3129 = vmatprep.subr.bf16.mxu0 %v2987
        %3130 = vmatpush1.bf16.msra.mxu0 %v2986
        %3131 = vmatprep.subr.bf16.mxu0 %v2991
        %3132 = vmatpush1.bf16.msra.mxu0 %v2990
        %3133 = vmatprep.subr.bf16.mxu0 %v2995
        %3134 = vmatpush1.bf16.msra.mxu0 %v2994
        %3135 = vmatprep.subr.bf16.mxu0 %v2999
        %3136 = vmatpush1.bf16.msra.mxu0 %v2998
        %3137 = vmatprep.mubr.bf16.mxu0 %v2741
        %3138 = vmatmul.mubr.bf16.gmra.mrb[0].mxu0 %v2734
        %v3139 = vpop.f32.mrb[0].mxu0
        %v3140 = vadd.f32 0.0, %v3139
        %v3141 = vpop.f32.mrb[0].mxu0
        %v3142 = vadd.f32 0.0, %v3141
        %v3143 = vpop.f32.mrb[0].mxu0
        %v3144 = vpop.f32.mrb[0].mxu0
        %3145 = vdwg.mxu0
        %v3150 = vcombine.low %v3099, %v3101
        %v3151 = vcombine.low %v3140, %v3142
        %v3153 = vunpack.c.l.s4 1983009808
        %v3154 = vunpack.c.0.s8 %v3153
        %v3155 = vlaneseq
        %v3156 = vshrl.u32 %v3155, 7
        %v3157 = vsub.s32 %v3154, %v3156
        %v3158 = vrot.slane %v3150, %v3157
        %v3160 = vunpack.c.l.s4 1983009808
        %v3161 = vunpack.c.0.s8 %v3160
        %v3162 = vlaneseq
        %v3163 = vshrl.u32 %v3162, 7
        %v3164 = vsub.s32 %v3161, %v3163
        %v3165 = vrot.slane %v3151, %v3164
        %v3166 = vcombine.low %v3158, %v3165
        %v3168 = vadd.f32 %v2649, %v3166
        %3169 = vst [vmem:[#allocation3] sm:$0xff] %v3168
        %p3170 = scmp.eq.s32.totalorder %s37, 1
        // Predicated region
        $region105: #{net_a4_forward.1} parent=63 // pred_check
          %p3171 = pneg %p3170
        $region106: #{net_a4_forward.1} parent=63 // pred_check_branch
          %3173 = sbr.rel (%p3171) target = $region108
        $region107: #{net_a4_forward.1} parent=63 // pred_region
          %v3174 = vld [vmem:[#allocation3] sm:$0xff]
          %v3175 = vld [vmem:[%s514] sm:$0xf]
          %v3177 = vlaneseq
          %v3178 = vshrl.u32 %v3177, 7
          %v3179 = vsub.s32 0, %v3178
          %v3180 = vrot.slane %v3175, %v3179
          %v3181 = vlaneseq
          %v3182 = vshrl.u32 %v3181, 7
          %v3183 = vsub.s32 1, %v3182
          %v3184 = vrot.slane %v3175, %v3183
          %v3185 = vlaneseq
          %v3186 = vshrl.u32 %v3185, 7
          %v3187 = vsub.s32 2, %v3186
          %v3188 = vrot.slane %v3175, %v3187
          %v3189 = vlaneseq
          %v3190 = vshrl.u32 %v3189, 7
          %v3191 = vsub.s32 3, %v3190
          %v3192 = vrot.slane %v3175, %v3191
          %v3193 = vcombine.low %v3180, %v3184
          %v3194 = vcombine.low %v3188, %v3192
          %v3196 = vunpack.c.l.s4 1983009808
          %v3197 = vunpack.c.0.s8 %v3196
          %v3198 = vlaneseq
          %v3199 = vshrl.u32 %v3198, 7
          %v3200 = vsub.s32 %v3197, %v3199
          %v3201 = vrot.slane %v3193, %v3200
          %v3203 = vunpack.c.l.s4 1983009808
          %v3204 = vunpack.c.0.s8 %v3203
          %v3205 = vlaneseq
          %v3206 = vshrl.u32 %v3205, 7
          %v3207 = vsub.s32 %v3204, %v3206
          %v3208 = vrot.slane %v3194, %v3207
          %v3209 = vcombine.low %v3201, %v3208
          %v3211 = vadd.f32 %v3174, %v3209
          %v3212 = vmax.f32 %v3211, 0.0
          %v3213 = vld [vmem:[#allocation4] sm:$0xff]
          %v3214 = vld [vmem:[#allocation4 + $0x8] sm:$0xff]
          %v3216 = vcombine.high %v3212, %v3212
          %v3218 = vunpack.c.l.s4 1983009808
          %v3219 = vunpack.c.0.s8 %v3218
          %v3220 = vlaneseq
          %v3221 = vshrl.u32 %v3220, 7
          %v3222 = vsub.s32 %v3219, %v3221
          %v3223 = vrot.slane %v3212, %v3222
          %v3225 = vunpack.c.l.s4 1983009808
          %v3226 = vunpack.c.0.s8 %v3225
          %v3227 = vlaneseq
          %v3228 = vshrl.u32 %v3227, 7
          %v3229 = vsub.s32 %v3226, %v3228
          %v3230 = vrot.slane %v3216, %v3229
          %v3231 = vcombine.high %v3223, %v3223
          %v3232 = vcombine.high %v3230, %v3230
          %v3237 = vpack.c.bf16 %v3223, %v3223
          %v3238 = vpack.c.bf16 %v3231, %v3231
          %v3239 = vpack.c.bf16 %v3230, %v3230
          %v3240 = vpack.c.bf16 %v3232, %v3232
          %v3241 = vld [vmem:[%s608] sm:$0xff]
          %v3242 = vld [vmem:[%s608 + $0x8] sm:$0xff]
          %v3243 = vld [vmem:[%s608 + $0x10] sm:$0xff]
          %v3244 = vld [vmem:[%s608 + $0x18] sm:$0xff]
          %v3245 = vld [vmem:[%s608 + $0x20] sm:$0xff]
          %v3246 = vld [vmem:[%s608 + $0x28] sm:$0xff]
          %v3247 = vld [vmem:[%s608 + $0x30] sm:$0xff]
          %v3248 = vld [vmem:[%s608 + $0x38] sm:$0xff]
          %v3249 = vld [vmem:[%s608 + $0x40] sm:$0xff]
          %v3250 = vld [vmem:[%s608 + $0x48] sm:$0xff]
          %v3251 = vld [vmem:[%s608 + $0x50] sm:$0xff]
          %v3252 = vld [vmem:[%s608 + $0x58] sm:$0xff]
          %v3253 = vld [vmem:[%s608 + $0x60] sm:$0xff]
          %v3254 = vld [vmem:[%s608 + $0x68] sm:$0xff]
          %v3255 = vld [vmem:[%s608 + $0x70] sm:$0xff]
          %v3256 = vld [vmem:[%s608 + $0x78] sm:$0xff]
          %v3257 = vld [vmem:[%s608 + $0x80] sm:$0xff]
          %v3258 = vld [vmem:[%s608 + $0x88] sm:$0xff]
          %v3259 = vld [vmem:[%s608 + $0x90] sm:$0xff]
          %v3260 = vld [vmem:[%s608 + $0x98] sm:$0xff]
          %v3261 = vld [vmem:[%s608 + $0xa0] sm:$0xff]
          %v3262 = vld [vmem:[%s608 + $0xa8] sm:$0xff]
          %v3263 = vld [vmem:[%s608 + $0xb0] sm:$0xff]
          %v3264 = vld [vmem:[%s608 + $0xb8] sm:$0xff]
          %v3265 = vld [vmem:[%s608 + $0xc0] sm:$0xff]
          %v3266 = vld [vmem:[%s608 + $0xc8] sm:$0xff]
          %v3267 = vld [vmem:[%s608 + $0xd0] sm:$0xff]
          %v3268 = vld [vmem:[%s608 + $0xd8] sm:$0xff]
          %v3269 = vld [vmem:[%s608 + $0xe0] sm:$0xff]
          %v3270 = vld [vmem:[%s608 + $0xe8] sm:$0xff]
          %v3271 = vld [vmem:[%s608 + $0xf0] sm:$0xff]
          %v3272 = vld [vmem:[%s608 + $0xf8] sm:$0xff]
          %v3273 = vld [vmem:[%s608 + $0x100] sm:$0xff]
          %v3274 = vld [vmem:[%s608 + $0x108] sm:$0xff]
          %v3275 = vld [vmem:[%s608 + $0x110] sm:$0xff]
          %v3276 = vld [vmem:[%s608 + $0x118] sm:$0xff]
          %v3277 = vld [vmem:[%s608 + $0x120] sm:$0xff]
          %v3278 = vld [vmem:[%s608 + $0x128] sm:$0xff]
          %v3279 = vld [vmem:[%s608 + $0x130] sm:$0xff]
          %v3280 = vld [vmem:[%s608 + $0x138] sm:$0xff]
          %v3281 = vld [vmem:[%s608 + $0x140] sm:$0xff]
          %v3282 = vld [vmem:[%s608 + $0x148] sm:$0xff]
          %v3283 = vld [vmem:[%s608 + $0x150] sm:$0xff]
          %v3284 = vld [vmem:[%s608 + $0x158] sm:$0xff]
          %v3285 = vld [vmem:[%s608 + $0x160] sm:$0xff]
          %v3286 = vld [vmem:[%s608 + $0x168] sm:$0xff]
          %v3287 = vld [vmem:[%s608 + $0x170] sm:$0xff]
          %v3288 = vld [vmem:[%s608 + $0x178] sm:$0xff]
          %v3289 = vld [vmem:[%s608 + $0x180] sm:$0xff]
          %v3290 = vld [vmem:[%s608 + $0x188] sm:$0xff]
          %v3291 = vld [vmem:[%s608 + $0x190] sm:$0xff]
          %v3292 = vld [vmem:[%s608 + $0x198] sm:$0xff]
          %v3293 = vld [vmem:[%s608 + $0x1a0] sm:$0xff]
          %v3294 = vld [vmem:[%s608 + $0x1a8] sm:$0xff]
          %v3295 = vld [vmem:[%s608 + $0x1b0] sm:$0xff]
          %v3296 = vld [vmem:[%s608 + $0x1b8] sm:$0xff]
          %v3297 = vld [vmem:[%s608 + $0x1c0] sm:$0xff]
          %v3298 = vld [vmem:[%s608 + $0x1c8] sm:$0xff]
          %v3299 = vld [vmem:[%s608 + $0x1d0] sm:$0xff]
          %v3300 = vld [vmem:[%s608 + $0x1d8] sm:$0xff]
          %v3301 = vld [vmem:[%s608 + $0x1e0] sm:$0xff]
          %v3302 = vld [vmem:[%s608 + $0x1e8] sm:$0xff]
          %v3303 = vld [vmem:[%s608 + $0x1f0] sm:$0xff]
          %v3304 = vld [vmem:[%s608 + $0x1f8] sm:$0xff]
          %v3305 = vld [vmem:[%s608 + $0x200] sm:$0xff]
          %v3306 = vld [vmem:[%s608 + $0x208] sm:$0xff]
          %v3307 = vld [vmem:[%s608 + $0x210] sm:$0xff]
          %v3308 = vld [vmem:[%s608 + $0x218] sm:$0xff]
          %v3309 = vld [vmem:[%s608 + $0x220] sm:$0xff]
          %v3310 = vld [vmem:[%s608 + $0x228] sm:$0xff]
          %v3311 = vld [vmem:[%s608 + $0x230] sm:$0xff]
          %v3312 = vld [vmem:[%s608 + $0x238] sm:$0xff]
          %v3313 = vld [vmem:[%s608 + $0x240] sm:$0xff]
          %v3314 = vld [vmem:[%s608 + $0x248] sm:$0xff]
          %v3315 = vld [vmem:[%s608 + $0x250] sm:$0xff]
          %v3316 = vld [vmem:[%s608 + $0x258] sm:$0xff]
          %v3317 = vld [vmem:[%s608 + $0x260] sm:$0xff]
          %v3318 = vld [vmem:[%s608 + $0x268] sm:$0xff]
          %v3319 = vld [vmem:[%s608 + $0x270] sm:$0xff]
          %v3320 = vld [vmem:[%s608 + $0x278] sm:$0xff]
          %v3321 = vld [vmem:[%s608 + $0x280] sm:$0xff]
          %v3322 = vld [vmem:[%s608 + $0x288] sm:$0xff]
          %v3323 = vld [vmem:[%s608 + $0x290] sm:$0xff]
          %v3324 = vld [vmem:[%s608 + $0x298] sm:$0xff]
          %v3325 = vld [vmem:[%s608 + $0x2a0] sm:$0xff]
          %v3326 = vld [vmem:[%s608 + $0x2a8] sm:$0xff]
          %v3327 = vld [vmem:[%s608 + $0x2b0] sm:$0xff]
          %v3328 = vld [vmem:[%s608 + $0x2b8] sm:$0xff]
          %v3329 = vld [vmem:[%s608 + $0x2c0] sm:$0xff]
          %v3330 = vld [vmem:[%s608 + $0x2c8] sm:$0xff]
          %v3331 = vld [vmem:[%s608 + $0x2d0] sm:$0xff]
          %v3332 = vld [vmem:[%s608 + $0x2d8] sm:$0xff]
          %v3333 = vld [vmem:[%s608 + $0x2e0] sm:$0xff]
          %v3334 = vld [vmem:[%s608 + $0x2e8] sm:$0xff]
          %v3335 = vld [vmem:[%s608 + $0x2f0] sm:$0xff]
          %v3336 = vld [vmem:[%s608 + $0x2f8] sm:$0xff]
          %v3337 = vld [vmem:[%s608 + $0x300] sm:$0xff]
          %v3338 = vld [vmem:[%s608 + $0x308] sm:$0xff]
          %v3339 = vld [vmem:[%s608 + $0x310] sm:$0xff]
          %v3340 = vld [vmem:[%s608 + $0x318] sm:$0xff]
          %v3341 = vld [vmem:[%s608 + $0x320] sm:$0xff]
          %v3342 = vld [vmem:[%s608 + $0x328] sm:$0xff]
          %v3343 = vld [vmem:[%s608 + $0x330] sm:$0xff]
          %v3344 = vld [vmem:[%s608 + $0x338] sm:$0xff]
          %v3345 = vld [vmem:[%s608 + $0x340] sm:$0xff]
          %v3346 = vld [vmem:[%s608 + $0x348] sm:$0xff]
          %v3347 = vld [vmem:[%s608 + $0x350] sm:$0xff]
          %v3348 = vld [vmem:[%s608 + $0x358] sm:$0xff]
          %v3349 = vld [vmem:[%s608 + $0x360] sm:$0xff]
          %v3350 = vld [vmem:[%s608 + $0x368] sm:$0xff]
          %v3351 = vld [vmem:[%s608 + $0x370] sm:$0xff]
          %v3352 = vld [vmem:[%s608 + $0x378] sm:$0xff]
          %v3353 = vld [vmem:[%s608 + $0x380] sm:$0xff]
          %v3354 = vld [vmem:[%s608 + $0x388] sm:$0xff]
          %v3355 = vld [vmem:[%s608 + $0x390] sm:$0xff]
          %v3356 = vld [vmem:[%s608 + $0x398] sm:$0xff]
          %v3357 = vld [vmem:[%s608 + $0x3a0] sm:$0xff]
          %v3358 = vld [vmem:[%s608 + $0x3a8] sm:$0xff]
          %v3359 = vld [vmem:[%s608 + $0x3b0] sm:$0xff]
          %v3360 = vld [vmem:[%s608 + $0x3b8] sm:$0xff]
          %v3361 = vld [vmem:[%s608 + $0x3c0] sm:$0xff]
          %v3362 = vld [vmem:[%s608 + $0x3c8] sm:$0xff]
          %v3363 = vld [vmem:[%s608 + $0x3d0] sm:$0xff]
          %v3364 = vld [vmem:[%s608 + $0x3d8] sm:$0xff]
          %v3365 = vld [vmem:[%s608 + $0x3e0] sm:$0xff]
          %v3366 = vld [vmem:[%s608 + $0x3e8] sm:$0xff]
          %v3367 = vld [vmem:[%s608 + $0x3f0] sm:$0xff]
          %v3368 = vld [vmem:[%s608 + $0x3f8] sm:$0xff]
          %v3369 = vld [vmem:[%s608 + $0x400] sm:$0xff]
          %v3370 = vld [vmem:[%s608 + $0x408] sm:$0xff]
          %v3371 = vld [vmem:[%s608 + $0x410] sm:$0xff]
          %v3372 = vld [vmem:[%s608 + $0x418] sm:$0xff]
          %v3373 = vld [vmem:[%s608 + $0x420] sm:$0xff]
          %v3374 = vld [vmem:[%s608 + $0x428] sm:$0xff]
          %v3375 = vld [vmem:[%s608 + $0x430] sm:$0xff]
          %v3376 = vld [vmem:[%s608 + $0x438] sm:$0xff]
          %v3377 = vld [vmem:[%s608 + $0x440] sm:$0xff]
          %v3378 = vld [vmem:[%s608 + $0x448] sm:$0xff]
          %v3379 = vld [vmem:[%s608 + $0x450] sm:$0xff]
          %v3380 = vld [vmem:[%s608 + $0x458] sm:$0xff]
          %v3381 = vld [vmem:[%s608 + $0x460] sm:$0xff]
          %v3382 = vld [vmem:[%s608 + $0x468] sm:$0xff]
          %v3383 = vld [vmem:[%s608 + $0x470] sm:$0xff]
          %v3384 = vld [vmem:[%s608 + $0x478] sm:$0xff]
          %v3385 = vld [vmem:[%s608 + $0x480] sm:$0xff]
          %v3386 = vld [vmem:[%s608 + $0x488] sm:$0xff]
          %v3387 = vld [vmem:[%s608 + $0x490] sm:$0xff]
          %v3388 = vld [vmem:[%s608 + $0x498] sm:$0xff]
          %v3389 = vld [vmem:[%s608 + $0x4a0] sm:$0xff]
          %v3390 = vld [vmem:[%s608 + $0x4a8] sm:$0xff]
          %v3391 = vld [vmem:[%s608 + $0x4b0] sm:$0xff]
          %v3392 = vld [vmem:[%s608 + $0x4b8] sm:$0xff]
          %v3393 = vld [vmem:[%s608 + $0x4c0] sm:$0xff]
          %v3394 = vld [vmem:[%s608 + $0x4c8] sm:$0xff]
          %v3395 = vld [vmem:[%s608 + $0x4d0] sm:$0xff]
          %v3396 = vld [vmem:[%s608 + $0x4d8] sm:$0xff]
          %v3397 = vld [vmem:[%s608 + $0x4e0] sm:$0xff]
          %v3398 = vld [vmem:[%s608 + $0x4e8] sm:$0xff]
          %v3399 = vld [vmem:[%s608 + $0x4f0] sm:$0xff]
          %v3400 = vld [vmem:[%s608 + $0x4f8] sm:$0xff]
          %v3401 = vld [vmem:[%s608 + $0x500] sm:$0xff]
          %v3402 = vld [vmem:[%s608 + $0x508] sm:$0xff]
          %v3403 = vld [vmem:[%s608 + $0x510] sm:$0xff]
          %v3404 = vld [vmem:[%s608 + $0x518] sm:$0xff]
          %v3405 = vld [vmem:[%s608 + $0x520] sm:$0xff]
          %v3406 = vld [vmem:[%s608 + $0x528] sm:$0xff]
          %v3407 = vld [vmem:[%s608 + $0x530] sm:$0xff]
          %v3408 = vld [vmem:[%s608 + $0x538] sm:$0xff]
          %v3409 = vld [vmem:[%s608 + $0x540] sm:$0xff]
          %v3410 = vld [vmem:[%s608 + $0x548] sm:$0xff]
          %v3411 = vld [vmem:[%s608 + $0x550] sm:$0xff]
          %v3412 = vld [vmem:[%s608 + $0x558] sm:$0xff]
          %v3413 = vld [vmem:[%s608 + $0x560] sm:$0xff]
          %v3414 = vld [vmem:[%s608 + $0x568] sm:$0xff]
          %v3415 = vld [vmem:[%s608 + $0x570] sm:$0xff]
          %v3416 = vld [vmem:[%s608 + $0x578] sm:$0xff]
          %v3417 = vld [vmem:[%s608 + $0x580] sm:$0xff]
          %v3418 = vld [vmem:[%s608 + $0x588] sm:$0xff]
          %v3419 = vld [vmem:[%s608 + $0x590] sm:$0xff]
          %v3420 = vld [vmem:[%s608 + $0x598] sm:$0xff]
          %v3421 = vld [vmem:[%s608 + $0x5a0] sm:$0xff]
          %v3422 = vld [vmem:[%s608 + $0x5a8] sm:$0xff]
          %v3423 = vld [vmem:[%s608 + $0x5b0] sm:$0xff]
          %v3424 = vld [vmem:[%s608 + $0x5b8] sm:$0xff]
          %v3425 = vld [vmem:[%s608 + $0x5c0] sm:$0xff]
          %v3426 = vld [vmem:[%s608 + $0x5c8] sm:$0xff]
          %v3427 = vld [vmem:[%s608 + $0x5d0] sm:$0xff]
          %v3428 = vld [vmem:[%s608 + $0x5d8] sm:$0xff]
          %v3429 = vld [vmem:[%s608 + $0x5e0] sm:$0xff]
          %v3430 = vld [vmem:[%s608 + $0x5e8] sm:$0xff]
          %v3431 = vld [vmem:[%s608 + $0x5f0] sm:$0xff]
          %v3432 = vld [vmem:[%s608 + $0x5f8] sm:$0xff]
          %v3433 = vld [vmem:[%s608 + $0x600] sm:$0xff]
          %v3434 = vld [vmem:[%s608 + $0x608] sm:$0xff]
          %v3435 = vld [vmem:[%s608 + $0x610] sm:$0xff]
          %v3436 = vld [vmem:[%s608 + $0x618] sm:$0xff]
          %v3437 = vld [vmem:[%s608 + $0x620] sm:$0xff]
          %v3438 = vld [vmem:[%s608 + $0x628] sm:$0xff]
          %v3439 = vld [vmem:[%s608 + $0x630] sm:$0xff]
          %v3440 = vld [vmem:[%s608 + $0x638] sm:$0xff]
          %v3441 = vld [vmem:[%s608 + $0x640] sm:$0xff]
          %v3442 = vld [vmem:[%s608 + $0x648] sm:$0xff]
          %v3443 = vld [vmem:[%s608 + $0x650] sm:$0xff]
          %v3444 = vld [vmem:[%s608 + $0x658] sm:$0xff]
          %v3445 = vld [vmem:[%s608 + $0x660] sm:$0xff]
          %v3446 = vld [vmem:[%s608 + $0x668] sm:$0xff]
          %v3447 = vld [vmem:[%s608 + $0x670] sm:$0xff]
          %v3448 = vld [vmem:[%s608 + $0x678] sm:$0xff]
          %v3449 = vld [vmem:[%s608 + $0x680] sm:$0xff]
          %v3450 = vld [vmem:[%s608 + $0x688] sm:$0xff]
          %v3451 = vld [vmem:[%s608 + $0x690] sm:$0xff]
          %v3452 = vld [vmem:[%s608 + $0x698] sm:$0xff]
          %v3453 = vld [vmem:[%s608 + $0x6a0] sm:$0xff]
          %v3454 = vld [vmem:[%s608 + $0x6a8] sm:$0xff]
          %v3455 = vld [vmem:[%s608 + $0x6b0] sm:$0xff]
          %v3456 = vld [vmem:[%s608 + $0x6b8] sm:$0xff]
          %v3457 = vld [vmem:[%s608 + $0x6c0] sm:$0xff]
          %v3458 = vld [vmem:[%s608 + $0x6c8] sm:$0xff]
          %v3459 = vld [vmem:[%s608 + $0x6d0] sm:$0xff]
          %v3460 = vld [vmem:[%s608 + $0x6d8] sm:$0xff]
          %v3461 = vld [vmem:[%s608 + $0x6e0] sm:$0xff]
          %v3462 = vld [vmem:[%s608 + $0x6e8] sm:$0xff]
          %v3463 = vld [vmem:[%s608 + $0x6f0] sm:$0xff]
          %v3464 = vld [vmem:[%s608 + $0x6f8] sm:$0xff]
          %v3465 = vld [vmem:[%s608 + $0x700] sm:$0xff]
          %v3466 = vld [vmem:[%s608 + $0x708] sm:$0xff]
          %v3467 = vld [vmem:[%s608 + $0x710] sm:$0xff]
          %v3468 = vld [vmem:[%s608 + $0x718] sm:$0xff]
          %v3469 = vld [vmem:[%s608 + $0x720] sm:$0xff]
          %v3470 = vld [vmem:[%s608 + $0x728] sm:$0xff]
          %v3471 = vld [vmem:[%s608 + $0x730] sm:$0xff]
          %v3472 = vld [vmem:[%s608 + $0x738] sm:$0xff]
          %v3473 = vld [vmem:[%s608 + $0x740] sm:$0xff]
          %v3474 = vld [vmem:[%s608 + $0x748] sm:$0xff]
          %v3475 = vld [vmem:[%s608 + $0x750] sm:$0xff]
          %v3476 = vld [vmem:[%s608 + $0x758] sm:$0xff]
          %v3477 = vld [vmem:[%s608 + $0x760] sm:$0xff]
          %v3478 = vld [vmem:[%s608 + $0x768] sm:$0xff]
          %v3479 = vld [vmem:[%s608 + $0x770] sm:$0xff]
          %v3480 = vld [vmem:[%s608 + $0x778] sm:$0xff]
          %v3481 = vld [vmem:[%s608 + $0x780] sm:$0xff]
          %v3482 = vld [vmem:[%s608 + $0x788] sm:$0xff]
          %v3483 = vld [vmem:[%s608 + $0x790] sm:$0xff]
          %v3484 = vld [vmem:[%s608 + $0x798] sm:$0xff]
          %v3485 = vld [vmem:[%s608 + $0x7a0] sm:$0xff]
          %v3486 = vld [vmem:[%s608 + $0x7a8] sm:$0xff]
          %v3487 = vld [vmem:[%s608 + $0x7b0] sm:$0xff]
          %v3488 = vld [vmem:[%s608 + $0x7b8] sm:$0xff]
          %v3489 = vld [vmem:[%s608 + $0x7c0] sm:$0xff]
          %v3490 = vld [vmem:[%s608 + $0x7c8] sm:$0xff]
          %v3491 = vld [vmem:[%s608 + $0x7d0] sm:$0xff]
          %v3492 = vld [vmem:[%s608 + $0x7d8] sm:$0xff]
          %v3493 = vld [vmem:[%s608 + $0x7e0] sm:$0xff]
          %v3494 = vld [vmem:[%s608 + $0x7e8] sm:$0xff]
          %v3495 = vld [vmem:[%s608 + $0x7f0] sm:$0xff]
          %v3496 = vld [vmem:[%s608 + $0x7f8] sm:$0xff]
          %v3753 = vunpack.c.l.b16 %v3241
          %v3754 = vunpack.c.h.b16 %v3241
          %v3755 = vunpack.c.l.b16 %v3242
          %v3756 = vunpack.c.h.b16 %v3242
          %v3757 = vunpack.c.l.b16 %v3243
          %v3758 = vunpack.c.h.b16 %v3243
          %v3759 = vunpack.c.l.b16 %v3244
          %v3760 = vunpack.c.h.b16 %v3244
          %v3761 = vunpack.c.l.b16 %v3245
          %v3762 = vunpack.c.h.b16 %v3245
          %v3763 = vunpack.c.l.b16 %v3246
          %v3764 = vunpack.c.h.b16 %v3246
          %v3765 = vunpack.c.l.b16 %v3247
          %v3766 = vunpack.c.h.b16 %v3247
          %v3767 = vunpack.c.l.b16 %v3248
          %v3768 = vunpack.c.h.b16 %v3248
          %v3769 = vunpack.c.l.b16 %v3249
          %v3770 = vunpack.c.h.b16 %v3249
          %v3771 = vunpack.c.l.b16 %v3250
          %v3772 = vunpack.c.h.b16 %v3250
          %v3773 = vunpack.c.l.b16 %v3251
          %v3774 = vunpack.c.h.b16 %v3251
          %v3775 = vunpack.c.l.b16 %v3252
          %v3776 = vunpack.c.h.b16 %v3252
          %v3777 = vunpack.c.l.b16 %v3253
          %v3778 = vunpack.c.h.b16 %v3253
          %v3779 = vunpack.c.l.b16 %v3254
          %v3780 = vunpack.c.h.b16 %v3254
          %v3781 = vunpack.c.l.b16 %v3255
          %v3782 = vunpack.c.h.b16 %v3255
          %v3783 = vunpack.c.l.b16 %v3256
          %v3784 = vunpack.c.h.b16 %v3256
          %v3785 = vunpack.c.l.b16 %v3257
          %v3786 = vunpack.c.h.b16 %v3257
          %v3787 = vunpack.c.l.b16 %v3258
          %v3788 = vunpack.c.h.b16 %v3258
          %v3789 = vunpack.c.l.b16 %v3259
          %v3790 = vunpack.c.h.b16 %v3259
          %v3791 = vunpack.c.l.b16 %v3260
          %v3792 = vunpack.c.h.b16 %v3260
          %v3793 = vunpack.c.l.b16 %v3261
          %v3794 = vunpack.c.h.b16 %v3261
          %v3795 = vunpack.c.l.b16 %v3262
          %v3796 = vunpack.c.h.b16 %v3262
          %v3797 = vunpack.c.l.b16 %v3263
          %v3798 = vunpack.c.h.b16 %v3263
          %v3799 = vunpack.c.l.b16 %v3264
          %v3800 = vunpack.c.h.b16 %v3264
          %v3801 = vunpack.c.l.b16 %v3265
          %v3802 = vunpack.c.h.b16 %v3265
          %v3803 = vunpack.c.l.b16 %v3266
          %v3804 = vunpack.c.h.b16 %v3266
          %v3805 = vunpack.c.l.b16 %v3267
          %v3806 = vunpack.c.h.b16 %v3267
          %v3807 = vunpack.c.l.b16 %v3268
          %v3808 = vunpack.c.h.b16 %v3268
          %v3809 = vunpack.c.l.b16 %v3269
          %v3810 = vunpack.c.h.b16 %v3269
          %v3811 = vunpack.c.l.b16 %v3270
          %v3812 = vunpack.c.h.b16 %v3270
          %v3813 = vunpack.c.l.b16 %v3271
          %v3814 = vunpack.c.h.b16 %v3271
          %v3815 = vunpack.c.l.b16 %v3272
          %v3816 = vunpack.c.h.b16 %v3272
          %v3817 = vunpack.c.l.b16 %v3273
          %v3818 = vunpack.c.h.b16 %v3273
          %v3819 = vunpack.c.l.b16 %v3274
          %v3820 = vunpack.c.h.b16 %v3274
          %v3821 = vunpack.c.l.b16 %v3275
          %v3822 = vunpack.c.h.b16 %v3275
          %v3823 = vunpack.c.l.b16 %v3276
          %v3824 = vunpack.c.h.b16 %v3276
          %v3825 = vunpack.c.l.b16 %v3277
          %v3826 = vunpack.c.h.b16 %v3277
          %v3827 = vunpack.c.l.b16 %v3278
          %v3828 = vunpack.c.h.b16 %v3278
          %v3829 = vunpack.c.l.b16 %v3279
          %v3830 = vunpack.c.h.b16 %v3279
          %v3831 = vunpack.c.l.b16 %v3280
          %v3832 = vunpack.c.h.b16 %v3280
          %v3833 = vunpack.c.l.b16 %v3281
          %v3834 = vunpack.c.h.b16 %v3281
          %v3835 = vunpack.c.l.b16 %v3282
          %v3836 = vunpack.c.h.b16 %v3282
          %v3837 = vunpack.c.l.b16 %v3283
          %v3838 = vunpack.c.h.b16 %v3283
          %v3839 = vunpack.c.l.b16 %v3284
          %v3840 = vunpack.c.h.b16 %v3284
          %v3841 = vunpack.c.l.b16 %v3285
          %v3842 = vunpack.c.h.b16 %v3285
          %v3843 = vunpack.c.l.b16 %v3286
          %v3844 = vunpack.c.h.b16 %v3286
          %v3845 = vunpack.c.l.b16 %v3287
          %v3846 = vunpack.c.h.b16 %v3287
          %v3847 = vunpack.c.l.b16 %v3288
          %v3848 = vunpack.c.h.b16 %v3288
          %v3849 = vunpack.c.l.b16 %v3289
          %v3850 = vunpack.c.h.b16 %v3289
          %v3851 = vunpack.c.l.b16 %v3290
          %v3852 = vunpack.c.h.b16 %v3290
          %v3853 = vunpack.c.l.b16 %v3291
          %v3854 = vunpack.c.h.b16 %v3291
          %v3855 = vunpack.c.l.b16 %v3292
          %v3856 = vunpack.c.h.b16 %v3292
          %v3857 = vunpack.c.l.b16 %v3293
          %v3858 = vunpack.c.h.b16 %v3293
          %v3859 = vunpack.c.l.b16 %v3294
          %v3860 = vunpack.c.h.b16 %v3294
          %v3861 = vunpack.c.l.b16 %v3295
          %v3862 = vunpack.c.h.b16 %v3295
          %v3863 = vunpack.c.l.b16 %v3296
          %v3864 = vunpack.c.h.b16 %v3296
          %v3865 = vunpack.c.l.b16 %v3297
          %v3866 = vunpack.c.h.b16 %v3297
          %v3867 = vunpack.c.l.b16 %v3298
          %v3868 = vunpack.c.h.b16 %v3298
          %v3869 = vunpack.c.l.b16 %v3299
          %v3870 = vunpack.c.h.b16 %v3299
          %v3871 = vunpack.c.l.b16 %v3300
          %v3872 = vunpack.c.h.b16 %v3300
          %v3873 = vunpack.c.l.b16 %v3301
          %v3874 = vunpack.c.h.b16 %v3301
          %v3875 = vunpack.c.l.b16 %v3302
          %v3876 = vunpack.c.h.b16 %v3302
          %v3877 = vunpack.c.l.b16 %v3303
          %v3878 = vunpack.c.h.b16 %v3303
          %v3879 = vunpack.c.l.b16 %v3304
          %v3880 = vunpack.c.h.b16 %v3304
          %v3881 = vunpack.c.l.b16 %v3305
          %v3882 = vunpack.c.h.b16 %v3305
          %v3883 = vunpack.c.l.b16 %v3306
          %v3884 = vunpack.c.h.b16 %v3306
          %v3885 = vunpack.c.l.b16 %v3307
          %v3886 = vunpack.c.h.b16 %v3307
          %v3887 = vunpack.c.l.b16 %v3308
          %v3888 = vunpack.c.h.b16 %v3308
          %v3889 = vunpack.c.l.b16 %v3309
          %v3890 = vunpack.c.h.b16 %v3309
          %v3891 = vunpack.c.l.b16 %v3310
          %v3892 = vunpack.c.h.b16 %v3310
          %v3893 = vunpack.c.l.b16 %v3311
          %v3894 = vunpack.c.h.b16 %v3311
          %v3895 = vunpack.c.l.b16 %v3312
          %v3896 = vunpack.c.h.b16 %v3312
          %v3897 = vunpack.c.l.b16 %v3313
          %v3898 = vunpack.c.h.b16 %v3313
          %v3899 = vunpack.c.l.b16 %v3314
          %v3900 = vunpack.c.h.b16 %v3314
          %v3901 = vunpack.c.l.b16 %v3315
          %v3902 = vunpack.c.h.b16 %v3315
          %v3903 = vunpack.c.l.b16 %v3316
          %v3904 = vunpack.c.h.b16 %v3316
          %v3905 = vunpack.c.l.b16 %v3317
          %v3906 = vunpack.c.h.b16 %v3317
          %v3907 = vunpack.c.l.b16 %v3318
          %v3908 = vunpack.c.h.b16 %v3318
          %v3909 = vunpack.c.l.b16 %v3319
          %v3910 = vunpack.c.h.b16 %v3319
          %v3911 = vunpack.c.l.b16 %v3320
          %v3912 = vunpack.c.h.b16 %v3320
          %v3913 = vunpack.c.l.b16 %v3321
          %v3914 = vunpack.c.h.b16 %v3321
          %v3915 = vunpack.c.l.b16 %v3322
          %v3916 = vunpack.c.h.b16 %v3322
          %v3917 = vunpack.c.l.b16 %v3323
          %v3918 = vunpack.c.h.b16 %v3323
          %v3919 = vunpack.c.l.b16 %v3324
          %v3920 = vunpack.c.h.b16 %v3324
          %v3921 = vunpack.c.l.b16 %v3325
          %v3922 = vunpack.c.h.b16 %v3325
          %v3923 = vunpack.c.l.b16 %v3326
          %v3924 = vunpack.c.h.b16 %v3326
          %v3925 = vunpack.c.l.b16 %v3327
          %v3926 = vunpack.c.h.b16 %v3327
          %v3927 = vunpack.c.l.b16 %v3328
          %v3928 = vunpack.c.h.b16 %v3328
          %v3929 = vunpack.c.l.b16 %v3329
          %v3930 = vunpack.c.h.b16 %v3329
          %v3931 = vunpack.c.l.b16 %v3330
          %v3932 = vunpack.c.h.b16 %v3330
          %v3933 = vunpack.c.l.b16 %v3331
          %v3934 = vunpack.c.h.b16 %v3331
          %v3935 = vunpack.c.l.b16 %v3332
          %v3936 = vunpack.c.h.b16 %v3332
          %v3937 = vunpack.c.l.b16 %v3333
          %v3938 = vunpack.c.h.b16 %v3333
          %v3939 = vunpack.c.l.b16 %v3334
          %v3940 = vunpack.c.h.b16 %v3334
          %v3941 = vunpack.c.l.b16 %v3335
          %v3942 = vunpack.c.h.b16 %v3335
          %v3943 = vunpack.c.l.b16 %v3336
          %v3944 = vunpack.c.h.b16 %v3336
          %v3945 = vunpack.c.l.b16 %v3337
          %v3946 = vunpack.c.h.b16 %v3337
          %v3947 = vunpack.c.l.b16 %v3338
          %v3948 = vunpack.c.h.b16 %v3338
          %v3949 = vunpack.c.l.b16 %v3339
          %v3950 = vunpack.c.h.b16 %v3339
          %v3951 = vunpack.c.l.b16 %v3340
          %v3952 = vunpack.c.h.b16 %v3340
          %v3953 = vunpack.c.l.b16 %v3341
          %v3954 = vunpack.c.h.b16 %v3341
          %v3955 = vunpack.c.l.b16 %v3342
          %v3956 = vunpack.c.h.b16 %v3342
          %v3957 = vunpack.c.l.b16 %v3343
          %v3958 = vunpack.c.h.b16 %v3343
          %v3959 = vunpack.c.l.b16 %v3344
          %v3960 = vunpack.c.h.b16 %v3344
          %v3961 = vunpack.c.l.b16 %v3345
          %v3962 = vunpack.c.h.b16 %v3345
          %v3963 = vunpack.c.l.b16 %v3346
          %v3964 = vunpack.c.h.b16 %v3346
          %v3965 = vunpack.c.l.b16 %v3347
          %v3966 = vunpack.c.h.b16 %v3347
          %v3967 = vunpack.c.l.b16 %v3348
          %v3968 = vunpack.c.h.b16 %v3348
          %v3969 = vunpack.c.l.b16 %v3349
          %v3970 = vunpack.c.h.b16 %v3349
          %v3971 = vunpack.c.l.b16 %v3350
          %v3972 = vunpack.c.h.b16 %v3350
          %v3973 = vunpack.c.l.b16 %v3351
          %v3974 = vunpack.c.h.b16 %v3351
          %v3975 = vunpack.c.l.b16 %v3352
          %v3976 = vunpack.c.h.b16 %v3352
          %v3977 = vunpack.c.l.b16 %v3353
          %v3978 = vunpack.c.h.b16 %v3353
          %v3979 = vunpack.c.l.b16 %v3354
          %v3980 = vunpack.c.h.b16 %v3354
          %v3981 = vunpack.c.l.b16 %v3355
          %v3982 = vunpack.c.h.b16 %v3355
          %v3983 = vunpack.c.l.b16 %v3356
          %v3984 = vunpack.c.h.b16 %v3356
          %v3985 = vunpack.c.l.b16 %v3357
          %v3986 = vunpack.c.h.b16 %v3357
          %v3987 = vunpack.c.l.b16 %v3358
          %v3988 = vunpack.c.h.b16 %v3358
          %v3989 = vunpack.c.l.b16 %v3359
          %v3990 = vunpack.c.h.b16 %v3359
          %v3991 = vunpack.c.l.b16 %v3360
          %v3992 = vunpack.c.h.b16 %v3360
          %v3993 = vunpack.c.l.b16 %v3361
          %v3994 = vunpack.c.h.b16 %v3361
          %v3995 = vunpack.c.l.b16 %v3362
          %v3996 = vunpack.c.h.b16 %v3362
          %v3997 = vunpack.c.l.b16 %v3363
          %v3998 = vunpack.c.h.b16 %v3363
          %v3999 = vunpack.c.l.b16 %v3364
          %v4000 = vunpack.c.h.b16 %v3364
          %v4001 = vunpack.c.l.b16 %v3365
          %v4002 = vunpack.c.h.b16 %v3365
          %v4003 = vunpack.c.l.b16 %v3366
          %v4004 = vunpack.c.h.b16 %v3366
          %v4005 = vunpack.c.l.b16 %v3367
          %v4006 = vunpack.c.h.b16 %v3367
          %v4007 = vunpack.c.l.b16 %v3368
          %v4008 = vunpack.c.h.b16 %v3368
          %v4009 = vunpack.c.l.b16 %v3369
          %v4010 = vunpack.c.h.b16 %v3369
          %v4011 = vunpack.c.l.b16 %v3370
          %v4012 = vunpack.c.h.b16 %v3370
          %v4013 = vunpack.c.l.b16 %v3371
          %v4014 = vunpack.c.h.b16 %v3371
          %v4015 = vunpack.c.l.b16 %v3372
          %v4016 = vunpack.c.h.b16 %v3372
          %v4017 = vunpack.c.l.b16 %v3373
          %v4018 = vunpack.c.h.b16 %v3373
          %v4019 = vunpack.c.l.b16 %v3374
          %v4020 = vunpack.c.h.b16 %v3374
          %v4021 = vunpack.c.l.b16 %v3375
          %v4022 = vunpack.c.h.b16 %v3375
          %v4023 = vunpack.c.l.b16 %v3376
          %v4024 = vunpack.c.h.b16 %v3376
          %v4025 = vunpack.c.l.b16 %v3377
          %v4026 = vunpack.c.h.b16 %v3377
          %v4027 = vunpack.c.l.b16 %v3378
          %v4028 = vunpack.c.h.b16 %v3378
          %v4029 = vunpack.c.l.b16 %v3379
          %v4030 = vunpack.c.h.b16 %v3379
          %v4031 = vunpack.c.l.b16 %v3380
          %v4032 = vunpack.c.h.b16 %v3380
          %v4033 = vunpack.c.l.b16 %v3381
          %v4034 = vunpack.c.h.b16 %v3381
          %v4035 = vunpack.c.l.b16 %v3382
          %v4036 = vunpack.c.h.b16 %v3382
          %v4037 = vunpack.c.l.b16 %v3383
          %v4038 = vunpack.c.h.b16 %v3383
          %v4039 = vunpack.c.l.b16 %v3384
          %v4040 = vunpack.c.h.b16 %v3384
          %v4041 = vunpack.c.l.b16 %v3385
          %v4042 = vunpack.c.h.b16 %v3385
          %v4043 = vunpack.c.l.b16 %v3386
          %v4044 = vunpack.c.h.b16 %v3386
          %v4045 = vunpack.c.l.b16 %v3387
          %v4046 = vunpack.c.h.b16 %v3387
          %v4047 = vunpack.c.l.b16 %v3388
          %v4048 = vunpack.c.h.b16 %v3388
          %v4049 = vunpack.c.l.b16 %v3389
          %v4050 = vunpack.c.h.b16 %v3389
          %v4051 = vunpack.c.l.b16 %v3390
          %v4052 = vunpack.c.h.b16 %v3390
          %v4053 = vunpack.c.l.b16 %v3391
          %v4054 = vunpack.c.h.b16 %v3391
          %v4055 = vunpack.c.l.b16 %v3392
          %v4056 = vunpack.c.h.b16 %v3392
          %v4057 = vunpack.c.l.b16 %v3393
          %v4058 = vunpack.c.h.b16 %v3393
          %v4059 = vunpack.c.l.b16 %v3394
          %v4060 = vunpack.c.h.b16 %v3394
          %v4061 = vunpack.c.l.b16 %v3395
          %v4062 = vunpack.c.h.b16 %v3395
          %v4063 = vunpack.c.l.b16 %v3396
          %v4064 = vunpack.c.h.b16 %v3396
          %v4065 = vunpack.c.l.b16 %v3397
          %v4066 = vunpack.c.h.b16 %v3397
          %v4067 = vunpack.c.l.b16 %v3398
          %v4068 = vunpack.c.h.b16 %v3398
          %v4069 = vunpack.c.l.b16 %v3399
          %v4070 = vunpack.c.h.b16 %v3399
          %v4071 = vunpack.c.l.b16 %v3400
          %v4072 = vunpack.c.h.b16 %v3400
          %v4073 = vunpack.c.l.b16 %v3401
          %v4074 = vunpack.c.h.b16 %v3401
          %v4075 = vunpack.c.l.b16 %v3402
          %v4076 = vunpack.c.h.b16 %v3402
          %v4077 = vunpack.c.l.b16 %v3403
          %v4078 = vunpack.c.h.b16 %v3403
          %v4079 = vunpack.c.l.b16 %v3404
          %v4080 = vunpack.c.h.b16 %v3404
          %v4081 = vunpack.c.l.b16 %v3405
          %v4082 = vunpack.c.h.b16 %v3405
          %v4083 = vunpack.c.l.b16 %v3406
          %v4084 = vunpack.c.h.b16 %v3406
          %v4085 = vunpack.c.l.b16 %v3407
          %v4086 = vunpack.c.h.b16 %v3407
          %v4087 = vunpack.c.l.b16 %v3408
          %v4088 = vunpack.c.h.b16 %v3408
          %v4089 = vunpack.c.l.b16 %v3409
          %v4090 = vunpack.c.h.b16 %v3409
          %v4091 = vunpack.c.l.b16 %v3410
          %v4092 = vunpack.c.h.b16 %v3410
          %v4093 = vunpack.c.l.b16 %v3411
          %v4094 = vunpack.c.h.b16 %v3411
          %v4095 = vunpack.c.l.b16 %v3412
          %v4096 = vunpack.c.h.b16 %v3412
          %v4097 = vunpack.c.l.b16 %v3413
          %v4098 = vunpack.c.h.b16 %v3413
          %v4099 = vunpack.c.l.b16 %v3414
          %v4100 = vunpack.c.h.b16 %v3414
          %v4101 = vunpack.c.l.b16 %v3415
          %v4102 = vunpack.c.h.b16 %v3415
          %v4103 = vunpack.c.l.b16 %v3416
          %v4104 = vunpack.c.h.b16 %v3416
          %v4105 = vunpack.c.l.b16 %v3417
          %v4106 = vunpack.c.h.b16 %v3417
          %v4107 = vunpack.c.l.b16 %v3418
          %v4108 = vunpack.c.h.b16 %v3418
          %v4109 = vunpack.c.l.b16 %v3419
          %v4110 = vunpack.c.h.b16 %v3419
          %v4111 = vunpack.c.l.b16 %v3420
          %v4112 = vunpack.c.h.b16 %v3420
          %v4113 = vunpack.c.l.b16 %v3421
          %v4114 = vunpack.c.h.b16 %v3421
          %v4115 = vunpack.c.l.b16 %v3422
          %v4116 = vunpack.c.h.b16 %v3422
          %v4117 = vunpack.c.l.b16 %v3423
          %v4118 = vunpack.c.h.b16 %v3423
          %v4119 = vunpack.c.l.b16 %v3424
          %v4120 = vunpack.c.h.b16 %v3424
          %v4121 = vunpack.c.l.b16 %v3425
          %v4122 = vunpack.c.h.b16 %v3425
          %v4123 = vunpack.c.l.b16 %v3426
          %v4124 = vunpack.c.h.b16 %v3426
          %v4125 = vunpack.c.l.b16 %v3427
          %v4126 = vunpack.c.h.b16 %v3427
          %v4127 = vunpack.c.l.b16 %v3428
          %v4128 = vunpack.c.h.b16 %v3428
          %v4129 = vunpack.c.l.b16 %v3429
          %v4130 = vunpack.c.h.b16 %v3429
          %v4131 = vunpack.c.l.b16 %v3430
          %v4132 = vunpack.c.h.b16 %v3430
          %v4133 = vunpack.c.l.b16 %v3431
          %v4134 = vunpack.c.h.b16 %v3431
          %v4135 = vunpack.c.l.b16 %v3432
          %v4136 = vunpack.c.h.b16 %v3432
          %v4137 = vunpack.c.l.b16 %v3433
          %v4138 = vunpack.c.h.b16 %v3433
          %v4139 = vunpack.c.l.b16 %v3434
          %v4140 = vunpack.c.h.b16 %v3434
          %v4141 = vunpack.c.l.b16 %v3435
          %v4142 = vunpack.c.h.b16 %v3435
          %v4143 = vunpack.c.l.b16 %v3436
          %v4144 = vunpack.c.h.b16 %v3436
          %v4145 = vunpack.c.l.b16 %v3437
          %v4146 = vunpack.c.h.b16 %v3437
          %v4147 = vunpack.c.l.b16 %v3438
          %v4148 = vunpack.c.h.b16 %v3438
          %v4149 = vunpack.c.l.b16 %v3439
          %v4150 = vunpack.c.h.b16 %v3439
          %v4151 = vunpack.c.l.b16 %v3440
          %v4152 = vunpack.c.h.b16 %v3440
          %v4153 = vunpack.c.l.b16 %v3441
          %v4154 = vunpack.c.h.b16 %v3441
          %v4155 = vunpack.c.l.b16 %v3442
          %v4156 = vunpack.c.h.b16 %v3442
          %v4157 = vunpack.c.l.b16 %v3443
          %v4158 = vunpack.c.h.b16 %v3443
          %v4159 = vunpack.c.l.b16 %v3444
          %v4160 = vunpack.c.h.b16 %v3444
          %v4161 = vunpack.c.l.b16 %v3445
          %v4162 = vunpack.c.h.b16 %v3445
          %v4163 = vunpack.c.l.b16 %v3446
          %v4164 = vunpack.c.h.b16 %v3446
          %v4165 = vunpack.c.l.b16 %v3447
          %v4166 = vunpack.c.h.b16 %v3447
          %v4167 = vunpack.c.l.b16 %v3448
          %v4168 = vunpack.c.h.b16 %v3448
          %v4169 = vunpack.c.l.b16 %v3449
          %v4170 = vunpack.c.h.b16 %v3449
          %v4171 = vunpack.c.l.b16 %v3450
          %v4172 = vunpack.c.h.b16 %v3450
          %v4173 = vunpack.c.l.b16 %v3451
          %v4174 = vunpack.c.h.b16 %v3451
          %v4175 = vunpack.c.l.b16 %v3452
          %v4176 = vunpack.c.h.b16 %v3452
          %v4177 = vunpack.c.l.b16 %v3453
          %v4178 = vunpack.c.h.b16 %v3453
          %v4179 = vunpack.c.l.b16 %v3454
          %v4180 = vunpack.c.h.b16 %v3454
          %v4181 = vunpack.c.l.b16 %v3455
          %v4182 = vunpack.c.h.b16 %v3455
          %v4183 = vunpack.c.l.b16 %v3456
          %v4184 = vunpack.c.h.b16 %v3456
          %v4185 = vunpack.c.l.b16 %v3457
          %v4186 = vunpack.c.h.b16 %v3457
          %v4187 = vunpack.c.l.b16 %v3458
          %v4188 = vunpack.c.h.b16 %v3458
          %v4189 = vunpack.c.l.b16 %v3459
          %v4190 = vunpack.c.h.b16 %v3459
          %v4191 = vunpack.c.l.b16 %v3460
          %v4192 = vunpack.c.h.b16 %v3460
          %v4193 = vunpack.c.l.b16 %v3461
          %v4194 = vunpack.c.h.b16 %v3461
          %v4195 = vunpack.c.l.b16 %v3462
          %v4196 = vunpack.c.h.b16 %v3462
          %v4197 = vunpack.c.l.b16 %v3463
          %v4198 = vunpack.c.h.b16 %v3463
          %v4199 = vunpack.c.l.b16 %v3464
          %v4200 = vunpack.c.h.b16 %v3464
          %v4201 = vunpack.c.l.b16 %v3465
          %v4202 = vunpack.c.h.b16 %v3465
          %v4203 = vunpack.c.l.b16 %v3466
          %v4204 = vunpack.c.h.b16 %v3466
          %v4205 = vunpack.c.l.b16 %v3467
          %v4206 = vunpack.c.h.b16 %v3467
          %v4207 = vunpack.c.l.b16 %v3468
          %v4208 = vunpack.c.h.b16 %v3468
          %v4209 = vunpack.c.l.b16 %v3469
          %v4210 = vunpack.c.h.b16 %v3469
          %v4211 = vunpack.c.l.b16 %v3470
          %v4212 = vunpack.c.h.b16 %v3470
          %v4213 = vunpack.c.l.b16 %v3471
          %v4214 = vunpack.c.h.b16 %v3471
          %v4215 = vunpack.c.l.b16 %v3472
          %v4216 = vunpack.c.h.b16 %v3472
          %v4217 = vunpack.c.l.b16 %v3473
          %v4218 = vunpack.c.h.b16 %v3473
          %v4219 = vunpack.c.l.b16 %v3474
          %v4220 = vunpack.c.h.b16 %v3474
          %v4221 = vunpack.c.l.b16 %v3475
          %v4222 = vunpack.c.h.b16 %v3475
          %v4223 = vunpack.c.l.b16 %v3476
          %v4224 = vunpack.c.h.b16 %v3476
          %v4225 = vunpack.c.l.b16 %v3477
          %v4226 = vunpack.c.h.b16 %v3477
          %v4227 = vunpack.c.l.b16 %v3478
          %v4228 = vunpack.c.h.b16 %v3478
          %v4229 = vunpack.c.l.b16 %v3479
          %v4230 = vunpack.c.h.b16 %v3479
          %v4231 = vunpack.c.l.b16 %v3480
          %v4232 = vunpack.c.h.b16 %v3480
          %v4233 = vunpack.c.l.b16 %v3481
          %v4234 = vunpack.c.h.b16 %v3481
          %v4235 = vunpack.c.l.b16 %v3482
          %v4236 = vunpack.c.h.b16 %v3482
          %v4237 = vunpack.c.l.b16 %v3483
          %v4238 = vunpack.c.h.b16 %v3483
          %v4239 = vunpack.c.l.b16 %v3484
          %v4240 = vunpack.c.h.b16 %v3484
          %v4241 = vunpack.c.l.b16 %v3485
          %v4242 = vunpack.c.h.b16 %v3485
          %v4243 = vunpack.c.l.b16 %v3486
          %v4244 = vunpack.c.h.b16 %v3486
          %v4245 = vunpack.c.l.b16 %v3487
          %v4246 = vunpack.c.h.b16 %v3487
          %v4247 = vunpack.c.l.b16 %v3488
          %v4248 = vunpack.c.h.b16 %v3488
          %v4249 = vunpack.c.l.b16 %v3489
          %v4250 = vunpack.c.h.b16 %v3489
          %v4251 = vunpack.c.l.b16 %v3490
          %v4252 = vunpack.c.h.b16 %v3490
          %v4253 = vunpack.c.l.b16 %v3491
          %v4254 = vunpack.c.h.b16 %v3491
          %v4255 = vunpack.c.l.b16 %v3492
          %v4256 = vunpack.c.h.b16 %v3492
          %v4257 = vunpack.c.l.b16 %v3493
          %v4258 = vunpack.c.h.b16 %v3493
          %v4259 = vunpack.c.l.b16 %v3494
          %v4260 = vunpack.c.h.b16 %v3494
          %v4261 = vunpack.c.l.b16 %v3495
          %v4262 = vunpack.c.h.b16 %v3495
          %v4263 = vunpack.c.l.b16 %v3496
          %v4264 = vunpack.c.h.b16 %v3496
          %v4265 = vpack.c.b16 %v3761, %v3753
          %v4266 = vpack.c.b16 %v3762, %v3754
          %v4267 = vpack.c.b16 %v3763, %v3755
          %v4268 = vpack.c.b16 %v3764, %v3756
          %v4269 = vpack.c.b16 %v3765, %v3757
          %v4270 = vpack.c.b16 %v3766, %v3758
          %v4271 = vpack.c.b16 %v3767, %v3759
          %v4272 = vpack.c.b16 %v3768, %v3760
          %v4273 = vpack.c.b16 %v3777, %v3769
          %v4274 = vpack.c.b16 %v3778, %v3770
          %v4275 = vpack.c.b16 %v3779, %v3771
          %v4276 = vpack.c.b16 %v3780, %v3772
          %v4277 = vpack.c.b16 %v3781, %v3773
          %v4278 = vpack.c.b16 %v3782, %v3774
          %v4279 = vpack.c.b16 %v3783, %v3775
          %v4280 = vpack.c.b16 %v3784, %v3776
          %v4281 = vpack.c.b16 %v3793, %v3785
          %v4282 = vpack.c.b16 %v3794, %v3786
          %v4283 = vpack.c.b16 %v3795, %v3787
          %v4284 = vpack.c.b16 %v3796, %v3788
          %v4285 = vpack.c.b16 %v3797, %v3789
          %v4286 = vpack.c.b16 %v3798, %v3790
          %v4287 = vpack.c.b16 %v3799, %v3791
          %v4288 = vpack.c.b16 %v3800, %v3792
          %v4289 = vpack.c.b16 %v3809, %v3801
          %v4290 = vpack.c.b16 %v3810, %v3802
          %v4291 = vpack.c.b16 %v3811, %v3803
          %v4292 = vpack.c.b16 %v3812, %v3804
          %v4293 = vpack.c.b16 %v3813, %v3805
          %v4294 = vpack.c.b16 %v3814, %v3806
          %v4295 = vpack.c.b16 %v3815, %v3807
          %v4296 = vpack.c.b16 %v3816, %v3808
          %v4297 = vpack.c.b16 %v3825, %v3817
          %v4298 = vpack.c.b16 %v3826, %v3818
          %v4299 = vpack.c.b16 %v3827, %v3819
          %v4300 = vpack.c.b16 %v3828, %v3820
          %v4301 = vpack.c.b16 %v3829, %v3821
          %v4302 = vpack.c.b16 %v3830, %v3822
          %v4303 = vpack.c.b16 %v3831, %v3823
          %v4304 = vpack.c.b16 %v3832, %v3824
          %v4305 = vpack.c.b16 %v3841, %v3833
          %v4306 = vpack.c.b16 %v3842, %v3834
          %v4307 = vpack.c.b16 %v3843, %v3835
          %v4308 = vpack.c.b16 %v3844, %v3836
          %v4309 = vpack.c.b16 %v3845, %v3837
          %v4310 = vpack.c.b16 %v3846, %v3838
          %v4311 = vpack.c.b16 %v3847, %v3839
          %v4312 = vpack.c.b16 %v3848, %v3840
          %v4313 = vpack.c.b16 %v3857, %v3849
          %v4314 = vpack.c.b16 %v3858, %v3850
          %v4315 = vpack.c.b16 %v3859, %v3851
          %v4316 = vpack.c.b16 %v3860, %v3852
          %v4317 = vpack.c.b16 %v3861, %v3853
          %v4318 = vpack.c.b16 %v3862, %v3854
          %v4319 = vpack.c.b16 %v3863, %v3855
          %v4320 = vpack.c.b16 %v3864, %v3856
          %v4321 = vpack.c.b16 %v3873, %v3865
          %v4322 = vpack.c.b16 %v3874, %v3866
          %v4323 = vpack.c.b16 %v3875, %v3867
          %v4324 = vpack.c.b16 %v3876, %v3868
          %v4325 = vpack.c.b16 %v3877, %v3869
          %v4326 = vpack.c.b16 %v3878, %v3870
          %v4327 = vpack.c.b16 %v3879, %v3871
          %v4328 = vpack.c.b16 %v3880, %v3872
          %v4329 = vpack.c.b16 %v3889, %v3881
          %v4330 = vpack.c.b16 %v3890, %v3882
          %v4331 = vpack.c.b16 %v3891, %v3883
          %v4332 = vpack.c.b16 %v3892, %v3884
          %v4333 = vpack.c.b16 %v3893, %v3885
          %v4334 = vpack.c.b16 %v3894, %v3886
          %v4335 = vpack.c.b16 %v3895, %v3887
          %v4336 = vpack.c.b16 %v3896, %v3888
          %v4337 = vpack.c.b16 %v3905, %v3897
          %v4338 = vpack.c.b16 %v3906, %v3898
          %v4339 = vpack.c.b16 %v3907, %v3899
          %v4340 = vpack.c.b16 %v3908, %v3900
          %v4341 = vpack.c.b16 %v3909, %v3901
          %v4342 = vpack.c.b16 %v3910, %v3902
          %v4343 = vpack.c.b16 %v3911, %v3903
          %v4344 = vpack.c.b16 %v3912, %v3904
          %v4345 = vpack.c.b16 %v3921, %v3913
          %v4346 = vpack.c.b16 %v3922, %v3914
          %v4347 = vpack.c.b16 %v3923, %v3915
          %v4348 = vpack.c.b16 %v3924, %v3916
          %v4349 = vpack.c.b16 %v3925, %v3917
          %v4350 = vpack.c.b16 %v3926, %v3918
          %v4351 = vpack.c.b16 %v3927, %v3919
          %v4352 = vpack.c.b16 %v3928, %v3920
          %v4353 = vpack.c.b16 %v3937, %v3929
          %v4354 = vpack.c.b16 %v3938, %v3930
          %v4355 = vpack.c.b16 %v3939, %v3931
          %v4356 = vpack.c.b16 %v3940, %v3932
          %v4357 = vpack.c.b16 %v3941, %v3933
          %v4358 = vpack.c.b16 %v3942, %v3934
          %v4359 = vpack.c.b16 %v3943, %v3935
          %v4360 = vpack.c.b16 %v3944, %v3936
          %v4361 = vpack.c.b16 %v3953, %v3945
          %v4362 = vpack.c.b16 %v3954, %v3946
          %v4363 = vpack.c.b16 %v3955, %v3947
          %v4364 = vpack.c.b16 %v3956, %v3948
          %v4365 = vpack.c.b16 %v3957, %v3949
          %v4366 = vpack.c.b16 %v3958, %v3950
          %v4367 = vpack.c.b16 %v3959, %v3951
          %v4368 = vpack.c.b16 %v3960, %v3952
          %v4369 = vpack.c.b16 %v3969, %v3961
          %v4370 = vpack.c.b16 %v3970, %v3962
          %v4371 = vpack.c.b16 %v3971, %v3963
          %v4372 = vpack.c.b16 %v3972, %v3964
          %v4373 = vpack.c.b16 %v3973, %v3965
          %v4374 = vpack.c.b16 %v3974, %v3966
          %v4375 = vpack.c.b16 %v3975, %v3967
          %v4376 = vpack.c.b16 %v3976, %v3968
          %v4377 = vpack.c.b16 %v3985, %v3977
          %v4378 = vpack.c.b16 %v3986, %v3978
          %v4379 = vpack.c.b16 %v3987, %v3979
          %v4380 = vpack.c.b16 %v3988, %v3980
          %v4381 = vpack.c.b16 %v3989, %v3981
          %v4382 = vpack.c.b16 %v3990, %v3982
          %v4383 = vpack.c.b16 %v3991, %v3983
          %v4384 = vpack.c.b16 %v3992, %v3984
          %v4385 = vpack.c.b16 %v4001, %v3993
          %v4386 = vpack.c.b16 %v4002, %v3994
          %v4387 = vpack.c.b16 %v4003, %v3995
          %v4388 = vpack.c.b16 %v4004, %v3996
          %v4389 = vpack.c.b16 %v4005, %v3997
          %v4390 = vpack.c.b16 %v4006, %v3998
          %v4391 = vpack.c.b16 %v4007, %v3999
          %v4392 = vpack.c.b16 %v4008, %v4000
          %v4393 = vpack.c.b16 %v4017, %v4009
          %v4394 = vpack.c.b16 %v4018, %v4010
          %v4395 = vpack.c.b16 %v4019, %v4011
          %v4396 = vpack.c.b16 %v4020, %v4012
          %v4397 = vpack.c.b16 %v4021, %v4013
          %v4398 = vpack.c.b16 %v4022, %v4014
          %v4399 = vpack.c.b16 %v4023, %v4015
          %v4400 = vpack.c.b16 %v4024, %v4016
          %v4401 = vpack.c.b16 %v4033, %v4025
          %v4402 = vpack.c.b16 %v4034, %v4026
          %v4403 = vpack.c.b16 %v4035, %v4027
          %v4404 = vpack.c.b16 %v4036, %v4028
          %v4405 = vpack.c.b16 %v4037, %v4029
          %v4406 = vpack.c.b16 %v4038, %v4030
          %v4407 = vpack.c.b16 %v4039, %v4031
          %v4408 = vpack.c.b16 %v4040, %v4032
          %v4409 = vpack.c.b16 %v4049, %v4041
          %v4410 = vpack.c.b16 %v4050, %v4042
          %v4411 = vpack.c.b16 %v4051, %v4043
          %v4412 = vpack.c.b16 %v4052, %v4044
          %v4413 = vpack.c.b16 %v4053, %v4045
          %v4414 = vpack.c.b16 %v4054, %v4046
          %v4415 = vpack.c.b16 %v4055, %v4047
          %v4416 = vpack.c.b16 %v4056, %v4048
          %v4417 = vpack.c.b16 %v4065, %v4057
          %v4418 = vpack.c.b16 %v4066, %v4058
          %v4419 = vpack.c.b16 %v4067, %v4059
          %v4420 = vpack.c.b16 %v4068, %v4060
          %v4421 = vpack.c.b16 %v4069, %v4061
          %v4422 = vpack.c.b16 %v4070, %v4062
          %v4423 = vpack.c.b16 %v4071, %v4063
          %v4424 = vpack.c.b16 %v4072, %v4064
          %v4425 = vpack.c.b16 %v4081, %v4073
          %v4426 = vpack.c.b16 %v4082, %v4074
          %v4427 = vpack.c.b16 %v4083, %v4075
          %v4428 = vpack.c.b16 %v4084, %v4076
          %v4429 = vpack.c.b16 %v4085, %v4077
          %v4430 = vpack.c.b16 %v4086, %v4078
          %v4431 = vpack.c.b16 %v4087, %v4079
          %v4432 = vpack.c.b16 %v4088, %v4080
          %v4433 = vpack.c.b16 %v4097, %v4089
          %v4434 = vpack.c.b16 %v4098, %v4090
          %v4435 = vpack.c.b16 %v4099, %v4091
          %v4436 = vpack.c.b16 %v4100, %v4092
          %v4437 = vpack.c.b16 %v4101, %v4093
          %v4438 = vpack.c.b16 %v4102, %v4094
          %v4439 = vpack.c.b16 %v4103, %v4095
          %v4440 = vpack.c.b16 %v4104, %v4096
          %v4441 = vpack.c.b16 %v4113, %v4105
          %v4442 = vpack.c.b16 %v4114, %v4106
          %v4443 = vpack.c.b16 %v4115, %v4107
          %v4444 = vpack.c.b16 %v4116, %v4108
          %v4445 = vpack.c.b16 %v4117, %v4109
          %v4446 = vpack.c.b16 %v4118, %v4110
          %v4447 = vpack.c.b16 %v4119, %v4111
          %v4448 = vpack.c.b16 %v4120, %v4112
          %v4449 = vpack.c.b16 %v4129, %v4121
          %v4450 = vpack.c.b16 %v4130, %v4122
          %v4451 = vpack.c.b16 %v4131, %v4123
          %v4452 = vpack.c.b16 %v4132, %v4124
          %v4453 = vpack.c.b16 %v4133, %v4125
          %v4454 = vpack.c.b16 %v4134, %v4126
          %v4455 = vpack.c.b16 %v4135, %v4127
          %v4456 = vpack.c.b16 %v4136, %v4128
          %v4457 = vpack.c.b16 %v4145, %v4137
          %v4458 = vpack.c.b16 %v4146, %v4138
          %v4459 = vpack.c.b16 %v4147, %v4139
          %v4460 = vpack.c.b16 %v4148, %v4140
          %v4461 = vpack.c.b16 %v4149, %v4141
          %v4462 = vpack.c.b16 %v4150, %v4142
          %v4463 = vpack.c.b16 %v4151, %v4143
          %v4464 = vpack.c.b16 %v4152, %v4144
          %v4465 = vpack.c.b16 %v4161, %v4153
          %v4466 = vpack.c.b16 %v4162, %v4154
          %v4467 = vpack.c.b16 %v4163, %v4155
          %v4468 = vpack.c.b16 %v4164, %v4156
          %v4469 = vpack.c.b16 %v4165, %v4157
          %v4470 = vpack.c.b16 %v4166, %v4158
          %v4471 = vpack.c.b16 %v4167, %v4159
          %v4472 = vpack.c.b16 %v4168, %v4160
          %v4473 = vpack.c.b16 %v4177, %v4169
          %v4474 = vpack.c.b16 %v4178, %v4170
          %v4475 = vpack.c.b16 %v4179, %v4171
          %v4476 = vpack.c.b16 %v4180, %v4172
          %v4477 = vpack.c.b16 %v4181, %v4173
          %v4478 = vpack.c.b16 %v4182, %v4174
          %v4479 = vpack.c.b16 %v4183, %v4175
          %v4480 = vpack.c.b16 %v4184, %v4176
          %v4481 = vpack.c.b16 %v4193, %v4185
          %v4482 = vpack.c.b16 %v4194, %v4186
          %v4483 = vpack.c.b16 %v4195, %v4187
          %v4484 = vpack.c.b16 %v4196, %v4188
          %v4485 = vpack.c.b16 %v4197, %v4189
          %v4486 = vpack.c.b16 %v4198, %v4190
          %v4487 = vpack.c.b16 %v4199, %v4191
          %v4488 = vpack.c.b16 %v4200, %v4192
          %v4489 = vpack.c.b16 %v4209, %v4201
          %v4490 = vpack.c.b16 %v4210, %v4202
          %v4491 = vpack.c.b16 %v4211, %v4203
          %v4492 = vpack.c.b16 %v4212, %v4204
          %v4493 = vpack.c.b16 %v4213, %v4205
          %v4494 = vpack.c.b16 %v4214, %v4206
          %v4495 = vpack.c.b16 %v4215, %v4207
          %v4496 = vpack.c.b16 %v4216, %v4208
          %v4497 = vpack.c.b16 %v4225, %v4217
          %v4498 = vpack.c.b16 %v4226, %v4218
          %v4499 = vpack.c.b16 %v4227, %v4219
          %v4500 = vpack.c.b16 %v4228, %v4220
          %v4501 = vpack.c.b16 %v4229, %v4221
          %v4502 = vpack.c.b16 %v4230, %v4222
          %v4503 = vpack.c.b16 %v4231, %v4223
          %v4504 = vpack.c.b16 %v4232, %v4224
          %v4505 = vpack.c.b16 %v4241, %v4233
          %v4506 = vpack.c.b16 %v4242, %v4234
          %v4507 = vpack.c.b16 %v4243, %v4235
          %v4508 = vpack.c.b16 %v4244, %v4236
          %v4509 = vpack.c.b16 %v4245, %v4237
          %v4510 = vpack.c.b16 %v4246, %v4238
          %v4511 = vpack.c.b16 %v4247, %v4239
          %v4512 = vpack.c.b16 %v4248, %v4240
          %v4513 = vpack.c.b16 %v4257, %v4249
          %v4514 = vpack.c.b16 %v4258, %v4250
          %v4515 = vpack.c.b16 %v4259, %v4251
          %v4516 = vpack.c.b16 %v4260, %v4252
          %v4517 = vpack.c.b16 %v4261, %v4253
          %v4518 = vpack.c.b16 %v4262, %v4254
          %v4519 = vpack.c.b16 %v4263, %v4255
          %v4520 = vpack.c.b16 %v4264, %v4256
          %4777 = vmatprep.subr.bf16.mxu0 %v4266
          %4778 = vmatpush1.bf16.msra.mxu0 %v4265
          %4779 = vmatprep.subr.bf16.mxu0 %v4274
          %4780 = vmatpush1.bf16.msra.mxu0 %v4273
          %4781 = vmatprep.subr.bf16.mxu0 %v4282
          %4782 = vmatpush1.bf16.msra.mxu0 %v4281
          %4783 = vmatprep.subr.bf16.mxu0 %v4290
          %4784 = vmatpush1.bf16.msra.mxu0 %v4289
          %4785 = vmatprep.subr.bf16.mxu0 %v4298
          %4786 = vmatpush1.bf16.msra.mxu0 %v4297
          %4787 = vmatprep.subr.bf16.mxu0 %v4306
          %4788 = vmatpush1.bf16.msra.mxu0 %v4305
          %4789 = vmatprep.subr.bf16.mxu0 %v4314
          %4790 = vmatpush1.bf16.msra.mxu0 %v4313
          %4791 = vmatprep.subr.bf16.mxu0 %v4322
          %4792 = vmatpush1.bf16.msra.mxu0 %v4321
          %4793 = vmatprep.subr.bf16.mxu0 %v4330
          %4794 = vmatpush1.bf16.msra.mxu0 %v4329
          %4795 = vmatprep.subr.bf16.mxu0 %v4338
          %4796 = vmatpush1.bf16.msra.mxu0 %v4337
          %4797 = vmatprep.subr.bf16.mxu0 %v4346
          %4798 = vmatpush1.bf16.msra.mxu0 %v4345
          %4799 = vmatprep.subr.bf16.mxu0 %v4354
          %4800 = vmatpush1.bf16.msra.mxu0 %v4353
          %4801 = vmatprep.subr.bf16.mxu0 %v4362
          %4802 = vmatpush1.bf16.msra.mxu0 %v4361
          %4803 = vmatprep.subr.bf16.mxu0 %v4370
          %4804 = vmatpush1.bf16.msra.mxu0 %v4369
          %4805 = vmatprep.subr.bf16.mxu0 %v4378
          %4806 = vmatpush1.bf16.msra.mxu0 %v4377
          %4807 = vmatprep.subr.bf16.mxu0 %v4386
          %4808 = vmatpush1.bf16.msra.mxu0 %v4385
          %4809 = vmatprep.mubr.bf16.mxu0 %v3238
          %4810 = vmatmul.mubr.bf16.gmra.mrb[0].mxu0 %v3237
          %v4811 = vpop.f32.mrb[0].mxu0
          %v4812 = vadd.f32 0.0, %v4811
          %v4813 = vpop.f32.mrb[0].mxu0
          %v4814 = vadd.f32 0.0, %v4813
          %v4815 = vpop.f32.mrb[0].mxu0
          %v4816 = vpop.f32.mrb[0].mxu0
          %4817 = vdwg.mxu0
          %4818 = vmatprep.subr.bf16.mxu0 %v4394
          %4819 = vmatpush1.bf16.msra.mxu0 %v4393
          %4820 = vmatprep.subr.bf16.mxu0 %v4402
          %4821 = vmatpush1.bf16.msra.mxu0 %v4401
          %4822 = vmatprep.subr.bf16.mxu0 %v4410
          %4823 = vmatpush1.bf16.msra.mxu0 %v4409
          %4824 = vmatprep.subr.bf16.mxu0 %v4418
          %4825 = vmatpush1.bf16.msra.mxu0 %v4417
          %4826 = vmatprep.subr.bf16.mxu0 %v4426
          %4827 = vmatpush1.bf16.msra.mxu0 %v4425
          %4828 = vmatprep.subr.bf16.mxu0 %v4434
          %4829 = vmatpush1.bf16.msra.mxu0 %v4433
          %4830 = vmatprep.subr.bf16.mxu0 %v4442
          %4831 = vmatpush1.bf16.msra.mxu0 %v4441
          %4832 = vmatprep.subr.bf16.mxu0 %v4450
          %4833 = vmatpush1.bf16.msra.mxu0 %v4449
          %4834 = vmatprep.subr.bf16.mxu0 %v4458
          %4835 = vmatpush1.bf16.msra.mxu0 %v4457
          %4836 = vmatprep.subr.bf16.mxu0 %v4466
          %4837 = vmatpush1.bf16.msra.mxu0 %v4465
          %4838 = vmatprep.subr.bf16.mxu0 %v4474
          %4839 = vmatpush1.bf16.msra.mxu0 %v4473
          %4840 = vmatprep.subr.bf16.mxu0 %v4482
          %4841 = vmatpush1.bf16.msra.mxu0 %v4481
          %4842 = vmatprep.subr.bf16.mxu0 %v4490
          %4843 = vmatpush1.bf16.msra.mxu0 %v4489
          %4844 = vmatprep.subr.bf16.mxu0 %v4498
          %4845 = vmatpush1.bf16.msra.mxu0 %v4497
          %4846 = vmatprep.subr.bf16.mxu0 %v4506
          %4847 = vmatpush1.bf16.msra.mxu0 %v4505
          %4848 = vmatprep.subr.bf16.mxu0 %v4514
          %4849 = vmatpush1.bf16.msra.mxu0 %v4513
          %4850 = vmatprep.mubr.bf16.mxu0 %v3240
          %4851 = vmatmul.mubr.bf16.gmra.mrb[0].mxu0 %v3239
          %v4852 = vpop.f32.mrb[0].mxu0
          %v4853 = vadd.f32 %v4812, %v4852
          %v4854 = vpop.f32.mrb[0].mxu0
          %v4855 = vadd.f32 %v4814, %v4854
          %v4856 = vpop.f32.mrb[0].mxu0
          %v4857 = vpop.f32.mrb[0].mxu0
          %4858 = vdwg.mxu0
          %4859 = vmatprep.subr.bf16.mxu0 %v4268
          %4860 = vmatpush1.bf16.msra.mxu0 %v4267
          %4861 = vmatprep.subr.bf16.mxu0 %v4276
          %4862 = vmatpush1.bf16.msra.mxu0 %v4275
          %4863 = vmatprep.subr.bf16.mxu0 %v4284
          %4864 = vmatpush1.bf16.msra.mxu0 %v4283
          %4865 = vmatprep.subr.bf16.mxu0 %v4292
          %4866 = vmatpush1.bf16.msra.mxu0 %v4291
          %4867 = vmatprep.subr.bf16.mxu0 %v4300
          %4868 = vmatpush1.bf16.msra.mxu0 %v4299
          %4869 = vmatprep.subr.bf16.mxu0 %v4308
          %4870 = vmatpush1.bf16.msra.mxu0 %v4307
          %4871 = vmatprep.subr.bf16.mxu0 %v4316
          %4872 = vmatpush1.bf16.msra.mxu0 %v4315
          %4873 = vmatprep.subr.bf16.mxu0 %v4324
          %4874 = vmatpush1.bf16.msra.mxu0 %v4323
          %4875 = vmatprep.subr.bf16.mxu0 %v4332
          %4876 = vmatpush1.bf16.msra.mxu0 %v4331
          %4877 = vmatprep.subr.bf16.mxu0 %v4340
          %4878 = vmatpush1.bf16.msra.mxu0 %v4339
          %4879 = vmatprep.subr.bf16.mxu0 %v4348
          %4880 = vmatpush1.bf16.msra.mxu0 %v4347
          %4881 = vmatprep.subr.bf16.mxu0 %v4356
          %4882 = vmatpush1.bf16.msra.mxu0 %v4355
          %4883 = vmatprep.subr.bf16.mxu0 %v4364
          %4884 = vmatpush1.bf16.msra.mxu0 %v4363
          %4885 = vmatprep.subr.bf16.mxu0 %v4372
          %4886 = vmatpush1.bf16.msra.mxu0 %v4371
          %4887 = vmatprep.subr.bf16.mxu0 %v4380
          %4888 = vmatpush1.bf16.msra.mxu0 %v4379
          %4889 = vmatprep.subr.bf16.mxu0 %v4388
          %4890 = vmatpush1.bf16.msra.mxu0 %v4387
          %4891 = vmatprep.mubr.bf16.mxu0 %v3238
          %4892 = vmatmul.mubr.bf16.gmra.mrb[0].mxu0 %v3237
          %v4893 = vpop.f32.mrb[0].mxu0
          %v4894 = vadd.f32 0.0, %v4893
          %v4895 = vpop.f32.mrb[0].mxu0
          %v4896 = vadd.f32 0.0, %v4895
          %v4897 = vpop.f32.mrb[0].mxu0
          %v4898 = vpop.f32.mrb[0].mxu0
          %4899 = vdwg.mxu0
          %4900 = vmatprep.subr.bf16.mxu0 %v4396
          %4901 = vmatpush1.bf16.msra.mxu0 %v4395
          %4902 = vmatprep.subr.bf16.mxu0 %v4404
          %4903 = vmatpush1.bf16.msra.mxu0 %v4403
          %4904 = vmatprep.subr.bf16.mxu0 %v4412
          %4905 = vmatpush1.bf16.msra.mxu0 %v4411
          %4906 = vmatprep.subr.bf16.mxu0 %v4420
          %4907 = vmatpush1.bf16.msra.mxu0 %v4419
          %4908 = vmatprep.subr.bf16.mxu0 %v4428
          %4909 = vmatpush1.bf16.msra.mxu0 %v4427
          %4910 = vmatprep.subr.bf16.mxu0 %v4436
          %4911 = vmatpush1.bf16.msra.mxu0 %v4435
          %4912 = vmatprep.subr.bf16.mxu0 %v4444
          %4913 = vmatpush1.bf16.msra.mxu0 %v4443
          %4914 = vmatprep.subr.bf16.mxu0 %v4452
          %4915 = vmatpush1.bf16.msra.mxu0 %v4451
          %4916 = vmatprep.subr.bf16.mxu0 %v4460
          %4917 = vmatpush1.bf16.msra.mxu0 %v4459
          %4918 = vmatprep.subr.bf16.mxu0 %v4468
          %4919 = vmatpush1.bf16.msra.mxu0 %v4467
          %4920 = vmatprep.subr.bf16.mxu0 %v4476
          %4921 = vmatpush1.bf16.msra.mxu0 %v4475
          %4922 = vmatprep.subr.bf16.mxu0 %v4484
          %4923 = vmatpush1.bf16.msra.mxu0 %v4483
          %4924 = vmatprep.subr.bf16.mxu0 %v4492
          %4925 = vmatpush1.bf16.msra.mxu0 %v4491
          %4926 = vmatprep.subr.bf16.mxu0 %v4500
          %4927 = vmatpush1.bf16.msra.mxu0 %v4499
          %4928 = vmatprep.subr.bf16.mxu0 %v4508
          %4929 = vmatpush1.bf16.msra.mxu0 %v4507
          %4930 = vmatprep.subr.bf16.mxu0 %v4516
          %4931 = vmatpush1.bf16.msra.mxu0 %v4515
          %4932 = vmatprep.mubr.bf16.mxu0 %v3240
          %4933 = vmatmul.mubr.bf16.gmra.mrb[0].mxu0 %v3239
          %v4934 = vpop.f32.mrb[0].mxu0
          %v4935 = vadd.f32 %v4894, %v4934
          %v4936 = vpop.f32.mrb[0].mxu0
          %v4937 = vadd.f32 %v4896, %v4936
          %v4938 = vpop.f32.mrb[0].mxu0
          %v4939 = vpop.f32.mrb[0].mxu0
          %4940 = vdwg.mxu0
          %4941 = vmatprep.subr.bf16.mxu0 %v4270
          %4942 = vmatpush1.bf16.msra.mxu0 %v4269
          %4943 = vmatprep.subr.bf16.mxu0 %v4278
          %4944 = vmatpush1.bf16.msra.mxu0 %v4277
          %4945 = vmatprep.subr.bf16.mxu0 %v4286
          %4946 = vmatpush1.bf16.msra.mxu0 %v4285
          %4947 = vmatprep.subr.bf16.mxu0 %v4294
          %4948 = vmatpush1.bf16.msra.mxu0 %v4293
          %4949 = vmatprep.subr.bf16.mxu0 %v4302
          %4950 = vmatpush1.bf16.msra.mxu0 %v4301
          %4951 = vmatprep.subr.bf16.mxu0 %v4310
          %4952 = vmatpush1.bf16.msra.mxu0 %v4309
          %4953 = vmatprep.subr.bf16.mxu0 %v4318
          %4954 = vmatpush1.bf16.msra.mxu0 %v4317
          %4955 = vmatprep.subr.bf16.mxu0 %v4326
          %4956 = vmatpush1.bf16.msra.mxu0 %v4325
          %4957 = vmatprep.subr.bf16.mxu0 %v4334
          %4958 = vmatpush1.bf16.msra.mxu0 %v4333
          %4959 = vmatprep.subr.bf16.mxu0 %v4342
          %4960 = vmatpush1.bf16.msra.mxu0 %v4341
          %4961 = vmatprep.subr.bf16.mxu0 %v4350
          %4962 = vmatpush1.bf16.msra.mxu0 %v4349
          %4963 = vmatprep.subr.bf16.mxu0 %v4358
          %4964 = vmatpush1.bf16.msra.mxu0 %v4357
          %4965 = vmatprep.subr.bf16.mxu0 %v4366
          %4966 = vmatpush1.bf16.msra.mxu0 %v4365
          %4967 = vmatprep.subr.bf16.mxu0 %v4374
          %4968 = vmatpush1.bf16.msra.mxu0 %v4373
          %4969 = vmatprep.subr.bf16.mxu0 %v4382
          %4970 = vmatpush1.bf16.msra.mxu0 %v4381
          %4971 = vmatprep.subr.bf16.mxu0 %v4390
          %4972 = vmatpush1.bf16.msra.mxu0 %v4389
          %4973 = vmatprep.mubr.bf16.mxu0 %v3238
          %4974 = vmatmul.mubr.bf16.gmra.mrb[0].mxu0 %v3237
          %v4975 = vpop.f32.mrb[0].mxu0
          %v4976 = vadd.f32 0.0, %v4975
          %v4977 = vpop.f32.mrb[0].mxu0
          %v4978 = vadd.f32 0.0, %v4977
          %v4979 = vpop.f32.mrb[0].mxu0
          %v4980 = vpop.f32.mrb[0].mxu0
          %4981 = vdwg.mxu0
          %4982 = vmatprep.subr.bf16.mxu0 %v4398
          %4983 = vmatpush1.bf16.msra.mxu0 %v4397
          %4984 = vmatprep.subr.bf16.mxu0 %v4406
          %4985 = vmatpush1.bf16.msra.mxu0 %v4405
          %4986 = vmatprep.subr.bf16.mxu0 %v4414
          %4987 = vmatpush1.bf16.msra.mxu0 %v4413
          %4988 = vmatprep.subr.bf16.mxu0 %v4422
          %4989 = vmatpush1.bf16.msra.mxu0 %v4421
          %4990 = vmatprep.subr.bf16.mxu0 %v4430
          %4991 = vmatpush1.bf16.msra.mxu0 %v4429
          %4992 = vmatprep.subr.bf16.mxu0 %v4438
          %4993 = vmatpush1.bf16.msra.mxu0 %v4437
          %4994 = vmatprep.subr.bf16.mxu0 %v4446
          %4995 = vmatpush1.bf16.msra.mxu0 %v4445
          %4996 = vmatprep.subr.bf16.mxu0 %v4454
          %4997 = vmatpush1.bf16.msra.mxu0 %v4453
          %4998 = vmatprep.subr.bf16.mxu0 %v4462
          %4999 = vmatpush1.bf16.msra.mxu0 %v4461
          %5000 = vmatprep.subr.bf16.mxu0 %v4470
          %5001 = vmatpush1.bf16.msra.mxu0 %v4469
          %5002 = vmatprep.subr.bf16.mxu0 %v4478
          %5003 = vmatpush1.bf16.msra.mxu0 %v4477
          %5004 = vmatprep.subr.bf16.mxu0 %v4486
          %5005 = vmatpush1.bf16.msra.mxu0 %v4485
          %5006 = vmatprep.subr.bf16.mxu0 %v4494
          %5007 = vmatpush1.bf16.msra.mxu0 %v4493
          %5008 = vmatprep.subr.bf16.mxu0 %v4502
          %5009 = vmatpush1.bf16.msra.mxu0 %v4501
          %5010 = vmatprep.subr.bf16.mxu0 %v4510
          %5011 = vmatpush1.bf16.msra.mxu0 %v4509
          %5012 = vmatprep.subr.bf16.mxu0 %v4518
          %5013 = vmatpush1.bf16.msra.mxu0 %v4517
          %5014 = vmatprep.mubr.bf16.mxu0 %v3240
          %5015 = vmatmul.mubr.bf16.gmra.mrb[0].mxu0 %v3239
          %v5016 = vpop.f32.mrb[0].mxu0
          %v5017 = vadd.f32 %v4976, %v5016
          %v5018 = vpop.f32.mrb[0].mxu0
          %v5019 = vadd.f32 %v4978, %v5018
          %v5020 = vpop.f32.mrb[0].mxu0
          %v5021 = vpop.f32.mrb[0].mxu0
          %5022 = vdwg.mxu0
          %5023 = vmatprep.subr.bf16.mxu0 %v4272
          %5024 = vmatpush1.bf16.msra.mxu0 %v4271
          %5025 = vmatprep.subr.bf16.mxu0 %v4280
          %5026 = vmatpush1.bf16.msra.mxu0 %v4279
          %5027 = vmatprep.subr.bf16.mxu0 %v4288
          %5028 = vmatpush1.bf16.msra.mxu0 %v4287
          %5029 = vmatprep.subr.bf16.mxu0 %v4296
          %5030 = vmatpush1.bf16.msra.mxu0 %v4295
          %5031 = vmatprep.subr.bf16.mxu0 %v4304
          %5032 = vmatpush1.bf16.msra.mxu0 %v4303
          %5033 = vmatprep.subr.bf16.mxu0 %v4312
          %5034 = vmatpush1.bf16.msra.mxu0 %v4311
          %5035 = vmatprep.subr.bf16.mxu0 %v4320
          %5036 = vmatpush1.bf16.msra.mxu0 %v4319
          %5037 = vmatprep.subr.bf16.mxu0 %v4328
          %5038 = vmatpush1.bf16.msra.mxu0 %v4327
          %5039 = vmatprep.subr.bf16.mxu0 %v4336
          %5040 = vmatpush1.bf16.msra.mxu0 %v4335
          %5041 = vmatprep.subr.bf16.mxu0 %v4344
          %5042 = vmatpush1.bf16.msra.mxu0 %v4343
          %5043 = vmatprep.subr.bf16.mxu0 %v4352
          %5044 = vmatpush1.bf16.msra.mxu0 %v4351
          %5045 = vmatprep.subr.bf16.mxu0 %v4360
          %5046 = vmatpush1.bf16.msra.mxu0 %v4359
          %5047 = vmatprep.subr.bf16.mxu0 %v4368
          %5048 = vmatpush1.bf16.msra.mxu0 %v4367
          %5049 = vmatprep.subr.bf16.mxu0 %v4376
          %5050 = vmatpush1.bf16.msra.mxu0 %v4375
          %5051 = vmatprep.subr.bf16.mxu0 %v4384
          %5052 = vmatpush1.bf16.msra.mxu0 %v4383
          %5053 = vmatprep.subr.bf16.mxu0 %v4392
          %5054 = vmatpush1.bf16.msra.mxu0 %v4391
          %5055 = vmatprep.mubr.bf16.mxu0 %v3238
          %5056 = vmatmul.mubr.bf16.gmra.mrb[0].mxu0 %v3237
          %v5057 = vpop.f32.mrb[0].mxu0
          %v5058 = vadd.f32 0.0, %v5057
          %v5059 = vpop.f32.mrb[0].mxu0
          %v5060 = vadd.f32 0.0, %v5059
          %v5061 = vpop.f32.mrb[0].mxu0
          %v5062 = vpop.f32.mrb[0].mxu0
          %5063 = vdwg.mxu0
          %5064 = vmatprep.subr.bf16.mxu0 %v4400
          %5065 = vmatpush1.bf16.msra.mxu0 %v4399
          %5066 = vmatprep.subr.bf16.mxu0 %v4408
          %5067 = vmatpush1.bf16.msra.mxu0 %v4407
          %5068 = vmatprep.subr.bf16.mxu0 %v4416
          %5069 = vmatpush1.bf16.msra.mxu0 %v4415
          %5070 = vmatprep.subr.bf16.mxu0 %v4424
          %5071 = vmatpush1.bf16.msra.mxu0 %v4423
          %5072 = vmatprep.subr.bf16.mxu0 %v4432
          %5073 = vmatpush1.bf16.msra.mxu0 %v4431
          %5074 = vmatprep.subr.bf16.mxu0 %v4440
          %5075 = vmatpush1.bf16.msra.mxu0 %v4439
          %5076 = vmatprep.subr.bf16.mxu0 %v4448
          %5077 = vmatpush1.bf16.msra.mxu0 %v4447
          %5078 = vmatprep.subr.bf16.mxu0 %v4456
          %5079 = vmatpush1.bf16.msra.mxu0 %v4455
          %5080 = vmatprep.subr.bf16.mxu0 %v4464
          %5081 = vmatpush1.bf16.msra.mxu0 %v4463
          %5082 = vmatprep.subr.bf16.mxu0 %v4472
          %5083 = vmatpush1.bf16.msra.mxu0 %v4471
          %5084 = vmatprep.subr.bf16.mxu0 %v4480
          %5085 = vmatpush1.bf16.msra.mxu0 %v4479
          %5086 = vmatprep.subr.bf16.mxu0 %v4488
          %5087 = vmatpush1.bf16.msra.mxu0 %v4487
          %5088 = vmatprep.subr.bf16.mxu0 %v4496
          %5089 = vmatpush1.bf16.msra.mxu0 %v4495
          %5090 = vmatprep.subr.bf16.mxu0 %v4504
          %5091 = vmatpush1.bf16.msra.mxu0 %v4503
          %5092 = vmatprep.subr.bf16.mxu0 %v4512
          %5093 = vmatpush1.bf16.msra.mxu0 %v4511
          %5094 = vmatprep.subr.bf16.mxu0 %v4520
          %5095 = vmatpush1.bf16.msra.mxu0 %v4519
          %5096 = vmatprep.mubr.bf16.mxu0 %v3240
          %5097 = vmatmul.mubr.bf16.gmra.mrb[0].mxu0 %v3239
          %v5098 = vpop.f32.mrb[0].mxu0
          %v5099 = vadd.f32 %v5058, %v5098
          %v5100 = vpop.f32.mrb[0].mxu0
          %v5101 = vadd.f32 %v5060, %v5100
          %v5102 = vpop.f32.mrb[0].mxu0
          %v5103 = vpop.f32.mrb[0].mxu0
          %5104 = vdwg.mxu0
          %v5113 = vcombine.low %v4853, %v4855
          %v5114 = vcombine.low %v4935, %v4937
          %v5116 = vunpack.c.l.s4 1983009808
          %v5117 = vunpack.c.0.s8 %v5116
          %v5118 = vlaneseq
          %v5119 = vshrl.u32 %v5118, 7
          %v5120 = vsub.s32 %v5117, %v5119
          %v5121 = vrot.slane %v5113, %v5120
          %v5123 = vunpack.c.l.s4 1983009808
          %v5124 = vunpack.c.0.s8 %v5123
          %v5125 = vlaneseq
          %v5126 = vshrl.u32 %v5125, 7
          %v5127 = vsub.s32 %v5124, %v5126
          %v5128 = vrot.slane %v5114, %v5127
          %v5129 = vcombine.low %v5121, %v5128
          %v5130 = vcombine.low %v5017, %v5019
          %v5131 = vcombine.low %v5099, %v5101
          %v5133 = vunpack.c.l.s4 1983009808
          %v5134 = vunpack.c.0.s8 %v5133
          %v5135 = vlaneseq
          %v5136 = vshrl.u32 %v5135, 7
          %v5137 = vsub.s32 %v5134, %v5136
          %v5138 = vrot.slane %v5130, %v5137
          %v5140 = vunpack.c.l.s4 1983009808
          %v5141 = vunpack.c.0.s8 %v5140
          %v5142 = vlaneseq
          %v5143 = vshrl.u32 %v5142, 7
          %v5144 = vsub.s32 %v5141, %v5143
          %v5145 = vrot.slane %v5131, %v5144
          %v5146 = vcombine.low %v5138, %v5145
          %v5149 = vadd.f32 %v3213, %v5129
          %v5150 = vadd.f32 %v3214, %v5146
          %5151 = vst [vmem:[#allocation4] sm:$0xff] %v5149
          %5152 = vst [vmem:[#allocation4 + $0x8] sm:$0xff] %v5150
        $region108: #{net_a4_forward.1} parent=63 // pred_fallthru
          _
        %p5153 = scmp.eq.s32.totalorder %s36, 1
        %p5154 = pnand %p5153, %p3170
        %p5155 = pneg %p5154
        // Predicated region
        $region109: #{net_a4_forward.1} parent=63 // pred_check
          _
        $region110: #{net_a4_forward.1} parent=63 // pred_check_branch
          %5157 = sbr.rel (%p5154) target = $region112
        $region111: #{net_a4_forward.1} parent=63 // pred_region
          %v5158 = vld [vmem:[#allocation4] sm:$0xff]
          %v5159 = vld [vmem:[#allocation4 + $0x8] sm:$0xff]
          %v5160 = vld [vmem:[#allocation11] sm:$0xff]
          %v5162 = vlaneseq
          %v5163 = vshrl.u32 %v5162, 7
          %v5164 = vsub.s32 0, %v5163
          %v5165 = vrot.slane %v5160, %v5164
          %v5166 = vlaneseq
          %v5167 = vshrl.u32 %v5166, 7
          %v5168 = vsub.s32 1, %v5167
          %v5169 = vrot.slane %v5160, %v5168
          %v5170 = vlaneseq
          %v5171 = vshrl.u32 %v5170, 7
          %v5172 = vsub.s32 2, %v5171
          %v5173 = vrot.slane %v5160, %v5172
          %v5174 = vlaneseq
          %v5175 = vshrl.u32 %v5174, 7
          %v5176 = vsub.s32 3, %v5175
          %v5177 = vrot.slane %v5160, %v5176
          %v5178 = vlaneseq
          %v5179 = vshrl.u32 %v5178, 7
          %v5180 = vsub.s32 4, %v5179
          %v5181 = vrot.slane %v5160, %v5180
          %v5182 = vlaneseq
          %v5183 = vshrl.u32 %v5182, 7
          %v5184 = vsub.s32 5, %v5183
          %v5185 = vrot.slane %v5160, %v5184
          %v5186 = vlaneseq
          %v5187 = vshrl.u32 %v5186, 7
          %v5188 = vsub.s32 6, %v5187
          %v5189 = vrot.slane %v5160, %v5188
          %v5190 = vlaneseq
          %v5191 = vshrl.u32 %v5190, 7
          %v5192 = vsub.s32 7, %v5191
          %v5193 = vrot.slane %v5160, %v5192
          %v5194 = vcombine.low %v5165, %v5169
          %v5195 = vcombine.low %v5173, %v5177
          %v5197 = vunpack.c.l.s4 1983009808
          %v5198 = vunpack.c.0.s8 %v5197
          %v5199 = vlaneseq
          %v5200 = vshrl.u32 %v5199, 7
          %v5201 = vsub.s32 %v5198, %v5200
          %v5202 = vrot.slane %v5194, %v5201
          %v5204 = vunpack.c.l.s4 1983009808
          %v5205 = vunpack.c.0.s8 %v5204
          %v5206 = vlaneseq
          %v5207 = vshrl.u32 %v5206, 7
          %v5208 = vsub.s32 %v5205, %v5207
          %v5209 = vrot.slane %v5195, %v5208
          %v5210 = vcombine.low %v5202, %v5209
          %v5211 = vcombine.low %v5181, %v5185
          %v5212 = vcombine.low %v5189, %v5193
          %v5214 = vunpack.c.l.s4 1983009808
          %v5215 = vunpack.c.0.s8 %v5214
          %v5216 = vlaneseq
          %v5217 = vshrl.u32 %v5216, 7
          %v5218 = vsub.s32 %v5215, %v5217
          %v5219 = vrot.slane %v5211, %v5218
          %v5221 = vunpack.c.l.s4 1983009808
          %v5222 = vunpack.c.0.s8 %v5221
          %v5223 = vlaneseq
          %v5224 = vshrl.u32 %v5223, 7
          %v5225 = vsub.s32 %v5222, %v5224
          %v5226 = vrot.slane %v5212, %v5225
          %v5227 = vcombine.low %v5219, %v5226
          %v5230 = vadd.f32 %v5158, %v5210
          %v5231 = vadd.f32 %v5159, %v5227
          %v5234 = vcombine.high %v5230, %v5230
          %v5236 = vunpack.c.l.s4 1983009808
          %v5237 = vunpack.c.0.s8 %v5236
          %v5238 = vlaneseq
          %v5239 = vshrl.u32 %v5238, 7
          %v5240 = vsub.s32 %v5237, %v5239
          %v5241 = vrot.slane %v5230, %v5240
          %v5243 = vunpack.c.l.s4 1983009808
          %v5244 = vunpack.c.0.s8 %v5243
          %v5245 = vlaneseq
          %v5246 = vshrl.u32 %v5245, 7
          %v5247 = vsub.s32 %v5244, %v5246
          %v5248 = vrot.slane %v5234, %v5247
          %v5249 = vcombine.high %v5241, %v5241
          %v5250 = vcombine.high %v5248, %v5248
          %v5251 = vcombine.high %v5231, %v5231
          %v5253 = vunpack.c.l.s4 1983009808
          %v5254 = vunpack.c.0.s8 %v5253
          %v5255 = vlaneseq
          %v5256 = vshrl.u32 %v5255, 7
          %v5257 = vsub.s32 %v5254, %v5256
          %v5258 = vrot.slane %v5231, %v5257
          %v5260 = vunpack.c.l.s4 1983009808
          %v5261 = vunpack.c.0.s8 %v5260
          %v5262 = vlaneseq
          %v5263 = vshrl.u32 %v5262, 7
          %v5264 = vsub.s32 %v5261, %v5263
          %v5265 = vrot.slane %v5251, %v5264
          %v5266 = vcombine.high %v5258, %v5258
          %v5267 = vcombine.high %v5265, %v5265
          %v5276 = vpack.c.bf16 %v5241, %v5241
          %v5277 = vpack.c.bf16 %v5249, %v5249
          %v5278 = vpack.c.bf16 %v5248, %v5248
          %v5279 = vpack.c.bf16 %v5250, %v5250
          %v5280 = vpack.c.bf16 %v5258, %v5258
          %v5281 = vpack.c.bf16 %v5266, %v5266
          %v5282 = vpack.c.bf16 %v5265, %v5265
          %v5283 = vpack.c.bf16 %v5267, %v5267
          %v5284 = vld [vmem:[#allocation13] sm:$0xf]
          %v5285 = vld [vmem:[#allocation13 + $0x4] sm:$0xf]
          %v5286 = vld [vmem:[#allocation13 + $0x8] sm:$0xf]
          %v5287 = vld [vmem:[#allocation13 + $0xc] sm:$0xf]
          %v5288 = vld [vmem:[#allocation13 + $0x10] sm:$0xf]
          %v5289 = vld [vmem:[#allocation13 + $0x14] sm:$0xf]
          %v5290 = vld [vmem:[#allocation13 + $0x18] sm:$0xf]
          %v5291 = vld [vmem:[#allocation13 + $0x1c] sm:$0xf]
          %v5292 = vld [vmem:[#allocation13 + $0x20] sm:$0xf]
          %v5293 = vld [vmem:[#allocation13 + $0x24] sm:$0xf]
          %v5294 = vld [vmem:[#allocation13 + $0x28] sm:$0xf]
          %v5295 = vld [vmem:[#allocation13 + $0x2c] sm:$0xf]
          %v5296 = vld [vmem:[#allocation13 + $0x30] sm:$0xf]
          %v5297 = vld [vmem:[#allocation13 + $0x34] sm:$0xf]
          %v5298 = vld [vmem:[#allocation13 + $0x38] sm:$0xf]
          %v5299 = vld [vmem:[#allocation13 + $0x3c] sm:$0xf]
          %v5300 = vld [vmem:[#allocation13 + $0x40] sm:$0xf]
          %v5301 = vld [vmem:[#allocation13 + $0x44] sm:$0xf]
          %v5302 = vld [vmem:[#allocation13 + $0x48] sm:$0xf]
          %v5303 = vld [vmem:[#allocation13 + $0x4c] sm:$0xf]
          %v5304 = vld [vmem:[#allocation13 + $0x50] sm:$0xf]
          %v5305 = vld [vmem:[#allocation13 + $0x54] sm:$0xf]
          %v5306 = vld [vmem:[#allocation13 + $0x58] sm:$0xf]
          %v5307 = vld [vmem:[#allocation13 + $0x5c] sm:$0xf]
          %v5308 = vld [vmem:[#allocation13 + $0x60] sm:$0xf]
          %v5309 = vld [vmem:[#allocation13 + $0x64] sm:$0xf]
          %v5310 = vld [vmem:[#allocation13 + $0x68] sm:$0xf]
          %v5311 = vld [vmem:[#allocation13 + $0x6c] sm:$0xf]
          %v5312 = vld [vmem:[#allocation13 + $0x70] sm:$0xf]
          %v5313 = vld [vmem:[#allocation13 + $0x74] sm:$0xf]
          %v5314 = vld [vmem:[#allocation13 + $0x78] sm:$0xf]
          %v5315 = vld [vmem:[#allocation13 + $0x7c] sm:$0xf]
          %v5316 = vld [vmem:[#allocation13 + $0x80] sm:$0xf]
          %v5317 = vld [vmem:[#allocation13 + $0x84] sm:$0xf]
          %v5318 = vld [vmem:[#allocation13 + $0x88] sm:$0xf]
          %v5319 = vld [vmem:[#allocation13 + $0x8c] sm:$0xf]
          %v5320 = vld [vmem:[#allocation13 + $0x90] sm:$0xf]
          %v5321 = vld [vmem:[#allocation13 + $0x94] sm:$0xf]
          %v5322 = vld [vmem:[#allocation13 + $0x98] sm:$0xf]
          %v5323 = vld [vmem:[#allocation13 + $0x9c] sm:$0xf]
          %v5324 = vld [vmem:[#allocation13 + $0xa0] sm:$0xf]
          %v5325 = vld [vmem:[#allocation13 + $0xa4] sm:$0xf]
          %v5326 = vld [vmem:[#allocation13 + $0xa8] sm:$0xf]
          %v5327 = vld [vmem:[#allocation13 + $0xac] sm:$0xf]
          %v5328 = vld [vmem:[#allocation13 + $0xb0] sm:$0xf]
          %v5329 = vld [vmem:[#allocation13 + $0xb4] sm:$0xf]
          %v5330 = vld [vmem:[#allocation13 + $0xb8] sm:$0xf]
          %v5331 = vld [vmem:[#allocation13 + $0xbc] sm:$0xf]
          %v5332 = vld [vmem:[#allocation13 + $0xc0] sm:$0xf]
          %v5333 = vld [vmem:[#allocation13 + $0xc4] sm:$0xf]
          %v5334 = vld [vmem:[#allocation13 + $0xc8] sm:$0xf]
          %v5335 = vld [vmem:[#allocation13 + $0xcc] sm:$0xf]
          %v5336 = vld [vmem:[#allocation13 + $0xd0] sm:$0xf]
          %v5337 = vld [vmem:[#allocation13 + $0xd4] sm:$0xf]
          %v5338 = vld [vmem:[#allocation13 + $0xd8] sm:$0xf]
          %v5339 = vld [vmem:[#allocation13 + $0xdc] sm:$0xf]
          %v5340 = vld [vmem:[#allocation13 + $0xe0] sm:$0xf]
          %v5341 = vld [vmem:[#allocation13 + $0xe4] sm:$0xf]
          %v5342 = vld [vmem:[#allocation13 + $0xe8] sm:$0xf]
          %v5343 = vld [vmem:[#allocation13 + $0xec] sm:$0xf]
          %v5344 = vld [vmem:[#allocation13 + $0xf0] sm:$0xf]
          %v5345 = vld [vmem:[#allocation13 + $0xf4] sm:$0xf]
          %v5346 = vld [vmem:[#allocation13 + $0xf8] sm:$0xf]
          %v5347 = vld [vmem:[#allocation13 + $0xfc] sm:$0xf]
          %v5348 = vld [vmem:[#allocation13 + $0x100] sm:$0xf]
          %v5349 = vld [vmem:[#allocation13 + $0x104] sm:$0xf]
          %v5350 = vld [vmem:[#allocation13 + $0x108] sm:$0xf]
          %v5351 = vld [vmem:[#allocation13 + $0x10c] sm:$0xf]
          %v5352 = vld [vmem:[#allocation13 + $0x110] sm:$0xf]
          %v5353 = vld [vmem:[#allocation13 + $0x114] sm:$0xf]
          %v5354 = vld [vmem:[#allocation13 + $0x118] sm:$0xf]
          %v5355 = vld [vmem:[#allocation13 + $0x11c] sm:$0xf]
          %v5356 = vld [vmem:[#allocation13 + $0x120] sm:$0xf]
          %v5357 = vld [vmem:[#allocation13 + $0x124] sm:$0xf]
          %v5358 = vld [vmem:[#allocation13 + $0x128] sm:$0xf]
          %v5359 = vld [vmem:[#allocation13 + $0x12c] sm:$0xf]
          %v5360 = vld [vmem:[#allocation13 + $0x130] sm:$0xf]
          %v5361 = vld [vmem:[#allocation13 + $0x134] sm:$0xf]
          %v5362 = vld [vmem:[#allocation13 + $0x138] sm:$0xf]
          %v5363 = vld [vmem:[#allocation13 + $0x13c] sm:$0xf]
          %v5364 = vld [vmem:[#allocation13 + $0x140] sm:$0xf]
          %v5365 = vld [vmem:[#allocation13 + $0x144] sm:$0xf]
          %v5366 = vld [vmem:[#allocation13 + $0x148] sm:$0xf]
          %v5367 = vld [vmem:[#allocation13 + $0x14c] sm:$0xf]
          %v5368 = vld [vmem:[#allocation13 + $0x150] sm:$0xf]
          %v5369 = vld [vmem:[#allocation13 + $0x154] sm:$0xf]
          %v5370 = vld [vmem:[#allocation13 + $0x158] sm:$0xf]
          %v5371 = vld [vmem:[#allocation13 + $0x15c] sm:$0xf]
          %v5372 = vld [vmem:[#allocation13 + $0x160] sm:$0xf]
          %v5373 = vld [vmem:[#allocation13 + $0x164] sm:$0xf]
          %v5374 = vld [vmem:[#allocation13 + $0x168] sm:$0xf]
          %v5375 = vld [vmem:[#allocation13 + $0x16c] sm:$0xf]
          %v5376 = vld [vmem:[#allocation13 + $0x170] sm:$0xf]
          %v5377 = vld [vmem:[#allocation13 + $0x174] sm:$0xf]
          %v5378 = vld [vmem:[#allocation13 + $0x178] sm:$0xf]
          %v5379 = vld [vmem:[#allocation13 + $0x17c] sm:$0xf]
          %v5380 = vld [vmem:[#allocation13 + $0x180] sm:$0xf]
          %v5381 = vld [vmem:[#allocation13 + $0x184] sm:$0xf]
          %v5382 = vld [vmem:[#allocation13 + $0x188] sm:$0xf]
          %v5383 = vld [vmem:[#allocation13 + $0x18c] sm:$0xf]
          %v5384 = vld [vmem:[#allocation13 + $0x190] sm:$0xf]
          %v5385 = vld [vmem:[#allocation13 + $0x194] sm:$0xf]
          %v5386 = vld [vmem:[#allocation13 + $0x198] sm:$0xf]
          %v5387 = vld [vmem:[#allocation13 + $0x19c] sm:$0xf]
          %v5388 = vld [vmem:[#allocation13 + $0x1a0] sm:$0xf]
          %v5389 = vld [vmem:[#allocation13 + $0x1a4] sm:$0xf]
          %v5390 = vld [vmem:[#allocation13 + $0x1a8] sm:$0xf]
          %v5391 = vld [vmem:[#allocation13 + $0x1ac] sm:$0xf]
          %v5392 = vld [vmem:[#allocation13 + $0x1b0] sm:$0xf]
          %v5393 = vld [vmem:[#allocation13 + $0x1b4] sm:$0xf]
          %v5394 = vld [vmem:[#allocation13 + $0x1b8] sm:$0xf]
          %v5395 = vld [vmem:[#allocation13 + $0x1bc] sm:$0xf]
          %v5396 = vld [vmem:[#allocation13 + $0x1c0] sm:$0xf]
          %v5397 = vld [vmem:[#allocation13 + $0x1c4] sm:$0xf]
          %v5398 = vld [vmem:[#allocation13 + $0x1c8] sm:$0xf]
          %v5399 = vld [vmem:[#allocation13 + $0x1cc] sm:$0xf]
          %v5400 = vld [vmem:[#allocation13 + $0x1d0] sm:$0xf]
          %v5401 = vld [vmem:[#allocation13 + $0x1d4] sm:$0xf]
          %v5402 = vld [vmem:[#allocation13 + $0x1d8] sm:$0xf]
          %v5403 = vld [vmem:[#allocation13 + $0x1dc] sm:$0xf]
          %v5404 = vld [vmem:[#allocation13 + $0x1e0] sm:$0xf]
          %v5405 = vld [vmem:[#allocation13 + $0x1e4] sm:$0xf]
          %v5406 = vld [vmem:[#allocation13 + $0x1e8] sm:$0xf]
          %v5407 = vld [vmem:[#allocation13 + $0x1ec] sm:$0xf]
          %v5408 = vld [vmem:[#allocation13 + $0x1f0] sm:$0xf]
          %v5409 = vld [vmem:[#allocation13 + $0x1f4] sm:$0xf]
          %v5410 = vld [vmem:[#allocation13 + $0x1f8] sm:$0xf]
          %v5411 = vld [vmem:[#allocation13 + $0x1fc] sm:$0xf]
          %v5412 = vld [vmem:[#allocation16] sm:$0x1]
          %v5414 = vlaneseq
          %v5415 = vshrl.u32 %v5414, 7
          %v5416 = vsub.s32 0, %v5415
          %v5417 = vrot.slane %v5412, %v5416
          %v5547 = vunpack.c.l.b16 %v5284
          %v5548 = vunpack.c.l.b16 %v5285
          %v5549 = vunpack.c.l.b16 %v5286
          %v5550 = vunpack.c.l.b16 %v5287
          %v5551 = vunpack.c.l.b16 %v5288
          %v5552 = vunpack.c.l.b16 %v5289
          %v5553 = vunpack.c.l.b16 %v5290
          %v5554 = vunpack.c.l.b16 %v5291
          %v5555 = vunpack.c.l.b16 %v5292
          %v5556 = vunpack.c.l.b16 %v5293
          %v5557 = vunpack.c.l.b16 %v5294
          %v5558 = vunpack.c.l.b16 %v5295
          %v5559 = vunpack.c.l.b16 %v5296
          %v5560 = vunpack.c.l.b16 %v5297
          %v5561 = vunpack.c.l.b16 %v5298
          %v5562 = vunpack.c.l.b16 %v5299
          %v5563 = vunpack.c.l.b16 %v5300
          %v5564 = vunpack.c.l.b16 %v5301
          %v5565 = vunpack.c.l.b16 %v5302
          %v5566 = vunpack.c.l.b16 %v5303
          %v5567 = vunpack.c.l.b16 %v5304
          %v5568 = vunpack.c.l.b16 %v5305
          %v5569 = vunpack.c.l.b16 %v5306
          %v5570 = vunpack.c.l.b16 %v5307
          %v5571 = vunpack.c.l.b16 %v5308
          %v5572 = vunpack.c.l.b16 %v5309
          %v5573 = vunpack.c.l.b16 %v5310
          %v5574 = vunpack.c.l.b16 %v5311
          %v5575 = vunpack.c.l.b16 %v5312
          %v5576 = vunpack.c.l.b16 %v5313
          %v5577 = vunpack.c.l.b16 %v5314
          %v5578 = vunpack.c.l.b16 %v5315
          %v5579 = vunpack.c.l.b16 %v5316
          %v5580 = vunpack.c.l.b16 %v5317
          %v5581 = vunpack.c.l.b16 %v5318
          %v5582 = vunpack.c.l.b16 %v5319
          %v5583 = vunpack.c.l.b16 %v5320
          %v5584 = vunpack.c.l.b16 %v5321
          %v5585 = vunpack.c.l.b16 %v5322
          %v5586 = vunpack.c.l.b16 %v5323
          %v5587 = vunpack.c.l.b16 %v5324
          %v5588 = vunpack.c.l.b16 %v5325
          %v5589 = vunpack.c.l.b16 %v5326
          %v5590 = vunpack.c.l.b16 %v5327
          %v5591 = vunpack.c.l.b16 %v5328
          %v5592 = vunpack.c.l.b16 %v5329
          %v5593 = vunpack.c.l.b16 %v5330
          %v5594 = vunpack.c.l.b16 %v5331
          %v5595 = vunpack.c.l.b16 %v5332
          %v5596 = vunpack.c.l.b16 %v5333
          %v5597 = vunpack.c.l.b16 %v5334
          %v5598 = vunpack.c.l.b16 %v5335
          %v5599 = vunpack.c.l.b16 %v5336
          %v5600 = vunpack.c.l.b16 %v5337
          %v5601 = vunpack.c.l.b16 %v5338
          %v5602 = vunpack.c.l.b16 %v5339
          %v5603 = vunpack.c.l.b16 %v5340
          %v5604 = vunpack.c.l.b16 %v5341
          %v5605 = vunpack.c.l.b16 %v5342
          %v5606 = vunpack.c.l.b16 %v5343
          %v5607 = vunpack.c.l.b16 %v5344
          %v5608 = vunpack.c.l.b16 %v5345
          %v5609 = vunpack.c.l.b16 %v5346
          %v5610 = vunpack.c.l.b16 %v5347
          %v5611 = vunpack.c.l.b16 %v5348
          %v5612 = vunpack.c.l.b16 %v5349
          %v5613 = vunpack.c.l.b16 %v5350
          %v5614 = vunpack.c.l.b16 %v5351
          %v5615 = vunpack.c.l.b16 %v5352
          %v5616 = vunpack.c.l.b16 %v5353
          %v5617 = vunpack.c.l.b16 %v5354
          %v5618 = vunpack.c.l.b16 %v5355
          %v5619 = vunpack.c.l.b16 %v5356
          %v5620 = vunpack.c.l.b16 %v5357
          %v5621 = vunpack.c.l.b16 %v5358
          %v5622 = vunpack.c.l.b16 %v5359
          %v5623 = vunpack.c.l.b16 %v5360
          %v5624 = vunpack.c.l.b16 %v5361
          %v5625 = vunpack.c.l.b16 %v5362
          %v5626 = vunpack.c.l.b16 %v5363
          %v5627 = vunpack.c.l.b16 %v5364
          %v5628 = vunpack.c.l.b16 %v5365
          %v5629 = vunpack.c.l.b16 %v5366
          %v5630 = vunpack.c.l.b16 %v5367
          %v5631 = vunpack.c.l.b16 %v5368
          %v5632 = vunpack.c.l.b16 %v5369
          %v5633 = vunpack.c.l.b16 %v5370
          %v5634 = vunpack.c.l.b16 %v5371
          %v5635 = vunpack.c.l.b16 %v5372
          %v5636 = vunpack.c.l.b16 %v5373
          %v5637 = vunpack.c.l.b16 %v5374
          %v5638 = vunpack.c.l.b16 %v5375
          %v5639 = vunpack.c.l.b16 %v5376
          %v5640 = vunpack.c.l.b16 %v5377
          %v5641 = vunpack.c.l.b16 %v5378
          %v5642 = vunpack.c.l.b16 %v5379
          %v5643 = vunpack.c.l.b16 %v5380
          %v5644 = vunpack.c.l.b16 %v5381
          %v5645 = vunpack.c.l.b16 %v5382
          %v5646 = vunpack.c.l.b16 %v5383
          %v5647 = vunpack.c.l.b16 %v5384
          %v5648 = vunpack.c.l.b16 %v5385
          %v5649 = vunpack.c.l.b16 %v5386
          %v5650 = vunpack.c.l.b16 %v5387
          %v5651 = vunpack.c.l.b16 %v5388
          %v5652 = vunpack.c.l.b16 %v5389
          %v5653 = vunpack.c.l.b16 %v5390
          %v5654 = vunpack.c.l.b16 %v5391
          %v5655 = vunpack.c.l.b16 %v5392
          %v5656 = vunpack.c.l.b16 %v5393
          %v5657 = vunpack.c.l.b16 %v5394
          %v5658 = vunpack.c.l.b16 %v5395
          %v5659 = vunpack.c.l.b16 %v5396
          %v5660 = vunpack.c.l.b16 %v5397
          %v5661 = vunpack.c.l.b16 %v5398
          %v5662 = vunpack.c.l.b16 %v5399
          %v5663 = vunpack.c.l.b16 %v5400
          %v5664 = vunpack.c.l.b16 %v5401
          %v5665 = vunpack.c.l.b16 %v5402
          %v5666 = vunpack.c.l.b16 %v5403
          %v5667 = vunpack.c.l.b16 %v5404
          %v5668 = vunpack.c.l.b16 %v5405
          %v5669 = vunpack.c.l.b16 %v5406
          %v5670 = vunpack.c.l.b16 %v5407
          %v5671 = vunpack.c.l.b16 %v5408
          %v5672 = vunpack.c.l.b16 %v5409
          %v5673 = vunpack.c.l.b16 %v5410
          %v5674 = vunpack.c.l.b16 %v5411
          %v5675 = vpack.c.b16 %v5548, %v5547
          %v5676 = vpack.c.b16 %v5550, %v5549
          %v5677 = vpack.c.b16 %v5552, %v5551
          %v5678 = vpack.c.b16 %v5554, %v5553
          %v5679 = vpack.c.b16 %v5556, %v5555
          %v5680 = vpack.c.b16 %v5558, %v5557
          %v5681 = vpack.c.b16 %v5560, %v5559
          %v5682 = vpack.c.b16 %v5562, %v5561
          %v5683 = vpack.c.b16 %v5564, %v5563
          %v5684 = vpack.c.b16 %v5566, %v5565
          %v5685 = vpack.c.b16 %v5568, %v5567
          %v5686 = vpack.c.b16 %v5570, %v5569
          %v5687 = vpack.c.b16 %v5572, %v5571
          %v5688 = vpack.c.b16 %v5574, %v5573
          %v5689 = vpack.c.b16 %v5576, %v5575
          %v5690 = vpack.c.b16 %v5578, %v5577
          %v5691 = vpack.c.b16 %v5580, %v5579
          %v5692 = vpack.c.b16 %v5582, %v5581
          %v5693 = vpack.c.b16 %v5584, %v5583
          %v5694 = vpack.c.b16 %v5586, %v5585
          %v5695 = vpack.c.b16 %v5588, %v5587
          %v5696 = vpack.c.b16 %v5590, %v5589
          %v5697 = vpack.c.b16 %v5592, %v5591
          %v5698 = vpack.c.b16 %v5594, %v5593
          %v5699 = vpack.c.b16 %v5596, %v5595
          %v5700 = vpack.c.b16 %v5598, %v5597
          %v5701 = vpack.c.b16 %v5600, %v5599
          %v5702 = vpack.c.b16 %v5602, %v5601
          %v5703 = vpack.c.b16 %v5604, %v5603
          %v5704 = vpack.c.b16 %v5606, %v5605
          %v5705 = vpack.c.b16 %v5608, %v5607
          %v5706 = vpack.c.b16 %v5610, %v5609
          %v5707 = vpack.c.b16 %v5612, %v5611
          %v5708 = vpack.c.b16 %v5614, %v5613
          %v5709 = vpack.c.b16 %v5616, %v5615
          %v5710 = vpack.c.b16 %v5618, %v5617
          %v5711 = vpack.c.b16 %v5620, %v5619
          %v5712 = vpack.c.b16 %v5622, %v5621
          %v5713 = vpack.c.b16 %v5624, %v5623
          %v5714 = vpack.c.b16 %v5626, %v5625
          %v5715 = vpack.c.b16 %v5628, %v5627
          %v5716 = vpack.c.b16 %v5630, %v5629
          %v5717 = vpack.c.b16 %v5632, %v5631
          %v5718 = vpack.c.b16 %v5634, %v5633
          %v5719 = vpack.c.b16 %v5636, %v5635
          %v5720 = vpack.c.b16 %v5638, %v5637
          %v5721 = vpack.c.b16 %v5640, %v5639
          %v5722 = vpack.c.b16 %v5642, %v5641
          %v5723 = vpack.c.b16 %v5644, %v5643
          %v5724 = vpack.c.b16 %v5646, %v5645
          %v5725 = vpack.c.b16 %v5648, %v5647
          %v5726 = vpack.c.b16 %v5650, %v5649
          %v5727 = vpack.c.b16 %v5652, %v5651
          %v5728 = vpack.c.b16 %v5654, %v5653
          %v5729 = vpack.c.b16 %v5656, %v5655
          %v5730 = vpack.c.b16 %v5658, %v5657
          %v5731 = vpack.c.b16 %v5660, %v5659
          %v5732 = vpack.c.b16 %v5662, %v5661
          %v5733 = vpack.c.b16 %v5664, %v5663
          %v5734 = vpack.c.b16 %v5666, %v5665
          %v5735 = vpack.c.b16 %v5668, %v5667
          %v5736 = vpack.c.b16 %v5670, %v5669
          %v5737 = vpack.c.b16 %v5672, %v5671
          %v5738 = vpack.c.b16 %v5674, %v5673
          %5803 = vmatprep.subr.bf16.mxu0 0
          %5804 = vmatpush1.bf16.msra.mxu0 %v5675
          %5805 = vmatprep.subr.bf16.mxu0 0
          %5806 = vmatpush1.bf16.msra.mxu0 %v5676
          %5807 = vmatprep.subr.bf16.mxu0 0
          %5808 = vmatpush1.bf16.msra.mxu0 %v5677
          %5809 = vmatprep.subr.bf16.mxu0 0
          %5810 = vmatpush1.bf16.msra.mxu0 %v5678
          %5811 = vmatprep.subr.bf16.mxu0 0
          %5812 = vmatpush1.bf16.msra.mxu0 %v5679
          %5813 = vmatprep.subr.bf16.mxu0 0
          %5814 = vmatpush1.bf16.msra.mxu0 %v5680
          %5815 = vmatprep.subr.bf16.mxu0 0
          %5816 = vmatpush1.bf16.msra.mxu0 %v5681
          %5817 = vmatprep.subr.bf16.mxu0 0
          %5818 = vmatpush1.bf16.msra.mxu0 %v5682
          %5819 = vmatprep.subr.bf16.mxu0 0
          %5820 = vmatpush1.bf16.msra.mxu0 %v5683
          %5821 = vmatprep.subr.bf16.mxu0 0
          %5822 = vmatpush1.bf16.msra.mxu0 %v5684
          %5823 = vmatprep.subr.bf16.mxu0 0
          %5824 = vmatpush1.bf16.msra.mxu0 %v5685
          %5825 = vmatprep.subr.bf16.mxu0 0
          %5826 = vmatpush1.bf16.msra.mxu0 %v5686
          %5827 = vmatprep.subr.bf16.mxu0 0
          %5828 = vmatpush1.bf16.msra.mxu0 %v5687
          %5829 = vmatprep.subr.bf16.mxu0 0
          %5830 = vmatpush1.bf16.msra.mxu0 %v5688
          %5831 = vmatprep.subr.bf16.mxu0 0
          %5832 = vmatpush1.bf16.msra.mxu0 %v5689
          %5833 = vmatprep.subr.bf16.mxu0 0
          %5834 = vmatpush1.bf16.msra.mxu0 %v5690
          %5835 = vmatprep.mubr.bf16.mxu0 %v5277
          %5836 = vmatmul.mubr.bf16.gmra.mrb[0].mxu0 %v5276
          %v5837 = vpop.f32.mrb[0].mxu0
          %v5838 = vadd.f32 %v5417, %v5837
          %v5839 = vpop.f32.mrb[0].mxu0
          %v5840 = vpop.f32.mrb[0].mxu0
          %v5841 = vpop.f32.mrb[0].mxu0
          %5842 = vdwg.mxu0
          %5843 = vmatprep.subr.bf16.mxu0 0
          %5844 = vmatpush1.bf16.msra.mxu0 %v5691
          %5845 = vmatprep.subr.bf16.mxu0 0
          %5846 = vmatpush1.bf16.msra.mxu0 %v5692
          %5847 = vmatprep.subr.bf16.mxu0 0
          %5848 = vmatpush1.bf16.msra.mxu0 %v5693
          %5849 = vmatprep.subr.bf16.mxu0 0
          %5850 = vmatpush1.bf16.msra.mxu0 %v5694
          %5851 = vmatprep.subr.bf16.mxu0 0
          %5852 = vmatpush1.bf16.msra.mxu0 %v5695
          %5853 = vmatprep.subr.bf16.mxu0 0
          %5854 = vmatpush1.bf16.msra.mxu0 %v5696
          %5855 = vmatprep.subr.bf16.mxu0 0
          %5856 = vmatpush1.bf16.msra.mxu0 %v5697
          %5857 = vmatprep.subr.bf16.mxu0 0
          %5858 = vmatpush1.bf16.msra.mxu0 %v5698
          %5859 = vmatprep.subr.bf16.mxu0 0
          %5860 = vmatpush1.bf16.msra.mxu0 %v5699
          %5861 = vmatprep.subr.bf16.mxu0 0
          %5862 = vmatpush1.bf16.msra.mxu0 %v5700
          %5863 = vmatprep.subr.bf16.mxu0 0
          %5864 = vmatpush1.bf16.msra.mxu0 %v5701
          %5865 = vmatprep.subr.bf16.mxu0 0
          %5866 = vmatpush1.bf16.msra.mxu0 %v5702
          %5867 = vmatprep.subr.bf16.mxu0 0
          %5868 = vmatpush1.bf16.msra.mxu0 %v5703
          %5869 = vmatprep.subr.bf16.mxu0 0
          %5870 = vmatpush1.bf16.msra.mxu0 %v5704
          %5871 = vmatprep.subr.bf16.mxu0 0
          %5872 = vmatpush1.bf16.msra.mxu0 %v5705
          %5873 = vmatprep.subr.bf16.mxu0 0
          %5874 = vmatpush1.bf16.msra.mxu0 %v5706
          %5875 = vmatprep.mubr.bf16.mxu0 %v5279
          %5876 = vmatmul.mubr.bf16.gmra.mrb[0].mxu0 %v5278
          %v5877 = vpop.f32.mrb[0].mxu0
          %v5878 = vadd.f32 %v5838, %v5877
          %v5879 = vpop.f32.mrb[0].mxu0
          %v5880 = vpop.f32.mrb[0].mxu0
          %v5881 = vpop.f32.mrb[0].mxu0
          %5882 = vdwg.mxu0
          %5883 = vmatprep.subr.bf16.mxu0 0
          %5884 = vmatpush1.bf16.msra.mxu0 %v5707
          %5885 = vmatprep.subr.bf16.mxu0 0
          %5886 = vmatpush1.bf16.msra.mxu0 %v5708
          %5887 = vmatprep.subr.bf16.mxu0 0
          %5888 = vmatpush1.bf16.msra.mxu0 %v5709
          %5889 = vmatprep.subr.bf16.mxu0 0
          %5890 = vmatpush1.bf16.msra.mxu0 %v5710
          %5891 = vmatprep.subr.bf16.mxu0 0
          %5892 = vmatpush1.bf16.msra.mxu0 %v5711
          %5893 = vmatprep.subr.bf16.mxu0 0
          %5894 = vmatpush1.bf16.msra.mxu0 %v5712
          %5895 = vmatprep.subr.bf16.mxu0 0
          %5896 = vmatpush1.bf16.msra.mxu0 %v5713
          %5897 = vmatprep.subr.bf16.mxu0 0
          %5898 = vmatpush1.bf16.msra.mxu0 %v5714
          %5899 = vmatprep.subr.bf16.mxu0 0
          %5900 = vmatpush1.bf16.msra.mxu0 %v5715
          %5901 = vmatprep.subr.bf16.mxu0 0
          %5902 = vmatpush1.bf16.msra.mxu0 %v5716
          %5903 = vmatprep.subr.bf16.mxu0 0
          %5904 = vmatpush1.bf16.msra.mxu0 %v5717
          %5905 = vmatprep.subr.bf16.mxu0 0
          %5906 = vmatpush1.bf16.msra.mxu0 %v5718
          %5907 = vmatprep.subr.bf16.mxu0 0
          %5908 = vmatpush1.bf16.msra.mxu0 %v5719
          %5909 = vmatprep.subr.bf16.mxu0 0
          %5910 = vmatpush1.bf16.msra.mxu0 %v5720
          %5911 = vmatprep.subr.bf16.mxu0 0
          %5912 = vmatpush1.bf16.msra.mxu0 %v5721
          %5913 = vmatprep.subr.bf16.mxu0 0
          %5914 = vmatpush1.bf16.msra.mxu0 %v5722
          %5915 = vmatprep.mubr.bf16.mxu0 %v5281
          %5916 = vmatmul.mubr.bf16.gmra.mrb[0].mxu0 %v5280
          %v5917 = vpop.f32.mrb[0].mxu0
          %v5918 = vadd.f32 %v5878, %v5917
          %v5919 = vpop.f32.mrb[0].mxu0
          %v5920 = vpop.f32.mrb[0].mxu0
          %v5921 = vpop.f32.mrb[0].mxu0
          %5922 = vdwg.mxu0
          %5923 = vmatprep.subr.bf16.mxu0 0
          %5924 = vmatpush1.bf16.msra.mxu0 %v5723
          %5925 = vmatprep.subr.bf16.mxu0 0
          %5926 = vmatpush1.bf16.msra.mxu0 %v5724
          %5927 = vmatprep.subr.bf16.mxu0 0
          %5928 = vmatpush1.bf16.msra.mxu0 %v5725
          %5929 = vmatprep.subr.bf16.mxu0 0
          %5930 = vmatpush1.bf16.msra.mxu0 %v5726
          %5931 = vmatprep.subr.bf16.mxu0 0
          %5932 = vmatpush1.bf16.msra.mxu0 %v5727
          %5933 = vmatprep.subr.bf16.mxu0 0
          %5934 = vmatpush1.bf16.msra.mxu0 %v5728
          %5935 = vmatprep.subr.bf16.mxu0 0
          %5936 = vmatpush1.bf16.msra.mxu0 %v5729
          %5937 = vmatprep.subr.bf16.mxu0 0
          %5938 = vmatpush1.bf16.msra.mxu0 %v5730
          %5939 = vmatprep.subr.bf16.mxu0 0
          %5940 = vmatpush1.bf16.msra.mxu0 %v5731
          %5941 = vmatprep.subr.bf16.mxu0 0
          %5942 = vmatpush1.bf16.msra.mxu0 %v5732
          %5943 = vmatprep.subr.bf16.mxu0 0
          %5944 = vmatpush1.bf16.msra.mxu0 %v5733
          %5945 = vmatprep.subr.bf16.mxu0 0
          %5946 = vmatpush1.bf16.msra.mxu0 %v5734
          %5947 = vmatprep.subr.bf16.mxu0 0
          %5948 = vmatpush1.bf16.msra.mxu0 %v5735
          %5949 = vmatprep.subr.bf16.mxu0 0
          %5950 = vmatpush1.bf16.msra.mxu0 %v5736
          %5951 = vmatprep.subr.bf16.mxu0 0
          %5952 = vmatpush1.bf16.msra.mxu0 %v5737
          %5953 = vmatprep.subr.bf16.mxu0 0
          %5954 = vmatpush1.bf16.msra.mxu0 %v5738
          %5955 = vmatprep.mubr.bf16.mxu0 %v5283
          %5956 = vmatmul.mubr.bf16.gmra.mrb[0].mxu0 %v5282
          %v5957 = vpop.f32.mrb[0].mxu0
          %v5958 = vadd.f32 %v5918, %v5957
          %v5959 = vpop.f32.mrb[0].mxu0
          %v5960 = vpop.f32.mrb[0].mxu0
          %v5961 = vpop.f32.mrb[0].mxu0
          %5962 = vdwg.mxu0
          %v5963 = vld [vmem:[#allocation17] sm:$0x3]
          %v5964 = vld [vmem:[#allocation14] sm:$0x7]
          %5966 = vset.pattern.permute.xlu0 0
          %5967 = vperm.xlu0 %5966, %v5963
          %v5968 = vpop.permute.xlu0 %5967
          %v5970 = vlaneseq
          %v5971 = vshrl.u32 %v5970, 7
          %v5972 = vsub.s32 0, %v5971
          %v5973 = vrot.slane %v5964, %v5972
          %v5974 = vmul.f32 %v5968, %v5973
          %v5975 = vadd.f32 %v5958, %v5974
          %5976 = vset.pattern.permute.xlu0 1
          %5977 = vperm.xlu0 %5976, %v5963
          %v5978 = vpop.permute.xlu0 %5977
          %v5980 = vlaneseq
          %v5981 = vshrl.u32 %v5980, 7
          %v5982 = vsub.s32 1, %v5981
          %v5983 = vrot.slane %v5964, %v5982
          %v5984 = vmul.f32 %v5978, %v5983
          %v5985 = vadd.f32 %v5975, %v5984
          %5986 = vset.pattern.permute.xlu0 2
          %5987 = vperm.xlu0 %5986, %v5963
          %v5988 = vpop.permute.xlu0 %5987
          %v5990 = vlaneseq
          %v5991 = vshrl.u32 %v5990, 7
          %v5992 = vsub.s32 2, %v5991
          %v5993 = vrot.slane %v5964, %v5992
          %v5994 = vmul.f32 %v5988, %v5993
          %v5995 = vadd.f32 %v5985, %v5994
          %5996 = vst [vmem:[#allocation19] sm:$0x3] %v5995
        $region112: #{net_a4_forward.1} parent=63 // pred_fallthru
          _
        // Predicated region
        $region113: #{net_a4_forward.1} parent=63 // pred_check
          %p5997 = pneg %p320
        $region114: #{net_a4_forward.1} parent=63 // pred_check_branch
          %5999 = sbr.rel (%p5997) target = $region116
        $region115: #{net_a4_forward.1} parent=63 // pred_region
          %s6001 = ssub.s32 32, 32
          %6002 = vsyncadd [#allocation7], %s6001
          %s6004 = sshll.u32 [#allocation19], 4
          %s6005 = int_to_ptr.vmem [resolvable:$true] %s6004
          %6007 = dma.vmem_to_hbm [thread:$0]  %s6005, 32, %s11, [#allocation7]
        $region116: #{net_a4_forward.1} parent=63 // pred_fallthru
          _
        // Predicated region
        $region117: #{net_a4_forward.1} parent=63 // pred_check
          %p6008 = pneg %p320
        $region118: #{net_a4_forward.1} parent=63 // pred_check_branch
          %6010 = sbr.rel (%p6008) target = $region120
        $region119: #{net_a4_forward.1} parent=63 // pred_region
          %6011 = dma.done [#allocation7], 32
        $region120: #{net_a4_forward.1} parent=63 // pred_fallthru
          _
      $region64: #{net_a4_forward.1} parent=5 // pred_fallthru
        _
      %p6012 = scmp.le.s32.totalorder 2, %s27
      // Predicated region
      $region121: #{net_a4_forward.1} parent=5 // pred_check
        %p6013 = pneg %p6012
      $region122: #{net_a4_forward.1} parent=5 // pred_check_branch
        %6015 = sbr.rel (%p6013) target = $region124
      $region123: #{net_a4_forward.1} parent=5 // pred_region
        %s6016 = ssub.s32 %s27, 2
      $region124: #{net_a4_forward.1} parent=5 // pred_fallthru
        _
    $region6: #{net_a4_forward.1} parent=1 // loop_footer
      %s31 = sadd.s32 1, %s27
    $region7: #{net_a4_forward.1} parent=1 // loop_footer_branch
      %26 = sbr.rel target = $region3
    $region8: #{net_a4_forward.1} parent=1 // loop_exit
      _
    %6017 = vsyncpa [#allocation6], 1
    %s6018 = scalar_lea.sflag [#allocation6], 1
    %6019 = vsyncpa %s6018, 1
    %6020 = vsyncpa [#allocation9], 1
    %s6021 = scalar_lea.sflag [#allocation9], 1
    %6022 = vsyncpa %s6021, 1
    %6023 = vsyncpa [#allocation12], 1
    %6024 = vsyncpa [#allocation15], 1
    %6025 = vsyncpa [#allocation18], 1
    %6026 = vsyncpa [#allocation7], 1
    %s6027 = scalar_lea.sflag [#allocation7], 1
    %6028 = vsyncpa %s6027, 1

</llo_original>
